<compile_context>
chip_gen: v7x
topology: tpu7x:2x2x1
jax: 0.10.0
libtpu: 0.0.40
codegen_flags: <defaults>
</compile_context>

<pallas_src>
import math
from functools import partial

import numpy as np
import jax
import jax.numpy as jnp
from jax import lax
from jax.experimental import pallas as pl
from jax.experimental.pallas import tpu as pltpu

EMB_DIM = 768
NH_CHUNK = 8   # feature rows (sublanes) per reduction chunk


# ----------------------------- Pallas kernel ------------------------------ #
def _rayblock_kernel(w_ref, d_ref, eden_ref, eemb_ref, o_ref, dd_ref, m_ref):
    # w_ref:    [RB*S, Cp]     bilinear corner weights (S = padded samples/ray)
    # d_ref:    [RB*S, 1]      per-sample ray-segment length
    # eden_ref: [Cp, 768]      density row of each grid corner (VMEM-resident)
    # eemb_ref: [Cp, NH, 768]  feature rows of each grid corner (VMEM-resident)
    # o_ref:    [RB, NH, 768]  per-ray accumulated embedding (unpadded NH)
    # dd_ref:   [RB*S, 768]    scratch: relu(density) * dist
    # m_ref:    [Cp, 768]      scratch: per-ray corner mixing matrix
    rb = o_ref.shape[0]
    nh = o_ref.shape[1]
    cp = eemb_ref.shape[0]
    s = w_ref.shape[0] // rb

    # (1) density for every (ray, sample) in one MXU matmul (M = RB*S).
    den = jnp.dot(w_ref[...].astype(eden_ref.dtype), eden_ref[...],
                  preferred_element_type=jnp.float32)             # [RB*S, 768]
    dd_ref[...] = jnp.maximum(den, 0.0) * d_ref[...]

    # (2) per-ray transmittance, corner mixing and final reduction.
    @pl.loop(0, rb)
    def _per_ray(r):
        off = pl.multiple_of(r * s, 8)
        dd = dd_ref[pl.ds(off, s), :]                             # [S, 768]

        # inclusive prefix sum over samples (Hillis-Steele shift+add, VPU).
        inc = dd
        sh = 1
        while sh < s:
            inc = inc + jnp.concatenate(
                [jnp.zeros((sh, EMB_DIM), inc.dtype), inc[:s - sh]], axis=0)
            sh *= 2

        # single exp: coef[i] = Ti*alpha = exp(-sum_{<i}) - exp(-sum_{<=i}).
        e = jnp.exp(-inc)                                         # [S, 768]
        e_prev = jnp.concatenate(
            [jnp.ones((1, EMB_DIM), e.dtype), e[:s - 1]], axis=0)
        coef = e_prev - e                                         # [S, 768]

        # corner mixing matrix m[c, d] = sum_s w[s, c] * coef[s, d].
        w_r = w_ref[pl.ds(off, s), :].astype(jnp.float32)         # [S, Cp]
        m_ref[...] = lax.dot_general(
            w_r, coef, (((0,), (0,)), ((), ())),
            preferred_element_type=jnp.float32)                   # [Cp, 768]

        # out[n, d] = sum_c eemb[c, n, d] * m[c, d], chunked over feature rows
        # (sublanes) so the accumulator + corner tile stay spill-free.
        for n0 in range(0, nh, NH_CHUNK):
            rows = min(NH_CHUNK, nh - n0)

            def corner(c, acc):
                tile = eemb_ref[c, pl.ds(n0, rows), :].astype(jnp.float32)
                return acc + tile * m_ref[pl.ds(c, 1), :]

            acc = lax.fori_loop(0, cp, corner,
                                jnp.zeros((rows, EMB_DIM), jnp.float32),
                                unroll=True)
            o_ref[r, pl.ds(n0, rows), :] = acc


# --------------------------- JAX glue (weights) ---------------------------- #
def _round_up(x, m):
    return -(-x // m) * m


def _bilinear_corner_weights(xy, layers_num, n):
    """Per-sample weights over the n x n grid corners, matching
    TextSpace.interpolate (standard bilinear with floor/ceil corners)."""
    # TODO(synk): out-of-domain samples silently get zero weight here, whereas
    # the PyTorch module would raise an IndexError on the embedding lookup.
    x = xy[:, 0] + layers_num
    y = xy[:, 1] + layers_num
    fx = jnp.floor(x)
    fy = jnp.floor(y)
    dx = x - fx
    dy = y - fy
    fxi = fx.astype(jnp.int32)
    cxi = jnp.ceil(x).astype(jnp.int32)
    fyi = fy.astype(jnp.int32)
    cyi = jnp.ceil(y).astype(jnp.int32)
    oh = lambda idx: jax.nn.one_hot(idx, n, dtype=jnp.float32)
    wx = oh(fxi) * (1.0 - dx)[:, None] + oh(cxi) * dx[:, None]
    wy = oh(fyi) * (1.0 - dy)[:, None] + oh(cyi) * dy[:, None]
    return (wx[:, :, None] * wy[:, None, :]).reshape(xy.shape[0], n * n)


# ------------------------------ entry points ------------------------------- #
@partial(jax.jit, static_argnames=("layers_num", "n_hiper", "ray_block",
                                   "emb_dtype"))
def textspace_forward_batched(embeddings, samples, last_points, layers_num=1,
                              n_hiper=30, ray_block=32,
                              emb_dtype=jnp.float32):
    """Batched TextSpace.forward over R independent rays.

    embeddings:  [n, n, n_hiper + 1, 768]
    samples:     [R, S, k]   (interpolation uses coordinates 0 and 1)
    last_points: [R, k]
    returns:     [R, n_hiper, 768]
    """
    n = 2 * layers_num + 1
    r, s, k = samples.shape
    c = n * n
    c_pad = _round_up(c, 8)
    s_pad = _round_up(s, 8)
    rb = max(1, min(ray_block, r))
    r_pad = _round_up(r, rb)

    # per-sample bilinear corner weights, flattened over (ray, sample)
    w = _bilinear_corner_weights(
        samples.reshape(r * s, k).astype(jnp.float32), layers_num, n)
    w = w.reshape(r, s, c)

    # ray-segment lengths ||samples[i] - samples[i+1]|| (last uses last_point)
    nxt = jnp.concatenate([samples[:, 1:, :], last_points[:, None, :]], axis=1)
    dists = jnp.sqrt(jnp.sum(
        (samples.astype(jnp.float32) - nxt.astype(jnp.float32)) ** 2, axis=-1))

    # zero-pad: corners -> c_pad, samples -> s_pad, rays -> r_pad
    # (padded entries carry zero weight / zero distance -> contribute nothing)
    w = jnp.pad(w, ((0, r_pad - r), (0, s_pad - s), (0, c_pad - c)))
    dists = jnp.pad(dists, ((0, r_pad - r), (0, s_pad - s)))
    w2 = w.reshape(r_pad * s_pad, c_pad)
    d2 = dists.reshape(r_pad * s_pad, 1)

    # flatten + corner-pad the embedding grid (feature dim left at n_hiper)
    e_flat = embeddings.reshape(c, n_hiper + 1, EMB_DIM).astype(jnp.float32)
    e_emb = jnp.pad(e_flat[:, :n_hiper, :],
                    ((0, c_pad - c), (0, 0), (0, 0))).astype(emb_dtype)
    e_den = jnp.pad(e_flat[:, n_hiper, :],
                    ((0, c_pad - c), (0, 0))).astype(emb_dtype)

    eb = jnp.dtype(emb_dtype).itemsize
    cost = pl.CostEstimate(
        flops=int(2 * EMB_DIM * r_pad * c_pad * (2 * s_pad + n_hiper)),
        transcendentals=int(r_pad * s_pad * EMB_DIM),
        bytes_accessed=int(w2.size * 4 + d2.size * 4 + e_den.size * eb
                           + e_emb.size * eb + r_pad * n_hiper * EMB_DIM * 4))

    out = pl.pallas_call(
        _rayblock_kernel,
        out_shape=jax.ShapeDtypeStruct((r_pad, n_hiper, EMB_DIM), jnp.float32),
        grid=(r_pad // rb,),
        in_specs=[
            pl.BlockSpec((rb * s_pad, c_pad), lambda i: (i, 0)),
            pl.BlockSpec((rb * s_pad, 1), lambda i: (i, 0)),
            # constant block index -> embedding grid is DMA'd HBM->VMEM once
            # and stays resident across every ray block of the grid.
            pl.BlockSpec((c_pad, EMB_DIM), lambda i: (0, 0)),
            pl.BlockSpec((c_pad, n_hiper, EMB_DIM), lambda i: (0, 0, 0)),
        ],
        out_specs=pl.BlockSpec((rb, n_hiper, EMB_DIM), lambda i: (i, 0, 0)),
        scratch_shapes=[
            pltpu.VMEM((rb * s_pad, EMB_DIM), jnp.float32),   # density * dist
            pltpu.VMEM((c_pad, EMB_DIM), jnp.float32),        # mixing matrix
        ],
        compiler_params=pltpu.CompilerParams(
            # ray-block axis is embarrassingly parallel -> shards across the
            # two TensorCores on v7x; no effect on v5e/v6e.
            dimension_semantics=("parallel",)),
        cost_estimate=cost,
    )(w2, d2, e_den, e_emb)

    return out[:r] if r_pad != r else out


def textspace_forward(embeddings, samples, last_point, layers_num=1, n_hiper=30):
    """Single-ray forward with the exact TextSpace.forward semantics."""
    out = textspace_forward_batched(embeddings, samples[None], last_point[None],
                                    layers_num=layers_num, n_hiper=n_hiper)
    return out[0]


# ------------------------ numpy reference (torch semantics) ---------------- #
def _numpy_reference(emb, samples, last_point, layers_num, n_hiper):
    d = emb.shape[-1]

    def interpolate(x, y):
        dx = x - math.floor(x)
        dy = y - math.floor(y)
        x += layers_num
        y += layers_num
        above = emb[math.floor(x)][math.ceil(y)] * (1 - dx) + \
            emb[math.ceil(x)][math.ceil(y)] * dx
        below = emb[math.floor(x)][math.floor(y)] * (1 - dx) + \
            emb[math.ceil(x)][math.floor(y)] * dx
        return below * (1 - dy) + above * dy

    s_cnt = samples.shape[0]
    summed = np.zeros(d, dtype=np.float64)
    out = np.zeros((n_hiper, d), dtype=np.float64)
    for i in range(s_cnt):
        e = interpolate(float(samples[i, 0]), float(samples[i, 1])).astype(np.float64)
        feat = e[:n_hiper]
        den = np.maximum(e[n_hiper], 0.0)
        nxt = samples[i + 1] if i < s_cnt - 1 else last_point
        dist = float(np.linalg.norm(samples[i].astype(np.float64) -
                                    nxt.astype(np.float64)))
        alpha = 1.0 - np.exp(-den * dist)
        ti = np.exp(-summed)
        out += ti * alpha * feat
        summed += den * dist
    return out


# --------------------------------- main ------------------------------------ #
if __name__ == "__main__":
    layers_num = 1
    n_hiper = 30
    S = 8           # samples per ray
    R = 4           # rays in the batched demo
    N = 2 * layers_num + 1

    key = jax.random.PRNGKey(0)
    k1, k2, k3 = jax.random.split(key, 3)
    embeddings = jax.random.normal(k1, (N, N, n_hiper + 1, EMB_DIM), dtype=jnp.float32)
    samples_b = jax.random.uniform(k2, (R, S, 2), minval=-0.9, maxval=0.9,
                                   dtype=jnp.float32)
    last_pts = jax.random.uniform(k3, (R, 2), minval=-0.9, maxval=0.9,
                                  dtype=jnp.float32)

    # single-ray forward (module semantics)
    out1 = textspace_forward(embeddings, samples_b[0], last_pts[0],
                             layers_num, n_hiper)
    out1 = jax.block_until_ready(out1)

    # batched forward: whole ray block in one grid step
    out_b = textspace_forward_batched(embeddings, samples_b, last_pts,
                                      layers_num=layers_num, n_hiper=n_hiper)
    out_b = jax.block_until_ready(out_b)

    # exercise multi-step grid + ray padding (R=4 with ray_block=3 -> r_pad=6)
    out_b3 = textspace_forward_batched(embeddings, samples_b, last_pts,
                                       layers_num=layers_num, n_hiper=n_hiper,
                                       ray_block=3)
    out_b3 = jax.block_until_ready(out_b3)

    assert out1.shape == (n_hiper, EMB_DIM)
    assert out_b.shape == (R, n_hiper, EMB_DIM)
    assert out_b3.shape == (R, n_hiper, EMB_DIM)

    emb_np = np.asarray(embeddings)
    sm_np = np.asarray(samples_b)
    lp_np = np.asarray(last_pts)

    ref0 = _numpy_reference(emb_np, sm_np[0], lp_np[0], layers_num, n_hiper)
    assert np.allclose(np.asarray(out1, dtype=np.float64), ref0,
                       rtol=2e-2, atol=2e-2)
    for rr in range(R):
        ref = _numpy_reference(emb_np, sm_np[rr], lp_np[rr], layers_num, n_hiper)
        assert np.allclose(np.asarray(out_b[rr], dtype=np.float64), ref,
                           rtol=2e-2, atol=2e-2)
        assert np.allclose(np.asarray(out_b3[rr], dtype=np.float64), ref,
                           rtol=2e-2, atol=2e-2)

    print("KERNEL_OK")
</pallas_src>

<mosaic_0001>
module attributes {stable_mosaic.version = 11 : i64} {
  func.func @_rayblock_kernel(%arg0: i32, %arg1: memref<8x16xf32, #tpu.memory_space<vmem>>, %arg2: memref<8x1xf32, #tpu.memory_space<vmem>>, %arg3: memref<16x768xf32, #tpu.memory_space<vmem>>, %arg4: memref<16x30x768xf32, #tpu.memory_space<vmem>>, %arg5: memref<1x30x768xf32, #tpu.memory_space<vmem>>, %arg6: memref<8x768xf32, #tpu.memory_space<vmem>>, %arg7: memref<16x768xf32, #tpu.memory_space<vmem>>) attributes {dimension_semantics = [#tpu.dimension_semantics<parallel>], iteration_bounds = array<i64: 1>, scalar_prefetch = 0 : i64, scratch_operands = 2 : i64, tpu.core_type = #tpu.core_type<tc>, window_params = [{transform_indices = @transform_0, window_bounds = array<i64: 8, 16>}, {transform_indices = @transform_1, window_bounds = array<i64: 8, 1>}, {pipeline_mode = #tpu.pipeline_mode<synchronous>, transform_indices = @transform_2, window_bounds = array<i64: 16, 768>}, {pipeline_mode = #tpu.pipeline_mode<synchronous>, transform_indices = @transform_3, window_bounds = array<i64: 16, 30, 768>}, {transform_indices = @transform_4, window_bounds = array<i64: 1, 30, 768>}]} {
    %c0 = arith.constant 0 : index
    %c0_0 = arith.constant 0 : index
    %0 = vector.load %arg1[%c0, %c0_0] : memref<8x16xf32, #tpu.memory_space<vmem>>, vector<8x16xf32>
    %c0_1 = arith.constant 0 : index
    %c0_2 = arith.constant 0 : index
    %1 = vector.load %arg3[%c0_1, %c0_2] : memref<16x768xf32, #tpu.memory_space<vmem>>, vector<16x768xf32>
    %cst = arith.constant dense<0.000000e+00> : vector<8x768xf32>
    %2 = tpu.matmul %0, %1, %cst {dimension_numbers = #tpu.dot_dimension_numbers<[1], [0], [0], [1], [0, 0, 1, 1], [], []>} : vector<8x16xf32>, vector<16x768xf32>, vector<8x768xf32> -> vector<8x768xf32>
    %cst_3 = arith.constant 0.000000e+00 : f32
    %3 = vector.broadcast %cst_3 : f32 to vector<8x768xf32>
    %4 = arith.maximumf %2, %3 : vector<8x768xf32>
    %c0_4 = arith.constant 0 : index
    %c0_5 = arith.constant 0 : index
    %5 = vector.load %arg2[%c0_4, %c0_5] : memref<8x1xf32, #tpu.memory_space<vmem>>, vector<8x1xf32>
    %6 = vector.broadcast %5 : vector<8x1xf32> to vector<8x768xf32>
    %7 = arith.mulf %4, %6 : vector<8x768xf32>
    %c0_6 = arith.constant 0 : index
    %c0_7 = arith.constant 0 : index
    %8 = vector.load %arg6[%c0_6, %c0_7] : memref<8x768xf32, #tpu.memory_space<vmem>>, vector<8x768xf32>
    tpu.vector_store %arg6[%c0_6, %c0_7], %7 {strides = array<i32>} : memref<8x768xf32, #tpu.memory_space<vmem>>, vector<8x768xf32>,
    %c0_i32 = arith.constant 0 : i32
    %c1_i32 = arith.constant 1 : i32
    %9 = arith.muli %c0_i32, %c1_i32 : i32
    %c0_i32_8 = arith.constant 0 : i32
    %10 = arith.addi %c0_i32_8, %9 : i32
    %c8_i32 = arith.constant 8 : i32
    %11 = arith.muli %10, %c8_i32 : i32
    %12 = tpu.assume_multiple %11, 8 : i32
    %13 = arith.index_cast %12 : i32 to index
    %c0_9 = arith.constant 0 : index
    %14 = vector.load %arg6[%13, %c0_9] : memref<8x768xf32, #tpu.memory_space<vmem>>, vector<8x768xf32>
    %cst_10 = arith.constant 0.000000e+00 : f32
    %15 = vector.broadcast %cst_10 : f32 to vector<1x768xf32>
    %16 = vector.extract_strided_slice %14 {offsets = [0, 0], sizes = [7, 768], strides = [1, 1]} : vector<8x768xf32> to vector<7x768xf32>
    %17 = tpu.concatenate %15, %16 in 0 : vector<1x768xf32>, vector<7x768xf32> -> vector<8x768xf32>
    %18 = arith.addf %14, %17 : vector<8x768xf32>
    %cst_11 = arith.constant 0.000000e+00 : f32
    %19 = vector.broadcast %cst_11 : f32 to vector<2x768xf32>
    %20 = vector.extract_strided_slice %18 {offsets = [0, 0], sizes = [6, 768], strides = [1, 1]} : vector<8x768xf32> to vector<6x768xf32>
    %21 = tpu.concatenate %19, %20 in 0 : vector<2x768xf32>, vector<6x768xf32> -> vector<8x768xf32>
    %22 = arith.addf %18, %21 : vector<8x768xf32>
    %cst_12 = arith.constant 0.000000e+00 : f32
    %23 = vector.broadcast %cst_12 : f32 to vector<4x768xf32>
    %24 = vector.extract_strided_slice %22 {offsets = [0, 0], sizes = [4, 768], strides = [1, 1]} : vector<8x768xf32> to vector<4x768xf32>
    %25 = tpu.concatenate %23, %24 in 0 : vector<4x768xf32>, vector<4x768xf32> -> vector<8x768xf32>
    %26 = arith.addf %22, %25 : vector<8x768xf32>
    %cst_13 = arith.constant 0.000000e+00 : f32
    %27 = vector.broadcast %cst_13 : f32 to vector<8x768xf32>
    %28 = arith.subf %27, %26 : vector<8x768xf32>
    %29 = math.exp %28 : vector<8x768xf32>
    %cst_14 = arith.constant 1.000000e+00 : f32
    %30 = vector.broadcast %cst_14 : f32 to vector<1x768xf32>
    %31 = vector.extract_strided_slice %29 {offsets = [0, 0], sizes = [7, 768], strides = [1, 1]} : vector<8x768xf32> to vector<7x768xf32>
    %32 = tpu.concatenate %30, %31 in 0 : vector<1x768xf32>, vector<7x768xf32> -> vector<8x768xf32>
    %33 = arith.subf %32, %29 : vector<8x768xf32>
    %34 = arith.index_cast %12 : i32 to index
    %c0_15 = arith.constant 0 : index
    %35 = vector.load %arg1[%34, %c0_15] : memref<8x16xf32, #tpu.memory_space<vmem>>, vector<8x16xf32>
    %cst_16 = arith.constant dense<0.000000e+00> : vector<16x768xf32>
    %36 = tpu.matmul %35, %33, %cst_16 {dimension_numbers = #tpu.dot_dimension_numbers<[0], [0], [1], [1], [0, 1, 1, 1], [], []>} : vector<8x16xf32>, vector<8x768xf32>, vector<16x768xf32> -> vector<16x768xf32>
    %c0_17 = arith.constant 0 : index
    %c0_18 = arith.constant 0 : index
    %37 = vector.load %arg7[%c0_17, %c0_18] : memref<16x768xf32, #tpu.memory_space<vmem>>, vector<16x768xf32>
    tpu.vector_store %arg7[%c0_17, %c0_18], %36 {strides = array<i32>} : memref<16x768xf32, #tpu.memory_space<vmem>>, vector<16x768xf32>,
    %cst_19 = arith.constant 0.000000e+00 : f32
    %38 = vector.broadcast %cst_19 : f32 to vector<8x768xf32>
    %c0_i32_20 = arith.constant 0 : i32
    %39 = arith.index_cast %c0_i32_20 : i32 to index
    %c0_21 = arith.constant 0 : index
    %c0_22 = arith.constant 0 : index
    %40 = vector.load %arg4[%39, %c0_21, %c0_22] : memref<16x30x768xf32, #tpu.memory_space<vmem>>, vector<1x8x768xf32>
    %41 = vector.shape_cast %40 : vector<1x8x768xf32> to vector<8x768xf32>
    %42 = arith.index_cast %c0_i32_20 : i32 to index
    %c0_23 = arith.constant 0 : index
    %43 = vector.load %arg7[%42, %c0_23] : memref<16x768xf32, #tpu.memory_space<vmem>>, vector<1x768xf32>
    %44 = vector.broadcast %43 : vector<1x768xf32> to vector<8x768xf32>
    %45 = arith.mulf %41, %44 : vector<8x768xf32>
    %46 = arith.addf %38, %45 : vector<8x768xf32>
    %c1_i32_24 = arith.constant 1 : i32
    %47 = arith.index_cast %c1_i32_24 : i32 to index
    %c0_25 = arith.constant 0 : index
    %c0_26 = arith.constant 0 : index
    %48 = vector.load %arg4[%47, %c0_25, %c0_26] : memref<16x30x768xf32, #tpu.memory_space<vmem>>, vector<1x8x768xf32>
    %49 = vector.shape_cast %48 : vector<1x8x768xf32> to vector<8x768xf32>
    %50 = arith.index_cast %c1_i32_24 : i32 to index
    %c0_27 = arith.constant 0 : index
    %51 = vector.load %arg7[%50, %c0_27] : memref<16x768xf32, #tpu.memory_space<vmem>>, vector<1x768xf32>
    %52 = vector.broadcast %51 : vector<1x768xf32> to vector<8x768xf32>
    %53 = arith.mulf %49, %52 : vector<8x768xf32>
    %54 = arith.addf %46, %53 : vector<8x768xf32>
    %c2_i32 = arith.constant 2 : i32
    %55 = arith.index_cast %c2_i32 : i32 to index
    %c0_28 = arith.constant 0 : index
    %c0_29 = arith.constant 0 : index
    %56 = vector.load %arg4[%55, %c0_28, %c0_29] : memref<16x30x768xf32, #tpu.memory_space<vmem>>, vector<1x8x768xf32>
    %57 = vector.shape_cast %56 : vector<1x8x768xf32> to vector<8x768xf32>
    %58 = arith.index_cast %c2_i32 : i32 to index
    %c0_30 = arith.constant 0 : index
    %59 = vector.load %arg7[%58, %c0_30] : memref<16x768xf32, #tpu.memory_space<vmem>>, vector<1x768xf32>
    %60 = vector.broadcast %59 : vector<1x768xf32> to vector<8x768xf32>
    %61 = arith.mulf %57, %60 : vector<8x768xf32>
    %62 = arith.addf %54, %61 : vector<8x768xf32>
    %c3_i32 = arith.constant 3 : i32
    %63 = arith.index_cast %c3_i32 : i32 to index
    %c0_31 = arith.constant 0 : index
    %c0_32 = arith.constant 0 : index
    %64 = vector.load %arg4[%63, %c0_31, %c0_32] : memref<16x30x768xf32, #tpu.memory_space<vmem>>, vector<1x8x768xf32>
    %65 = vector.shape_cast %64 : vector<1x8x768xf32> to vector<8x768xf32>
    %66 = arith.index_cast %c3_i32 : i32 to index
    %c0_33 = arith.constant 0 : index
    %67 = vector.load %arg7[%66, %c0_33] : memref<16x768xf32, #tpu.memory_space<vmem>>, vector<1x768xf32>
    %68 = vector.broadcast %67 : vector<1x768xf32> to vector<8x768xf32>
    %69 = arith.mulf %65, %68 : vector<8x768xf32>
    %70 = arith.addf %62, %69 : vector<8x768xf32>
    %c4_i32 = arith.constant 4 : i32
    %71 = arith.index_cast %c4_i32 : i32 to index
    %c0_34 = arith.constant 0 : index
    %c0_35 = arith.constant 0 : index
    %72 = vector.load %arg4[%71, %c0_34, %c0_35] : memref<16x30x768xf32, #tpu.memory_space<vmem>>, vector<1x8x768xf32>
    %73 = vector.shape_cast %72 : vector<1x8x768xf32> to vector<8x768xf32>
    %74 = arith.index_cast %c4_i32 : i32 to index
    %c0_36 = arith.constant 0 : index
    %75 = vector.load %arg7[%74, %c0_36] : memref<16x768xf32, #tpu.memory_space<vmem>>, vector<1x768xf32>
    %76 = vector.broadcast %75 : vector<1x768xf32> to vector<8x768xf32>
    %77 = arith.mulf %73, %76 : vector<8x768xf32>
    %78 = arith.addf %70, %77 : vector<8x768xf32>
    %c5_i32 = arith.constant 5 : i32
    %79 = arith.index_cast %c5_i32 : i32 to index
    %c0_37 = arith.constant 0 : index
    %c0_38 = arith.constant 0 : index
    %80 = vector.load %arg4[%79, %c0_37, %c0_38] : memref<16x30x768xf32, #tpu.memory_space<vmem>>, vector<1x8x768xf32>
    %81 = vector.shape_cast %80 : vector<1x8x768xf32> to vector<8x768xf32>
    %82 = arith.index_cast %c5_i32 : i32 to index
    %c0_39 = arith.constant 0 : index
    %83 = vector.load %arg7[%82, %c0_39] : memref<16x768xf32, #tpu.memory_space<vmem>>, vector<1x768xf32>
    %84 = vector.broadcast %83 : vector<1x768xf32> to vector<8x768xf32>
    %85 = arith.mulf %81, %84 : vector<8x768xf32>
    %86 = arith.addf %78, %85 : vector<8x768xf32>
    %c6_i32 = arith.constant 6 : i32
    %87 = arith.index_cast %c6_i32 : i32 to index
    %c0_40 = arith.constant 0 : index
    %c0_41 = arith.constant 0 : index
    %88 = vector.load %arg4[%87, %c0_40, %c0_41] : memref<16x30x768xf32, #tpu.memory_space<vmem>>, vector<1x8x768xf32>
    %89 = vector.shape_cast %88 : vector<1x8x768xf32> to vector<8x768xf32>
    %90 = arith.index_cast %c6_i32 : i32 to index
    %c0_42 = arith.constant 0 : index
    %91 = vector.load %arg7[%90, %c0_42] : memref<16x768xf32, #tpu.memory_space<vmem>>, vector<1x768xf32>
    %92 = vector.broadcast %91 : vector<1x768xf32> to vector<8x768xf32>
    %93 = arith.mulf %89, %92 : vector<8x768xf32>
    %94 = arith.addf %86, %93 : vector<8x768xf32>
    %c7_i32 = arith.constant 7 : i32
    %95 = arith.index_cast %c7_i32 : i32 to index
    %c0_43 = arith.constant 0 : index
    %c0_44 = arith.constant 0 : index
    %96 = vector.load %arg4[%95, %c0_43, %c0_44] : memref<16x30x768xf32, #tpu.memory_space<vmem>>, vector<1x8x768xf32>
    %97 = vector.shape_cast %96 : vector<1x8x768xf32> to vector<8x768xf32>
    %98 = arith.index_cast %c7_i32 : i32 to index
    %c0_45 = arith.constant 0 : index
    %99 = vector.load %arg7[%98, %c0_45] : memref<16x768xf32, #tpu.memory_space<vmem>>, vector<1x768xf32>
    %100 = vector.broadcast %99 : vector<1x768xf32> to vector<8x768xf32>
    %101 = arith.mulf %97, %100 : vector<8x768xf32>
    %102 = arith.addf %94, %101 : vector<8x768xf32>
    %c8_i32_46 = arith.constant 8 : i32
    %103 = arith.index_cast %c8_i32_46 : i32 to index
    %c0_47 = arith.constant 0 : index
    %c0_48 = arith.constant 0 : index
    %104 = vector.load %arg4[%103, %c0_47, %c0_48] : memref<16x30x768xf32, #tpu.memory_space<vmem>>, vector<1x8x768xf32>
    %105 = vector.shape_cast %104 : vector<1x8x768xf32> to vector<8x768xf32>
    %106 = arith.index_cast %c8_i32_46 : i32 to index
    %c0_49 = arith.constant 0 : index
    %107 = vector.load %arg7[%106, %c0_49] : memref<16x768xf32, #tpu.memory_space<vmem>>, vector<1x768xf32>
    %108 = vector.broadcast %107 : vector<1x768xf32> to vector<8x768xf32>
    %109 = arith.mulf %105, %108 : vector<8x768xf32>
    %110 = arith.addf %102, %109 : vector<8x768xf32>
    %c9_i32 = arith.constant 9 : i32
    %111 = arith.index_cast %c9_i32 : i32 to index
    %c0_50 = arith.constant 0 : index
    %c0_51 = arith.constant 0 : index
    %112 = vector.load %arg4[%111, %c0_50, %c0_51] : memref<16x30x768xf32, #tpu.memory_space<vmem>>, vector<1x8x768xf32>
    %113 = vector.shape_cast %112 : vector<1x8x768xf32> to vector<8x768xf32>
    %114 = arith.index_cast %c9_i32 : i32 to index
    %c0_52 = arith.constant 0 : index
    %115 = vector.load %arg7[%114, %c0_52] : memref<16x768xf32, #tpu.memory_space<vmem>>, vector<1x768xf32>
    %116 = vector.broadcast %115 : vector<1x768xf32> to vector<8x768xf32>
    %117 = arith.mulf %113, %116 : vector<8x768xf32>
    %118 = arith.addf %110, %117 : vector<8x768xf32>
    %c10_i32 = arith.constant 10 : i32
    %119 = arith.index_cast %c10_i32 : i32 to index
    %c0_53 = arith.constant 0 : index
    %c0_54 = arith.constant 0 : index
    %120 = vector.load %arg4[%119, %c0_53, %c0_54] : memref<16x30x768xf32, #tpu.memory_space<vmem>>, vector<1x8x768xf32>
    %121 = vector.shape_cast %120 : vector<1x8x768xf32> to vector<8x768xf32>
    %122 = arith.index_cast %c10_i32 : i32 to index
    %c0_55 = arith.constant 0 : index
    %123 = vector.load %arg7[%122, %c0_55] : memref<16x768xf32, #tpu.memory_space<vmem>>, vector<1x768xf32>
    %124 = vector.broadcast %123 : vector<1x768xf32> to vector<8x768xf32>
    %125 = arith.mulf %121, %124 : vector<8x768xf32>
    %126 = arith.addf %118, %125 : vector<8x768xf32>
    %c11_i32 = arith.constant 11 : i32
    %127 = arith.index_cast %c11_i32 : i32 to index
    %c0_56 = arith.constant 0 : index
    %c0_57 = arith.constant 0 : index
    %128 = vector.load %arg4[%127, %c0_56, %c0_57] : memref<16x30x768xf32, #tpu.memory_space<vmem>>, vector<1x8x768xf32>
    %129 = vector.shape_cast %128 : vector<1x8x768xf32> to vector<8x768xf32>
    %130 = arith.index_cast %c11_i32 : i32 to index
    %c0_58 = arith.constant 0 : index
    %131 = vector.load %arg7[%130, %c0_58] : memref<16x768xf32, #tpu.memory_space<vmem>>, vector<1x768xf32>
    %132 = vector.broadcast %131 : vector<1x768xf32> to vector<8x768xf32>
    %133 = arith.mulf %129, %132 : vector<8x768xf32>
    %134 = arith.addf %126, %133 : vector<8x768xf32>
    %c12_i32 = arith.constant 12 : i32
    %135 = arith.index_cast %c12_i32 : i32 to index
    %c0_59 = arith.constant 0 : index
    %c0_60 = arith.constant 0 : index
    %136 = vector.load %arg4[%135, %c0_59, %c0_60] : memref<16x30x768xf32, #tpu.memory_space<vmem>>, vector<1x8x768xf32>
    %137 = vector.shape_cast %136 : vector<1x8x768xf32> to vector<8x768xf32>
    %138 = arith.index_cast %c12_i32 : i32 to index
    %c0_61 = arith.constant 0 : index
    %139 = vector.load %arg7[%138, %c0_61] : memref<16x768xf32, #tpu.memory_space<vmem>>, vector<1x768xf32>
    %140 = vector.broadcast %139 : vector<1x768xf32> to vector<8x768xf32>
    %141 = arith.mulf %137, %140 : vector<8x768xf32>
    %142 = arith.addf %134, %141 : vector<8x768xf32>
    %c13_i32 = arith.constant 13 : i32
    %143 = arith.index_cast %c13_i32 : i32 to index
    %c0_62 = arith.constant 0 : index
    %c0_63 = arith.constant 0 : index
    %144 = vector.load %arg4[%143, %c0_62, %c0_63] : memref<16x30x768xf32, #tpu.memory_space<vmem>>, vector<1x8x768xf32>
    %145 = vector.shape_cast %144 : vector<1x8x768xf32> to vector<8x768xf32>
    %146 = arith.index_cast %c13_i32 : i32 to index
    %c0_64 = arith.constant 0 : index
    %147 = vector.load %arg7[%146, %c0_64] : memref<16x768xf32, #tpu.memory_space<vmem>>, vector<1x768xf32>
    %148 = vector.broadcast %147 : vector<1x768xf32> to vector<8x768xf32>
    %149 = arith.mulf %145, %148 : vector<8x768xf32>
    %150 = arith.addf %142, %149 : vector<8x768xf32>
    %c14_i32 = arith.constant 14 : i32
    %151 = arith.index_cast %c14_i32 : i32 to index
    %c0_65 = arith.constant 0 : index
    %c0_66 = arith.constant 0 : index
    %152 = vector.load %arg4[%151, %c0_65, %c0_66] : memref<16x30x768xf32, #tpu.memory_space<vmem>>, vector<1x8x768xf32>
    %153 = vector.shape_cast %152 : vector<1x8x768xf32> to vector<8x768xf32>
    %154 = arith.index_cast %c14_i32 : i32 to index
    %c0_67 = arith.constant 0 : index
    %155 = vector.load %arg7[%154, %c0_67] : memref<16x768xf32, #tpu.memory_space<vmem>>, vector<1x768xf32>
    %156 = vector.broadcast %155 : vector<1x768xf32> to vector<8x768xf32>
    %157 = arith.mulf %153, %156 : vector<8x768xf32>
    %158 = arith.addf %150, %157 : vector<8x768xf32>
    %c15_i32 = arith.constant 15 : i32
    %159 = arith.index_cast %c15_i32 : i32 to index
    %c0_68 = arith.constant 0 : index
    %c0_69 = arith.constant 0 : index
    %160 = vector.load %arg4[%159, %c0_68, %c0_69] : memref<16x30x768xf32, #tpu.memory_space<vmem>>, vector<1x8x768xf32>
    %161 = vector.shape_cast %160 : vector<1x8x768xf32> to vector<8x768xf32>
    %162 = arith.index_cast %c15_i32 : i32 to index
    %c0_70 = arith.constant 0 : index
    %163 = vector.load %arg7[%162, %c0_70] : memref<16x768xf32, #tpu.memory_space<vmem>>, vector<1x768xf32>
    %164 = vector.broadcast %163 : vector<1x768xf32> to vector<8x768xf32>
    %165 = arith.mulf %161, %164 : vector<8x768xf32>
    %166 = arith.addf %158, %165 : vector<8x768xf32>
    %c16_i32 = arith.constant 16 : i32
    %167 = arith.index_cast %10 : i32 to index
    %c0_71 = arith.constant 0 : index
    %c0_72 = arith.constant 0 : index
    %168 = vector.load %arg5[%167, %c0_71, %c0_72] : memref<1x30x768xf32, #tpu.memory_space<vmem>>, vector<1x8x768xf32>
    %169 = vector.shape_cast %168 : vector<1x8x768xf32> to vector<8x768xf32>
    %170 = vector.shape_cast %166 : vector<8x768xf32> to vector<1x8x768xf32>
    tpu.vector_store %arg5[%167, %c0_71, %c0_72], %170 {strides = array<i32>} : memref<1x30x768xf32, #tpu.memory_space<vmem>>, vector<1x8x768xf32>,
    %cst_73 = arith.constant 0.000000e+00 : f32
    %171 = vector.broadcast %cst_73 : f32 to vector<8x768xf32>
    %c0_i32_74 = arith.constant 0 : i32
    %172 = arith.index_cast %c0_i32_74 : i32 to index
    %c8 = arith.constant 8 : index
    %c0_75 = arith.constant 0 : index
    %173 = vector.load %arg4[%172, %c8, %c0_75] : memref<16x30x768xf32, #tpu.memory_space<vmem>>, vector<1x8x768xf32>
    %174 = vector.shape_cast %173 : vector<1x8x768xf32> to vector<8x768xf32>
    %175 = arith.index_cast %c0_i32_74 : i32 to index
    %c0_76 = arith.constant 0 : index
    %176 = vector.load %arg7[%175, %c0_76] : memref<16x768xf32, #tpu.memory_space<vmem>>, vector<1x768xf32>
    %177 = vector.broadcast %176 : vector<1x768xf32> to vector<8x768xf32>
    %178 = arith.mulf %174, %177 : vector<8x768xf32>
    %179 = arith.addf %171, %178 : vector<8x768xf32>
    %c1_i32_77 = arith.constant 1 : i32
    %180 = arith.index_cast %c1_i32_77 : i32 to index
    %c8_78 = arith.constant 8 : index
    %c0_79 = arith.constant 0 : index
    %181 = vector.load %arg4[%180, %c8_78, %c0_79] : memref<16x30x768xf32, #tpu.memory_space<vmem>>, vector<1x8x768xf32>
    %182 = vector.shape_cast %181 : vector<1x8x768xf32> to vector<8x768xf32>
    %183 = arith.index_cast %c1_i32_77 : i32 to index
    %c0_80 = arith.constant 0 : index
    %184 = vector.load %arg7[%183, %c0_80] : memref<16x768xf32, #tpu.memory_space<vmem>>, vector<1x768xf32>
    %185 = vector.broadcast %184 : vector<1x768xf32> to vector<8x768xf32>
    %186 = arith.mulf %182, %185 : vector<8x768xf32>
    %187 = arith.addf %179, %186 : vector<8x768xf32>
    %c2_i32_81 = arith.constant 2 : i32
    %188 = arith.index_cast %c2_i32_81 : i32 to index
    %c8_82 = arith.constant 8 : index
    %c0_83 = arith.constant 0 : index
    %189 = vector.load %arg4[%188, %c8_82, %c0_83] : memref<16x30x768xf32, #tpu.memory_space<vmem>>, vector<1x8x768xf32>
    %190 = vector.shape_cast %189 : vector<1x8x768xf32> to vector<8x768xf32>
    %191 = arith.index_cast %c2_i32_81 : i32 to index
    %c0_84 = arith.constant 0 : index
    %192 = vector.load %arg7[%191, %c0_84] : memref<16x768xf32, #tpu.memory_space<vmem>>, vector<1x768xf32>
    %193 = vector.broadcast %192 : vector<1x768xf32> to vector<8x768xf32>
    %194 = arith.mulf %190, %193 : vector<8x768xf32>
    %195 = arith.addf %187, %194 : vector<8x768xf32>
    %c3_i32_85 = arith.constant 3 : i32
    %196 = arith.index_cast %c3_i32_85 : i32 to index
    %c8_86 = arith.constant 8 : index
    %c0_87 = arith.constant 0 : index
    %197 = vector.load %arg4[%196, %c8_86, %c0_87] : memref<16x30x768xf32, #tpu.memory_space<vmem>>, vector<1x8x768xf32>
    %198 = vector.shape_cast %197 : vector<1x8x768xf32> to vector<8x768xf32>
    %199 = arith.index_cast %c3_i32_85 : i32 to index
    %c0_88 = arith.constant 0 : index
    %200 = vector.load %arg7[%199, %c0_88] : memref<16x768xf32, #tpu.memory_space<vmem>>, vector<1x768xf32>
    %201 = vector.broadcast %200 : vector<1x768xf32> to vector<8x768xf32>
    %202 = arith.mulf %198, %201 : vector<8x768xf32>
    %203 = arith.addf %195, %202 : vector<8x768xf32>
    %c4_i32_89 = arith.constant 4 : i32
    %204 = arith.index_cast %c4_i32_89 : i32 to index
    %c8_90 = arith.constant 8 : index
    %c0_91 = arith.constant 0 : index
    %205 = vector.load %arg4[%204, %c8_90, %c0_91] : memref<16x30x768xf32, #tpu.memory_space<vmem>>, vector<1x8x768xf32>
    %206 = vector.shape_cast %205 : vector<1x8x768xf32> to vector<8x768xf32>
    %207 = arith.index_cast %c4_i32_89 : i32 to index
    %c0_92 = arith.constant 0 : index
    %208 = vector.load %arg7[%207, %c0_92] : memref<16x768xf32, #tpu.memory_space<vmem>>, vector<1x768xf32>
    %209 = vector.broadcast %208 : vector<1x768xf32> to vector<8x768xf32>
    %210 = arith.mulf %206, %209 : vector<8x768xf32>
    %211 = arith.addf %203, %210 : vector<8x768xf32>
    %c5_i32_93 = arith.constant 5 : i32
    %212 = arith.index_cast %c5_i32_93 : i32 to index
    %c8_94 = arith.constant 8 : index
    %c0_95 = arith.constant 0 : index
    %213 = vector.load %arg4[%212, %c8_94, %c0_95] : memref<16x30x768xf32, #tpu.memory_space<vmem>>, vector<1x8x768xf32>
    %214 = vector.shape_cast %213 : vector<1x8x768xf32> to vector<8x768xf32>
    %215 = arith.index_cast %c5_i32_93 : i32 to index
    %c0_96 = arith.constant 0 : index
    %216 = vector.load %arg7[%215, %c0_96] : memref<16x768xf32, #tpu.memory_space<vmem>>, vector<1x768xf32>
    %217 = vector.broadcast %216 : vector<1x768xf32> to vector<8x768xf32>
    %218 = arith.mulf %214, %217 : vector<8x768xf32>
    %219 = arith.addf %211, %218 : vector<8x768xf32>
    %c6_i32_97 = arith.constant 6 : i32
    %220 = arith.index_cast %c6_i32_97 : i32 to index
    %c8_98 = arith.constant 8 : index
    %c0_99 = arith.constant 0 : index
    %221 = vector.load %arg4[%220, %c8_98, %c0_99] : memref<16x30x768xf32, #tpu.memory_space<vmem>>, vector<1x8x768xf32>
    %222 = vector.shape_cast %221 : vector<1x8x768xf32> to vector<8x768xf32>
    %223 = arith.index_cast %c6_i32_97 : i32 to index
    %c0_100 = arith.constant 0 : index
    %224 = vector.load %arg7[%223, %c0_100] : memref<16x768xf32, #tpu.memory_space<vmem>>, vector<1x768xf32>
    %225 = vector.broadcast %224 : vector<1x768xf32> to vector<8x768xf32>
    %226 = arith.mulf %222, %225 : vector<8x768xf32>
    %227 = arith.addf %219, %226 : vector<8x768xf32>
    %c7_i32_101 = arith.constant 7 : i32
    %228 = arith.index_cast %c7_i32_101 : i32 to index
    %c8_102 = arith.constant 8 : index
    %c0_103 = arith.constant 0 : index
    %229 = vector.load %arg4[%228, %c8_102, %c0_103] : memref<16x30x768xf32, #tpu.memory_space<vmem>>, vector<1x8x768xf32>
    %230 = vector.shape_cast %229 : vector<1x8x768xf32> to vector<8x768xf32>
    %231 = arith.index_cast %c7_i32_101 : i32 to index
    %c0_104 = arith.constant 0 : index
    %232 = vector.load %arg7[%231, %c0_104] : memref<16x768xf32, #tpu.memory_space<vmem>>, vector<1x768xf32>
    %233 = vector.broadcast %232 : vector<1x768xf32> to vector<8x768xf32>
    %234 = arith.mulf %230, %233 : vector<8x768xf32>
    %235 = arith.addf %227, %234 : vector<8x768xf32>
    %c8_i32_105 = arith.constant 8 : i32
    %236 = arith.index_cast %c8_i32_105 : i32 to index
    %c8_106 = arith.constant 8 : index
    %c0_107 = arith.constant 0 : index
    %237 = vector.load %arg4[%236, %c8_106, %c0_107] : memref<16x30x768xf32, #tpu.memory_space<vmem>>, vector<1x8x768xf32>
    %238 = vector.shape_cast %237 : vector<1x8x768xf32> to vector<8x768xf32>
    %239 = arith.index_cast %c8_i32_105 : i32 to index
    %c0_108 = arith.constant 0 : index
    %240 = vector.load %arg7[%239, %c0_108] : memref<16x768xf32, #tpu.memory_space<vmem>>, vector<1x768xf32>
    %241 = vector.broadcast %240 : vector<1x768xf32> to vector<8x768xf32>
    %242 = arith.mulf %238, %241 : vector<8x768xf32>
    %243 = arith.addf %235, %242 : vector<8x768xf32>
    %c9_i32_109 = arith.constant 9 : i32
    %244 = arith.index_cast %c9_i32_109 : i32 to index
    %c8_110 = arith.constant 8 : index
    %c0_111 = arith.constant 0 : index
    %245 = vector.load %arg4[%244, %c8_110, %c0_111] : memref<16x30x768xf32, #tpu.memory_space<vmem>>, vector<1x8x768xf32>
    %246 = vector.shape_cast %245 : vector<1x8x768xf32> to vector<8x768xf32>
    %247 = arith.index_cast %c9_i32_109 : i32 to index
    %c0_112 = arith.constant 0 : index
    %248 = vector.load %arg7[%247, %c0_112] : memref<16x768xf32, #tpu.memory_space<vmem>>, vector<1x768xf32>
    %249 = vector.broadcast %248 : vector<1x768xf32> to vector<8x768xf32>
    %250 = arith.mulf %246, %249 : vector<8x768xf32>
    %251 = arith.addf %243, %250 : vector<8x768xf32>
    %c10_i32_113 = arith.constant 10 : i32
    %252 = arith.index_cast %c10_i32_113 : i32 to index
    %c8_114 = arith.constant 8 : index
    %c0_115 = arith.constant 0 : index
    %253 = vector.load %arg4[%252, %c8_114, %c0_115] : memref<16x30x768xf32, #tpu.memory_space<vmem>>, vector<1x8x768xf32>
    %254 = vector.shape_cast %253 : vector<1x8x768xf32> to vector<8x768xf32>
    %255 = arith.index_cast %c10_i32_113 : i32 to index
    %c0_116 = arith.constant 0 : index
    %256 = vector.load %arg7[%255, %c0_116] : memref<16x768xf32, #tpu.memory_space<vmem>>, vector<1x768xf32>
    %257 = vector.broadcast %256 : vector<1x768xf32> to vector<8x768xf32>
    %258 = arith.mulf %254, %257 : vector<8x768xf32>
    %259 = arith.addf %251, %258 : vector<8x768xf32>
    %c11_i32_117 = arith.constant 11 : i32
    %260 = arith.index_cast %c11_i32_117 : i32 to index
    %c8_118 = arith.constant 8 : index
    %c0_119 = arith.constant 0 : index
    %261 = vector.load %arg4[%260, %c8_118, %c0_119] : memref<16x30x768xf32, #tpu.memory_space<vmem>>, vector<1x8x768xf32>
    %262 = vector.shape_cast %261 : vector<1x8x768xf32> to vector<8x768xf32>
    %263 = arith.index_cast %c11_i32_117 : i32 to index
    %c0_120 = arith.constant 0 : index
    %264 = vector.load %arg7[%263, %c0_120] : memref<16x768xf32, #tpu.memory_space<vmem>>, vector<1x768xf32>
    %265 = vector.broadcast %264 : vector<1x768xf32> to vector<8x768xf32>
    %266 = arith.mulf %262, %265 : vector<8x768xf32>
    %267 = arith.addf %259, %266 : vector<8x768xf32>
    %c12_i32_121 = arith.constant 12 : i32
    %268 = arith.index_cast %c12_i32_121 : i32 to index
    %c8_122 = arith.constant 8 : index
    %c0_123 = arith.constant 0 : index
    %269 = vector.load %arg4[%268, %c8_122, %c0_123] : memref<16x30x768xf32, #tpu.memory_space<vmem>>, vector<1x8x768xf32>
    %270 = vector.shape_cast %269 : vector<1x8x768xf32> to vector<8x768xf32>
    %271 = arith.index_cast %c12_i32_121 : i32 to index
    %c0_124 = arith.constant 0 : index
    %272 = vector.load %arg7[%271, %c0_124] : memref<16x768xf32, #tpu.memory_space<vmem>>, vector<1x768xf32>
    %273 = vector.broadcast %272 : vector<1x768xf32> to vector<8x768xf32>
    %274 = arith.mulf %270, %273 : vector<8x768xf32>
    %275 = arith.addf %267, %274 : vector<8x768xf32>
    %c13_i32_125 = arith.constant 13 : i32
    %276 = arith.index_cast %c13_i32_125 : i32 to index
    %c8_126 = arith.constant 8 : index
    %c0_127 = arith.constant 0 : index
    %277 = vector.load %arg4[%276, %c8_126, %c0_127] : memref<16x30x768xf32, #tpu.memory_space<vmem>>, vector<1x8x768xf32>
    %278 = vector.shape_cast %277 : vector<1x8x768xf32> to vector<8x768xf32>
    %279 = arith.index_cast %c13_i32_125 : i32 to index
    %c0_128 = arith.constant 0 : index
    %280 = vector.load %arg7[%279, %c0_128] : memref<16x768xf32, #tpu.memory_space<vmem>>, vector<1x768xf32>
    %281 = vector.broadcast %280 : vector<1x768xf32> to vector<8x768xf32>
    %282 = arith.mulf %278, %281 : vector<8x768xf32>
    %283 = arith.addf %275, %282 : vector<8x768xf32>
    %c14_i32_129 = arith.constant 14 : i32
    %284 = arith.index_cast %c14_i32_129 : i32 to index
    %c8_130 = arith.constant 8 : index
    %c0_131 = arith.constant 0 : index
    %285 = vector.load %arg4[%284, %c8_130, %c0_131] : memref<16x30x768xf32, #tpu.memory_space<vmem>>, vector<1x8x768xf32>
    %286 = vector.shape_cast %285 : vector<1x8x768xf32> to vector<8x768xf32>
    %287 = arith.index_cast %c14_i32_129 : i32 to index
    %c0_132 = arith.constant 0 : index
    %288 = vector.load %arg7[%287, %c0_132] : memref<16x768xf32, #tpu.memory_space<vmem>>, vector<1x768xf32>
    %289 = vector.broadcast %288 : vector<1x768xf32> to vector<8x768xf32>
    %290 = arith.mulf %286, %289 : vector<8x768xf32>
    %291 = arith.addf %283, %290 : vector<8x768xf32>
    %c15_i32_133 = arith.constant 15 : i32
    %292 = arith.index_cast %c15_i32_133 : i32 to index
    %c8_134 = arith.constant 8 : index
    %c0_135 = arith.constant 0 : index
    %293 = vector.load %arg4[%292, %c8_134, %c0_135] : memref<16x30x768xf32, #tpu.memory_space<vmem>>, vector<1x8x768xf32>
    %294 = vector.shape_cast %293 : vector<1x8x768xf32> to vector<8x768xf32>
    %295 = arith.index_cast %c15_i32_133 : i32 to index
    %c0_136 = arith.constant 0 : index
    %296 = vector.load %arg7[%295, %c0_136] : memref<16x768xf32, #tpu.memory_space<vmem>>, vector<1x768xf32>
    %297 = vector.broadcast %296 : vector<1x768xf32> to vector<8x768xf32>
    %298 = arith.mulf %294, %297 : vector<8x768xf32>
    %299 = arith.addf %291, %298 : vector<8x768xf32>
    %c16_i32_137 = arith.constant 16 : i32
    %300 = arith.index_cast %10 : i32 to index
    %c8_138 = arith.constant 8 : index
    %c0_139 = arith.constant 0 : index
    %301 = vector.load %arg5[%300, %c8_138, %c0_139] : memref<1x30x768xf32, #tpu.memory_space<vmem>>, vector<1x8x768xf32>
    %302 = vector.shape_cast %301 : vector<1x8x768xf32> to vector<8x768xf32>
    %303 = vector.shape_cast %299 : vector<8x768xf32> to vector<1x8x768xf32>
    tpu.vector_store %arg5[%300, %c8_138, %c0_139], %303 {strides = array<i32>} : memref<1x30x768xf32, #tpu.memory_space<vmem>>, vector<1x8x768xf32>,
    %cst_140 = arith.constant 0.000000e+00 : f32
    %304 = vector.broadcast %cst_140 : f32 to vector<8x768xf32>
    %c0_i32_141 = arith.constant 0 : i32
    %305 = arith.index_cast %c0_i32_141 : i32 to index
    %c16 = arith.constant 16 : index
    %c0_142 = arith.constant 0 : index
    %306 = vector.load %arg4[%305, %c16, %c0_142] : memref<16x30x768xf32, #tpu.memory_space<vmem>>, vector<1x8x768xf32>
    %307 = vector.shape_cast %306 : vector<1x8x768xf32> to vector<8x768xf32>
    %308 = arith.index_cast %c0_i32_141 : i32 to index
    %c0_143 = arith.constant 0 : index
    %309 = vector.load %arg7[%308, %c0_143] : memref<16x768xf32, #tpu.memory_space<vmem>>, vector<1x768xf32>
    %310 = vector.broadcast %309 : vector<1x768xf32> to vector<8x768xf32>
    %311 = arith.mulf %307, %310 : vector<8x768xf32>
    %312 = arith.addf %304, %311 : vector<8x768xf32>
    %c1_i32_144 = arith.constant 1 : i32
    %313 = arith.index_cast %c1_i32_144 : i32 to index
    %c16_145 = arith.constant 16 : index
    %c0_146 = arith.constant 0 : index
    %314 = vector.load %arg4[%313, %c16_145, %c0_146] : memref<16x30x768xf32, #tpu.memory_space<vmem>>, vector<1x8x768xf32>
    %315 = vector.shape_cast %314 : vector<1x8x768xf32> to vector<8x768xf32>
    %316 = arith.index_cast %c1_i32_144 : i32 to index
    %c0_147 = arith.constant 0 : index
    %317 = vector.load %arg7[%316, %c0_147] : memref<16x768xf32, #tpu.memory_space<vmem>>, vector<1x768xf32>
    %318 = vector.broadcast %317 : vector<1x768xf32> to vector<8x768xf32>
    %319 = arith.mulf %315, %318 : vector<8x768xf32>
    %320 = arith.addf %312, %319 : vector<8x768xf32>
    %c2_i32_148 = arith.constant 2 : i32
    %321 = arith.index_cast %c2_i32_148 : i32 to index
    %c16_149 = arith.constant 16 : index
    %c0_150 = arith.constant 0 : index
    %322 = vector.load %arg4[%321, %c16_149, %c0_150] : memref<16x30x768xf32, #tpu.memory_space<vmem>>, vector<1x8x768xf32>
    %323 = vector.shape_cast %322 : vector<1x8x768xf32> to vector<8x768xf32>
    %324 = arith.index_cast %c2_i32_148 : i32 to index
    %c0_151 = arith.constant 0 : index
    %325 = vector.load %arg7[%324, %c0_151] : memref<16x768xf32, #tpu.memory_space<vmem>>, vector<1x768xf32>
    %326 = vector.broadcast %325 : vector<1x768xf32> to vector<8x768xf32>
    %327 = arith.mulf %323, %326 : vector<8x768xf32>
    %328 = arith.addf %320, %327 : vector<8x768xf32>
    %c3_i32_152 = arith.constant 3 : i32
    %329 = arith.index_cast %c3_i32_152 : i32 to index
    %c16_153 = arith.constant 16 : index
    %c0_154 = arith.constant 0 : index
    %330 = vector.load %arg4[%329, %c16_153, %c0_154] : memref<16x30x768xf32, #tpu.memory_space<vmem>>, vector<1x8x768xf32>
    %331 = vector.shape_cast %330 : vector<1x8x768xf32> to vector<8x768xf32>
    %332 = arith.index_cast %c3_i32_152 : i32 to index
    %c0_155 = arith.constant 0 : index
    %333 = vector.load %arg7[%332, %c0_155] : memref<16x768xf32, #tpu.memory_space<vmem>>, vector<1x768xf32>
    %334 = vector.broadcast %333 : vector<1x768xf32> to vector<8x768xf32>
    %335 = arith.mulf %331, %334 : vector<8x768xf32>
    %336 = arith.addf %328, %335 : vector<8x768xf32>
    %c4_i32_156 = arith.constant 4 : i32
    %337 = arith.index_cast %c4_i32_156 : i32 to index
    %c16_157 = arith.constant 16 : index
    %c0_158 = arith.constant 0 : index
    %338 = vector.load %arg4[%337, %c16_157, %c0_158] : memref<16x30x768xf32, #tpu.memory_space<vmem>>, vector<1x8x768xf32>
    %339 = vector.shape_cast %338 : vector<1x8x768xf32> to vector<8x768xf32>
    %340 = arith.index_cast %c4_i32_156 : i32 to index
    %c0_159 = arith.constant 0 : index
    %341 = vector.load %arg7[%340, %c0_159] : memref<16x768xf32, #tpu.memory_space<vmem>>, vector<1x768xf32>
    %342 = vector.broadcast %341 : vector<1x768xf32> to vector<8x768xf32>
    %343 = arith.mulf %339, %342 : vector<8x768xf32>
    %344 = arith.addf %336, %343 : vector<8x768xf32>
    %c5_i32_160 = arith.constant 5 : i32
    %345 = arith.index_cast %c5_i32_160 : i32 to index
    %c16_161 = arith.constant 16 : index
    %c0_162 = arith.constant 0 : index
    %346 = vector.load %arg4[%345, %c16_161, %c0_162] : memref<16x30x768xf32, #tpu.memory_space<vmem>>, vector<1x8x768xf32>
    %347 = vector.shape_cast %346 : vector<1x8x768xf32> to vector<8x768xf32>
    %348 = arith.index_cast %c5_i32_160 : i32 to index
    %c0_163 = arith.constant 0 : index
    %349 = vector.load %arg7[%348, %c0_163] : memref<16x768xf32, #tpu.memory_space<vmem>>, vector<1x768xf32>
    %350 = vector.broadcast %349 : vector<1x768xf32> to vector<8x768xf32>
    %351 = arith.mulf %347, %350 : vector<8x768xf32>
    %352 = arith.addf %344, %351 : vector<8x768xf32>
    %c6_i32_164 = arith.constant 6 : i32
    %353 = arith.index_cast %c6_i32_164 : i32 to index
    %c16_165 = arith.constant 16 : index
    %c0_166 = arith.constant 0 : index
    %354 = vector.load %arg4[%353, %c16_165, %c0_166] : memref<16x30x768xf32, #tpu.memory_space<vmem>>, vector<1x8x768xf32>
    %355 = vector.shape_cast %354 : vector<1x8x768xf32> to vector<8x768xf32>
    %356 = arith.index_cast %c6_i32_164 : i32 to index
    %c0_167 = arith.constant 0 : index
    %357 = vector.load %arg7[%356, %c0_167] : memref<16x768xf32, #tpu.memory_space<vmem>>, vector<1x768xf32>
    %358 = vector.broadcast %357 : vector<1x768xf32> to vector<8x768xf32>
    %359 = arith.mulf %355, %358 : vector<8x768xf32>
    %360 = arith.addf %352, %359 : vector<8x768xf32>
    %c7_i32_168 = arith.constant 7 : i32
    %361 = arith.index_cast %c7_i32_168 : i32 to index
    %c16_169 = arith.constant 16 : index
    %c0_170 = arith.constant 0 : index
    %362 = vector.load %arg4[%361, %c16_169, %c0_170] : memref<16x30x768xf32, #tpu.memory_space<vmem>>, vector<1x8x768xf32>
    %363 = vector.shape_cast %362 : vector<1x8x768xf32> to vector<8x768xf32>
    %364 = arith.index_cast %c7_i32_168 : i32 to index
    %c0_171 = arith.constant 0 : index
    %365 = vector.load %arg7[%364, %c0_171] : memref<16x768xf32, #tpu.memory_space<vmem>>, vector<1x768xf32>
    %366 = vector.broadcast %365 : vector<1x768xf32> to vector<8x768xf32>
    %367 = arith.mulf %363, %366 : vector<8x768xf32>
    %368 = arith.addf %360, %367 : vector<8x768xf32>
    %c8_i32_172 = arith.constant 8 : i32
    %369 = arith.index_cast %c8_i32_172 : i32 to index
    %c16_173 = arith.constant 16 : index
    %c0_174 = arith.constant 0 : index
    %370 = vector.load %arg4[%369, %c16_173, %c0_174] : memref<16x30x768xf32, #tpu.memory_space<vmem>>, vector<1x8x768xf32>
    %371 = vector.shape_cast %370 : vector<1x8x768xf32> to vector<8x768xf32>
    %372 = arith.index_cast %c8_i32_172 : i32 to index
    %c0_175 = arith.constant 0 : index
    %373 = vector.load %arg7[%372, %c0_175] : memref<16x768xf32, #tpu.memory_space<vmem>>, vector<1x768xf32>
    %374 = vector.broadcast %373 : vector<1x768xf32> to vector<8x768xf32>
    %375 = arith.mulf %371, %374 : vector<8x768xf32>
    %376 = arith.addf %368, %375 : vector<8x768xf32>
    %c9_i32_176 = arith.constant 9 : i32
    %377 = arith.index_cast %c9_i32_176 : i32 to index
    %c16_177 = arith.constant 16 : index
    %c0_178 = arith.constant 0 : index
    %378 = vector.load %arg4[%377, %c16_177, %c0_178] : memref<16x30x768xf32, #tpu.memory_space<vmem>>, vector<1x8x768xf32>
    %379 = vector.shape_cast %378 : vector<1x8x768xf32> to vector<8x768xf32>
    %380 = arith.index_cast %c9_i32_176 : i32 to index
    %c0_179 = arith.constant 0 : index
    %381 = vector.load %arg7[%380, %c0_179] : memref<16x768xf32, #tpu.memory_space<vmem>>, vector<1x768xf32>
    %382 = vector.broadcast %381 : vector<1x768xf32> to vector<8x768xf32>
    %383 = arith.mulf %379, %382 : vector<8x768xf32>
    %384 = arith.addf %376, %383 : vector<8x768xf32>
    %c10_i32_180 = arith.constant 10 : i32
    %385 = arith.index_cast %c10_i32_180 : i32 to index
    %c16_181 = arith.constant 16 : index
    %c0_182 = arith.constant 0 : index
    %386 = vector.load %arg4[%385, %c16_181, %c0_182] : memref<16x30x768xf32, #tpu.memory_space<vmem>>, vector<1x8x768xf32>
    %387 = vector.shape_cast %386 : vector<1x8x768xf32> to vector<8x768xf32>
    %388 = arith.index_cast %c10_i32_180 : i32 to index
    %c0_183 = arith.constant 0 : index
    %389 = vector.load %arg7[%388, %c0_183] : memref<16x768xf32, #tpu.memory_space<vmem>>, vector<1x768xf32>
    %390 = vector.broadcast %389 : vector<1x768xf32> to vector<8x768xf32>
    %391 = arith.mulf %387, %390 : vector<8x768xf32>
    %392 = arith.addf %384, %391 : vector<8x768xf32>
    %c11_i32_184 = arith.constant 11 : i32
    %393 = arith.index_cast %c11_i32_184 : i32 to index
    %c16_185 = arith.constant 16 : index
    %c0_186 = arith.constant 0 : index
    %394 = vector.load %arg4[%393, %c16_185, %c0_186] : memref<16x30x768xf32, #tpu.memory_space<vmem>>, vector<1x8x768xf32>
    %395 = vector.shape_cast %394 : vector<1x8x768xf32> to vector<8x768xf32>
    %396 = arith.index_cast %c11_i32_184 : i32 to index
    %c0_187 = arith.constant 0 : index
    %397 = vector.load %arg7[%396, %c0_187] : memref<16x768xf32, #tpu.memory_space<vmem>>, vector<1x768xf32>
    %398 = vector.broadcast %397 : vector<1x768xf32> to vector<8x768xf32>
    %399 = arith.mulf %395, %398 : vector<8x768xf32>
    %400 = arith.addf %392, %399 : vector<8x768xf32>
    %c12_i32_188 = arith.constant 12 : i32
    %401 = arith.index_cast %c12_i32_188 : i32 to index
    %c16_189 = arith.constant 16 : index
    %c0_190 = arith.constant 0 : index
    %402 = vector.load %arg4[%401, %c16_189, %c0_190] : memref<16x30x768xf32, #tpu.memory_space<vmem>>, vector<1x8x768xf32>
    %403 = vector.shape_cast %402 : vector<1x8x768xf32> to vector<8x768xf32>
    %404 = arith.index_cast %c12_i32_188 : i32 to index
    %c0_191 = arith.constant 0 : index
    %405 = vector.load %arg7[%404, %c0_191] : memref<16x768xf32, #tpu.memory_space<vmem>>, vector<1x768xf32>
    %406 = vector.broadcast %405 : vector<1x768xf32> to vector<8x768xf32>
    %407 = arith.mulf %403, %406 : vector<8x768xf32>
    %408 = arith.addf %400, %407 : vector<8x768xf32>
    %c13_i32_192 = arith.constant 13 : i32
    %409 = arith.index_cast %c13_i32_192 : i32 to index
    %c16_193 = arith.constant 16 : index
    %c0_194 = arith.constant 0 : index
    %410 = vector.load %arg4[%409, %c16_193, %c0_194] : memref<16x30x768xf32, #tpu.memory_space<vmem>>, vector<1x8x768xf32>
    %411 = vector.shape_cast %410 : vector<1x8x768xf32> to vector<8x768xf32>
    %412 = arith.index_cast %c13_i32_192 : i32 to index
    %c0_195 = arith.constant 0 : index
    %413 = vector.load %arg7[%412, %c0_195] : memref<16x768xf32, #tpu.memory_space<vmem>>, vector<1x768xf32>
    %414 = vector.broadcast %413 : vector<1x768xf32> to vector<8x768xf32>
    %415 = arith.mulf %411, %414 : vector<8x768xf32>
    %416 = arith.addf %408, %415 : vector<8x768xf32>
    %c14_i32_196 = arith.constant 14 : i32
    %417 = arith.index_cast %c14_i32_196 : i32 to index
    %c16_197 = arith.constant 16 : index
    %c0_198 = arith.constant 0 : index
    %418 = vector.load %arg4[%417, %c16_197, %c0_198] : memref<16x30x768xf32, #tpu.memory_space<vmem>>, vector<1x8x768xf32>
    %419 = vector.shape_cast %418 : vector<1x8x768xf32> to vector<8x768xf32>
    %420 = arith.index_cast %c14_i32_196 : i32 to index
    %c0_199 = arith.constant 0 : index
    %421 = vector.load %arg7[%420, %c0_199] : memref<16x768xf32, #tpu.memory_space<vmem>>, vector<1x768xf32>
    %422 = vector.broadcast %421 : vector<1x768xf32> to vector<8x768xf32>
    %423 = arith.mulf %419, %422 : vector<8x768xf32>
    %424 = arith.addf %416, %423 : vector<8x768xf32>
    %c15_i32_200 = arith.constant 15 : i32
    %425 = arith.index_cast %c15_i32_200 : i32 to index
    %c16_201 = arith.constant 16 : index
    %c0_202 = arith.constant 0 : index
    %426 = vector.load %arg4[%425, %c16_201, %c0_202] : memref<16x30x768xf32, #tpu.memory_space<vmem>>, vector<1x8x768xf32>
    %427 = vector.shape_cast %426 : vector<1x8x768xf32> to vector<8x768xf32>
    %428 = arith.index_cast %c15_i32_200 : i32 to index
    %c0_203 = arith.constant 0 : index
    %429 = vector.load %arg7[%428, %c0_203] : memref<16x768xf32, #tpu.memory_space<vmem>>, vector<1x768xf32>
    %430 = vector.broadcast %429 : vector<1x768xf32> to vector<8x768xf32>
    %431 = arith.mulf %427, %430 : vector<8x768xf32>
    %432 = arith.addf %424, %431 : vector<8x768xf32>
    %c16_i32_204 = arith.constant 16 : i32
    %433 = arith.index_cast %10 : i32 to index
    %c16_205 = arith.constant 16 : index
    %c0_206 = arith.constant 0 : index
    %434 = vector.load %arg5[%433, %c16_205, %c0_206] : memref<1x30x768xf32, #tpu.memory_space<vmem>>, vector<1x8x768xf32>
    %435 = vector.shape_cast %434 : vector<1x8x768xf32> to vector<8x768xf32>
    %436 = vector.shape_cast %432 : vector<8x768xf32> to vector<1x8x768xf32>
    tpu.vector_store %arg5[%433, %c16_205, %c0_206], %436 {strides = array<i32>} : memref<1x30x768xf32, #tpu.memory_space<vmem>>, vector<1x8x768xf32>,
    %cst_207 = arith.constant 0.000000e+00 : f32
    %437 = vector.broadcast %cst_207 : f32 to vector<6x768xf32>
    %c0_i32_208 = arith.constant 0 : i32
    %438 = arith.index_cast %c0_i32_208 : i32 to index
    %c24 = arith.constant 24 : index
    %c0_209 = arith.constant 0 : index
    %439 = vector.load %arg4[%438, %c24, %c0_209] : memref<16x30x768xf32, #tpu.memory_space<vmem>>, vector<1x6x768xf32>
    %440 = vector.shape_cast %439 : vector<1x6x768xf32> to vector<6x768xf32>
    %441 = arith.index_cast %c0_i32_208 : i32 to index
    %c0_210 = arith.constant 0 : index
    %442 = vector.load %arg7[%441, %c0_210] : memref<16x768xf32, #tpu.memory_space<vmem>>, vector<1x768xf32>
    %443 = vector.broadcast %442 : vector<1x768xf32> to vector<6x768xf32>
    %444 = arith.mulf %440, %443 : vector<6x768xf32>
    %445 = arith.addf %437, %444 : vector<6x768xf32>
    %c1_i32_211 = arith.constant 1 : i32
    %446 = arith.index_cast %c1_i32_211 : i32 to index
    %c24_212 = arith.constant 24 : index
    %c0_213 = arith.constant 0 : index
    %447 = vector.load %arg4[%446, %c24_212, %c0_213] : memref<16x30x768xf32, #tpu.memory_space<vmem>>, vector<1x6x768xf32>
    %448 = vector.shape_cast %447 : vector<1x6x768xf32> to vector<6x768xf32>
    %449 = arith.index_cast %c1_i32_211 : i32 to index
    %c0_214 = arith.constant 0 : index
    %450 = vector.load %arg7[%449, %c0_214] : memref<16x768xf32, #tpu.memory_space<vmem>>, vector<1x768xf32>
    %451 = vector.broadcast %450 : vector<1x768xf32> to vector<6x768xf32>
    %452 = arith.mulf %448, %451 : vector<6x768xf32>
    %453 = arith.addf %445, %452 : vector<6x768xf32>
    %c2_i32_215 = arith.constant 2 : i32
    %454 = arith.index_cast %c2_i32_215 : i32 to index
    %c24_216 = arith.constant 24 : index
    %c0_217 = arith.constant 0 : index
    %455 = vector.load %arg4[%454, %c24_216, %c0_217] : memref<16x30x768xf32, #tpu.memory_space<vmem>>, vector<1x6x768xf32>
    %456 = vector.shape_cast %455 : vector<1x6x768xf32> to vector<6x768xf32>
    %457 = arith.index_cast %c2_i32_215 : i32 to index
    %c0_218 = arith.constant 0 : index
    %458 = vector.load %arg7[%457, %c0_218] : memref<16x768xf32, #tpu.memory_space<vmem>>, vector<1x768xf32>
    %459 = vector.broadcast %458 : vector<1x768xf32> to vector<6x768xf32>
    %460 = arith.mulf %456, %459 : vector<6x768xf32>
    %461 = arith.addf %453, %460 : vector<6x768xf32>
    %c3_i32_219 = arith.constant 3 : i32
    %462 = arith.index_cast %c3_i32_219 : i32 to index
    %c24_220 = arith.constant 24 : index
    %c0_221 = arith.constant 0 : index
    %463 = vector.load %arg4[%462, %c24_220, %c0_221] : memref<16x30x768xf32, #tpu.memory_space<vmem>>, vector<1x6x768xf32>
    %464 = vector.shape_cast %463 : vector<1x6x768xf32> to vector<6x768xf32>
    %465 = arith.index_cast %c3_i32_219 : i32 to index
    %c0_222 = arith.constant 0 : index
    %466 = vector.load %arg7[%465, %c0_222] : memref<16x768xf32, #tpu.memory_space<vmem>>, vector<1x768xf32>
    %467 = vector.broadcast %466 : vector<1x768xf32> to vector<6x768xf32>
    %468 = arith.mulf %464, %467 : vector<6x768xf32>
    %469 = arith.addf %461, %468 : vector<6x768xf32>
    %c4_i32_223 = arith.constant 4 : i32
    %470 = arith.index_cast %c4_i32_223 : i32 to index
    %c24_224 = arith.constant 24 : index
    %c0_225 = arith.constant 0 : index
    %471 = vector.load %arg4[%470, %c24_224, %c0_225] : memref<16x30x768xf32, #tpu.memory_space<vmem>>, vector<1x6x768xf32>
    %472 = vector.shape_cast %471 : vector<1x6x768xf32> to vector<6x768xf32>
    %473 = arith.index_cast %c4_i32_223 : i32 to index
    %c0_226 = arith.constant 0 : index
    %474 = vector.load %arg7[%473, %c0_226] : memref<16x768xf32, #tpu.memory_space<vmem>>, vector<1x768xf32>
    %475 = vector.broadcast %474 : vector<1x768xf32> to vector<6x768xf32>
    %476 = arith.mulf %472, %475 : vector<6x768xf32>
    %477 = arith.addf %469, %476 : vector<6x768xf32>
    %c5_i32_227 = arith.constant 5 : i32
    %478 = arith.index_cast %c5_i32_227 : i32 to index
    %c24_228 = arith.constant 24 : index
    %c0_229 = arith.constant 0 : index
    %479 = vector.load %arg4[%478, %c24_228, %c0_229] : memref<16x30x768xf32, #tpu.memory_space<vmem>>, vector<1x6x768xf32>
    %480 = vector.shape_cast %479 : vector<1x6x768xf32> to vector<6x768xf32>
    %481 = arith.index_cast %c5_i32_227 : i32 to index
    %c0_230 = arith.constant 0 : index
    %482 = vector.load %arg7[%481, %c0_230] : memref<16x768xf32, #tpu.memory_space<vmem>>, vector<1x768xf32>
    %483 = vector.broadcast %482 : vector<1x768xf32> to vector<6x768xf32>
    %484 = arith.mulf %480, %483 : vector<6x768xf32>
    %485 = arith.addf %477, %484 : vector<6x768xf32>
    %c6_i32_231 = arith.constant 6 : i32
    %486 = arith.index_cast %c6_i32_231 : i32 to index
    %c24_232 = arith.constant 24 : index
    %c0_233 = arith.constant 0 : index
    %487 = vector.load %arg4[%486, %c24_232, %c0_233] : memref<16x30x768xf32, #tpu.memory_space<vmem>>, vector<1x6x768xf32>
    %488 = vector.shape_cast %487 : vector<1x6x768xf32> to vector<6x768xf32>
    %489 = arith.index_cast %c6_i32_231 : i32 to index
    %c0_234 = arith.constant 0 : index
    %490 = vector.load %arg7[%489, %c0_234] : memref<16x768xf32, #tpu.memory_space<vmem>>, vector<1x768xf32>
    %491 = vector.broadcast %490 : vector<1x768xf32> to vector<6x768xf32>
    %492 = arith.mulf %488, %491 : vector<6x768xf32>
    %493 = arith.addf %485, %492 : vector<6x768xf32>
    %c7_i32_235 = arith.constant 7 : i32
    %494 = arith.index_cast %c7_i32_235 : i32 to index
    %c24_236 = arith.constant 24 : index
    %c0_237 = arith.constant 0 : index
    %495 = vector.load %arg4[%494, %c24_236, %c0_237] : memref<16x30x768xf32, #tpu.memory_space<vmem>>, vector<1x6x768xf32>
    %496 = vector.shape_cast %495 : vector<1x6x768xf32> to vector<6x768xf32>
    %497 = arith.index_cast %c7_i32_235 : i32 to index
    %c0_238 = arith.constant 0 : index
    %498 = vector.load %arg7[%497, %c0_238] : memref<16x768xf32, #tpu.memory_space<vmem>>, vector<1x768xf32>
    %499 = vector.broadcast %498 : vector<1x768xf32> to vector<6x768xf32>
    %500 = arith.mulf %496, %499 : vector<6x768xf32>
    %501 = arith.addf %493, %500 : vector<6x768xf32>
    %c8_i32_239 = arith.constant 8 : i32
    %502 = arith.index_cast %c8_i32_239 : i32 to index
    %c24_240 = arith.constant 24 : index
    %c0_241 = arith.constant 0 : index
    %503 = vector.load %arg4[%502, %c24_240, %c0_241] : memref<16x30x768xf32, #tpu.memory_space<vmem>>, vector<1x6x768xf32>
    %504 = vector.shape_cast %503 : vector<1x6x768xf32> to vector<6x768xf32>
    %505 = arith.index_cast %c8_i32_239 : i32 to index
    %c0_242 = arith.constant 0 : index
    %506 = vector.load %arg7[%505, %c0_242] : memref<16x768xf32, #tpu.memory_space<vmem>>, vector<1x768xf32>
    %507 = vector.broadcast %506 : vector<1x768xf32> to vector<6x768xf32>
    %508 = arith.mulf %504, %507 : vector<6x768xf32>
    %509 = arith.addf %501, %508 : vector<6x768xf32>
    %c9_i32_243 = arith.constant 9 : i32
    %510 = arith.index_cast %c9_i32_243 : i32 to index
    %c24_244 = arith.constant 24 : index
    %c0_245 = arith.constant 0 : index
    %511 = vector.load %arg4[%510, %c24_244, %c0_245] : memref<16x30x768xf32, #tpu.memory_space<vmem>>, vector<1x6x768xf32>
    %512 = vector.shape_cast %511 : vector<1x6x768xf32> to vector<6x768xf32>
    %513 = arith.index_cast %c9_i32_243 : i32 to index
    %c0_246 = arith.constant 0 : index
    %514 = vector.load %arg7[%513, %c0_246] : memref<16x768xf32, #tpu.memory_space<vmem>>, vector<1x768xf32>
    %515 = vector.broadcast %514 : vector<1x768xf32> to vector<6x768xf32>
    %516 = arith.mulf %512, %515 : vector<6x768xf32>
    %517 = arith.addf %509, %516 : vector<6x768xf32>
    %c10_i32_247 = arith.constant 10 : i32
    %518 = arith.index_cast %c10_i32_247 : i32 to index
    %c24_248 = arith.constant 24 : index
    %c0_249 = arith.constant 0 : index
    %519 = vector.load %arg4[%518, %c24_248, %c0_249] : memref<16x30x768xf32, #tpu.memory_space<vmem>>, vector<1x6x768xf32>
    %520 = vector.shape_cast %519 : vector<1x6x768xf32> to vector<6x768xf32>
    %521 = arith.index_cast %c10_i32_247 : i32 to index
    %c0_250 = arith.constant 0 : index
    %522 = vector.load %arg7[%521, %c0_250] : memref<16x768xf32, #tpu.memory_space<vmem>>, vector<1x768xf32>
    %523 = vector.broadcast %522 : vector<1x768xf32> to vector<6x768xf32>
    %524 = arith.mulf %520, %523 : vector<6x768xf32>
    %525 = arith.addf %517, %524 : vector<6x768xf32>
    %c11_i32_251 = arith.constant 11 : i32
    %526 = arith.index_cast %c11_i32_251 : i32 to index
    %c24_252 = arith.constant 24 : index
    %c0_253 = arith.constant 0 : index
    %527 = vector.load %arg4[%526, %c24_252, %c0_253] : memref<16x30x768xf32, #tpu.memory_space<vmem>>, vector<1x6x768xf32>
    %528 = vector.shape_cast %527 : vector<1x6x768xf32> to vector<6x768xf32>
    %529 = arith.index_cast %c11_i32_251 : i32 to index
    %c0_254 = arith.constant 0 : index
    %530 = vector.load %arg7[%529, %c0_254] : memref<16x768xf32, #tpu.memory_space<vmem>>, vector<1x768xf32>
    %531 = vector.broadcast %530 : vector<1x768xf32> to vector<6x768xf32>
    %532 = arith.mulf %528, %531 : vector<6x768xf32>
    %533 = arith.addf %525, %532 : vector<6x768xf32>
    %c12_i32_255 = arith.constant 12 : i32
    %534 = arith.index_cast %c12_i32_255 : i32 to index
    %c24_256 = arith.constant 24 : index
    %c0_257 = arith.constant 0 : index
    %535 = vector.load %arg4[%534, %c24_256, %c0_257] : memref<16x30x768xf32, #tpu.memory_space<vmem>>, vector<1x6x768xf32>
    %536 = vector.shape_cast %535 : vector<1x6x768xf32> to vector<6x768xf32>
    %537 = arith.index_cast %c12_i32_255 : i32 to index
    %c0_258 = arith.constant 0 : index
    %538 = vector.load %arg7[%537, %c0_258] : memref<16x768xf32, #tpu.memory_space<vmem>>, vector<1x768xf32>
    %539 = vector.broadcast %538 : vector<1x768xf32> to vector<6x768xf32>
    %540 = arith.mulf %536, %539 : vector<6x768xf32>
    %541 = arith.addf %533, %540 : vector<6x768xf32>
    %c13_i32_259 = arith.constant 13 : i32
    %542 = arith.index_cast %c13_i32_259 : i32 to index
    %c24_260 = arith.constant 24 : index
    %c0_261 = arith.constant 0 : index
    %543 = vector.load %arg4[%542, %c24_260, %c0_261] : memref<16x30x768xf32, #tpu.memory_space<vmem>>, vector<1x6x768xf32>
    %544 = vector.shape_cast %543 : vector<1x6x768xf32> to vector<6x768xf32>
    %545 = arith.index_cast %c13_i32_259 : i32 to index
    %c0_262 = arith.constant 0 : index
    %546 = vector.load %arg7[%545, %c0_262] : memref<16x768xf32, #tpu.memory_space<vmem>>, vector<1x768xf32>
    %547 = vector.broadcast %546 : vector<1x768xf32> to vector<6x768xf32>
    %548 = arith.mulf %544, %547 : vector<6x768xf32>
    %549 = arith.addf %541, %548 : vector<6x768xf32>
    %c14_i32_263 = arith.constant 14 : i32
    %550 = arith.index_cast %c14_i32_263 : i32 to index
    %c24_264 = arith.constant 24 : index
    %c0_265 = arith.constant 0 : index
    %551 = vector.load %arg4[%550, %c24_264, %c0_265] : memref<16x30x768xf32, #tpu.memory_space<vmem>>, vector<1x6x768xf32>
    %552 = vector.shape_cast %551 : vector<1x6x768xf32> to vector<6x768xf32>
    %553 = arith.index_cast %c14_i32_263 : i32 to index
    %c0_266 = arith.constant 0 : index
    %554 = vector.load %arg7[%553, %c0_266] : memref<16x768xf32, #tpu.memory_space<vmem>>, vector<1x768xf32>
    %555 = vector.broadcast %554 : vector<1x768xf32> to vector<6x768xf32>
    %556 = arith.mulf %552, %555 : vector<6x768xf32>
    %557 = arith.addf %549, %556 : vector<6x768xf32>
    %c15_i32_267 = arith.constant 15 : i32
    %558 = arith.index_cast %c15_i32_267 : i32 to index
    %c24_268 = arith.constant 24 : index
    %c0_269 = arith.constant 0 : index
    %559 = vector.load %arg4[%558, %c24_268, %c0_269] : memref<16x30x768xf32, #tpu.memory_space<vmem>>, vector<1x6x768xf32>
    %560 = vector.shape_cast %559 : vector<1x6x768xf32> to vector<6x768xf32>
    %561 = arith.index_cast %c15_i32_267 : i32 to index
    %c0_270 = arith.constant 0 : index
    %562 = vector.load %arg7[%561, %c0_270] : memref<16x768xf32, #tpu.memory_space<vmem>>, vector<1x768xf32>
    %563 = vector.broadcast %562 : vector<1x768xf32> to vector<6x768xf32>
    %564 = arith.mulf %560, %563 : vector<6x768xf32>
    %565 = arith.addf %557, %564 : vector<6x768xf32>
    %c16_i32_271 = arith.constant 16 : i32
    %566 = arith.index_cast %10 : i32 to index
    %c24_272 = arith.constant 24 : index
    %c0_273 = arith.constant 0 : index
    %567 = vector.load %arg5[%566, %c24_272, %c0_273] : memref<1x30x768xf32, #tpu.memory_space<vmem>>, vector<1x6x768xf32>
    %568 = vector.shape_cast %567 : vector<1x6x768xf32> to vector<6x768xf32>
    %569 = vector.shape_cast %565 : vector<6x768xf32> to vector<1x6x768xf32>
    tpu.vector_store %arg5[%566, %c24_272, %c0_273], %569 {strides = array<i32>} : memref<1x30x768xf32, #tpu.memory_space<vmem>>, vector<1x6x768xf32>,
    %c1_i32_274 = arith.constant 1 : i32
    return
  }
  func.func @transform_0(%arg0: i32) -> (i32, i32) {
    %c0_i32 = arith.constant 0 : i32
    %c0_i32_0 = arith.constant 0 : i32
    return %arg0, %c0_i32 : i32, i32
  }
  func.func @transform_1(%arg0: i32) -> (i32, i32) {
    %c0_i32 = arith.constant 0 : i32
    %c0_i32_0 = arith.constant 0 : i32
    return %arg0, %c0_i32 : i32, i32
  }
  func.func @transform_2(%arg0: i32) -> (i32, i32) {
    %c0_i32 = arith.constant 0 : i32
    %c0_i32_0 = arith.constant 0 : i32
    %c0_i32_1 = arith.constant 0 : i32
    return %c0_i32, %c0_i32_0 : i32, i32
  }
  func.func @transform_3(%arg0: i32) -> (i32, i32, i32) {
    %c0_i32 = arith.constant 0 : i32
    %c0_i32_0 = arith.constant 0 : i32
    %c0_i32_1 = arith.constant 0 : i32
    %c0_i32_2 = arith.constant 0 : i32
    return %c0_i32, %c0_i32_0, %c0_i32_1 : i32, i32, i32
  }
  func.func @transform_4(%arg0: i32) -> (i32, i32, i32) {
    %c0_i32 = arith.constant 0 : i32
    %c0_i32_0 = arith.constant 0 : i32
    %c0_i32_1 = arith.constant 0 : i32
    return %arg0, %c0_i32, %c0_i32_0 : i32, i32, i32
  }
}

</mosaic_0001>

<llo_original>
// kernel: textspace_forward_batched.1
$region0: #{textspace_forward_batched.1}
  #allocation0 [shape = 'u32[]', space=smem, size = 0x4, offset = 0x4, fixed_abs, tag = 'smem constant byte address 0x4 - core index']
  #allocation1 [shape = 'u32[144,128]{1,0:T(1,128)}', space=vmem, size = 0x12000, scoped, tag = 'internal scratch']
  #allocation2 [shape = 'f32[8,768]{1,0:T(8,128)}', space=vmem, size = 0x6000, scoped, tag = 'scratch operand']
  #allocation3 [shape = 'f32[16,768]{1,0:T(8,128)}', space=vmem, size = 0xc000, scoped, tag = 'scratch operand']
  %s0 = inlined_call_operand.vmem [shape: f32[8,16], index: 0, kind: input, shape index: {}]
  %s1 = inlined_call_operand.vmem [shape: f32[8,1], index: 1, kind: input, shape index: {}]
  %s2 = inlined_call_operand.vmem [shape: f32[16,768], index: 2, kind: input, shape index: {}]
  %s3 = inlined_call_operand.vmem [shape: f32[16,30,768], index: 3, kind: input, shape index: {}]
  %s4 = inlined_call_operand.vmem [shape: f32[1,30,768], index: 4, kind: output, shape index: {}]
  %s5 = sld [smem:[#allocation0]]
  $region26: #{textspace_forward_batched.1} parent=0
    _
  %s7 = ssub.s32 1, %s5
  %s8 = scalar_select 0, %s7, %s5
  // Predicated region
  $region2: #{textspace_forward_batched.1} parent=0 // pred_check
    _
  $region3: #{textspace_forward_batched.1} parent=0 // pred_check_branch
    %10 = sbr.rel (0) target = $region5
  $region4: #{textspace_forward_batched.1} parent=0 // pred_region
    _
  $region5: #{textspace_forward_batched.1} parent=0 // pred_fallthru
    _
  // Predicated region
  $region6: #{textspace_forward_batched.1} parent=0 // pred_check
    _
  $region7: #{textspace_forward_batched.1} parent=0 // pred_check_branch
    %12 = sbr.rel (0) target = $region9
  $region8: #{textspace_forward_batched.1} parent=0 // pred_region
    _
  $region9: #{textspace_forward_batched.1} parent=0 // pred_fallthru
    _
  // Predicated region
  $region10: #{textspace_forward_batched.1} parent=0 // pred_check
    _
  $region11: #{textspace_forward_batched.1} parent=0 // pred_check_branch
    %14 = sbr.rel (0) target = $region13
  $region12: #{textspace_forward_batched.1} parent=0 // pred_region
    _
  $region13: #{textspace_forward_batched.1} parent=0 // pred_fallthru
    _
  // Predicated region
  $region14: #{textspace_forward_batched.1} parent=0 // pred_check
    _
  $region15: #{textspace_forward_batched.1} parent=0 // pred_check_branch
    %16 = sbr.rel (0) target = $region17
  $region16: #{textspace_forward_batched.1} parent=0 // pred_region
    _
  $region17: #{textspace_forward_batched.1} parent=0 // pred_fallthru
    _
  %v17 = vld [vmem:[%s0] sm:$0xff]
  %v18 = vld [vmem:[%s2] sm:$0xff]
  %v19 = vld [vmem:[%s2 + $0x8] sm:$0xff]
  %v20 = vld [vmem:[%s2 + $0x10] sm:$0xff]
  %v21 = vld [vmem:[%s2 + $0x18] sm:$0xff]
  %v22 = vld [vmem:[%s2 + $0x20] sm:$0xff]
  %v23 = vld [vmem:[%s2 + $0x28] sm:$0xff]
  %v24 = vld [vmem:[%s2 + $0x30] sm:$0xff]
  %v25 = vld [vmem:[%s2 + $0x38] sm:$0xff]
  %v26 = vld [vmem:[%s2 + $0x40] sm:$0xff]
  %v27 = vld [vmem:[%s2 + $0x48] sm:$0xff]
  %v28 = vld [vmem:[%s2 + $0x50] sm:$0xff]
  %v29 = vld [vmem:[%s2 + $0x58] sm:$0xff]
  %vm30 = vcmask 130048
  %v32 = vsel %vm30, %v17, 0
  %34 = vmatprep.subr.mxu0 %v19
  %35 = vmatpush1.msra.mxu0 %v18
  %36 = vmatprep.subr.mxu0 %v25
  %37 = vmatpush1.msra.mxu0 %v24
  %38 = vmatprep.subr.mxu0 0.0
  %39 = vmatpush1.msra.mxu0 0.0
  %40 = vmatprep.subr.mxu0 0.0
  %41 = vmatpush1.msra.mxu0 0.0
  %42 = vmatprep.subr.mxu0 0.0
  %43 = vmatpush1.msra.mxu0 0.0
  %44 = vmatprep.subr.mxu0 0.0
  %45 = vmatpush1.msra.mxu0 0.0
  %46 = vmatprep.subr.mxu0 0.0
  %47 = vmatpush1.msra.mxu0 0.0
  %48 = vmatprep.subr.mxu0 0.0
  %49 = vmatpush1.msra.mxu0 0.0
  %50 = vmatprep.subr.mxu0 0.0
  %51 = vmatpush1.msra.mxu0 0.0
  %52 = vmatprep.subr.mxu0 0.0
  %53 = vmatpush1.msra.mxu0 0.0
  %54 = vmatprep.subr.mxu0 0.0
  %55 = vmatpush1.msra.mxu0 0.0
  %56 = vmatprep.subr.mxu0 0.0
  %57 = vmatpush1.msra.mxu0 0.0
  %58 = vmatprep.subr.mxu0 0.0
  %59 = vmatpush1.msra.mxu0 0.0
  %60 = vmatprep.subr.mxu0 0.0
  %61 = vmatpush1.msra.mxu0 0.0
  %62 = vmatprep.subr.mxu0 0.0
  %63 = vmatpush1.msra.mxu0 0.0
  %64 = vmatprep.subr.mxu0 0.0
  %65 = vmatpush1.msra.mxu0 0.0
  %66 = vmatprep.subr.mxu0 0.0
  %67 = vmatpush1.msra.mxu0 0.0
  %68 = vmatprep.subr.mxu0 0.0
  %69 = vmatpush1.msra.mxu0 0.0
  %70 = vmatprep.subr.mxu0 0.0
  %71 = vmatpush1.msra.mxu0 0.0
  %72 = vmatprep.subr.mxu0 0.0
  %73 = vmatpush1.msra.mxu0 0.0
  %74 = vmatprep.subr.mxu0 0.0
  %75 = vmatpush1.msra.mxu0 0.0
  %76 = vmatprep.subr.mxu0 0.0
  %77 = vmatpush1.msra.mxu0 0.0
  %78 = vmatprep.subr.mxu0 0.0
  %79 = vmatpush1.msra.mxu0 0.0
  %80 = vmatprep.subr.mxu0 0.0
  %81 = vmatpush1.msra.mxu0 0.0
  %82 = vmatprep.subr.mxu0 0.0
  %83 = vmatpush1.msra.mxu0 0.0
  %84 = vmatprep.subr.mxu0 0.0
  %85 = vmatpush1.msra.mxu0 0.0
  %86 = vmatprep.subr.mxu0 0.0
  %87 = vmatpush1.msra.mxu0 0.0
  %88 = vmatprep.subr.mxu0 0.0
  %89 = vmatpush1.msra.mxu0 0.0
  %90 = vmatprep.subr.mxu0 0.0
  %91 = vmatpush1.msra.mxu0 0.0
  %92 = vmatprep.subr.mxu0 0.0
  %93 = vmatpush1.msra.mxu0 0.0
  %94 = vmatprep.subr.mxu0 0.0
  %95 = vmatpush1.msra.mxu0 0.0
  %96 = vmatprep.subr.mxu0 0.0
  %97 = vmatpush1.msra.mxu0 0.0
  %98 = vmatprep.mubr.f32.mxu0 0.0
  %99 = vmatmul.mubr.f32.gmra.mrb[0].mxu0 %v32
  %v100 = vpop.f32.mrb[0].mxu0
  %v101 = vadd.f32 0.0, %v100
  %v102 = vpop.f32.mrb[0].mxu0
  %v103 = vadd.f32 0.0, %v102
  %104 = vdwg.mxu0
  %105 = vmatprep.subr.mxu0 %v21
  %106 = vmatpush1.msra.mxu0 %v20
  %107 = vmatprep.subr.mxu0 %v27
  %108 = vmatpush1.msra.mxu0 %v26
  %109 = vmatprep.subr.mxu0 0.0
  %110 = vmatpush1.msra.mxu0 0.0
  %111 = vmatprep.subr.mxu0 0.0
  %112 = vmatpush1.msra.mxu0 0.0
  %113 = vmatprep.subr.mxu0 0.0
  %114 = vmatpush1.msra.mxu0 0.0
  %115 = vmatprep.subr.mxu0 0.0
  %116 = vmatpush1.msra.mxu0 0.0
  %117 = vmatprep.subr.mxu0 0.0
  %118 = vmatpush1.msra.mxu0 0.0
  %119 = vmatprep.subr.mxu0 0.0
  %120 = vmatpush1.msra.mxu0 0.0
  %121 = vmatprep.subr.mxu0 0.0
  %122 = vmatpush1.msra.mxu0 0.0
  %123 = vmatprep.subr.mxu0 0.0
  %124 = vmatpush1.msra.mxu0 0.0
  %125 = vmatprep.subr.mxu0 0.0
  %126 = vmatpush1.msra.mxu0 0.0
  %127 = vmatprep.subr.mxu0 0.0
  %128 = vmatpush1.msra.mxu0 0.0
  %129 = vmatprep.subr.mxu0 0.0
  %130 = vmatpush1.msra.mxu0 0.0
  %131 = vmatprep.subr.mxu0 0.0
  %132 = vmatpush1.msra.mxu0 0.0
  %133 = vmatprep.subr.mxu0 0.0
  %134 = vmatpush1.msra.mxu0 0.0
  %135 = vmatprep.subr.mxu0 0.0
  %136 = vmatpush1.msra.mxu0 0.0
  %137 = vmatprep.subr.mxu0 0.0
  %138 = vmatpush1.msra.mxu0 0.0
  %139 = vmatprep.subr.mxu0 0.0
  %140 = vmatpush1.msra.mxu0 0.0
  %141 = vmatprep.subr.mxu0 0.0
  %142 = vmatpush1.msra.mxu0 0.0
  %143 = vmatprep.subr.mxu0 0.0
  %144 = vmatpush1.msra.mxu0 0.0
  %145 = vmatprep.subr.mxu0 0.0
  %146 = vmatpush1.msra.mxu0 0.0
  %147 = vmatprep.subr.mxu0 0.0
  %148 = vmatpush1.msra.mxu0 0.0
  %149 = vmatprep.subr.mxu0 0.0
  %150 = vmatpush1.msra.mxu0 0.0
  %151 = vmatprep.subr.mxu0 0.0
  %152 = vmatpush1.msra.mxu0 0.0
  %153 = vmatprep.subr.mxu0 0.0
  %154 = vmatpush1.msra.mxu0 0.0
  %155 = vmatprep.subr.mxu0 0.0
  %156 = vmatpush1.msra.mxu0 0.0
  %157 = vmatprep.subr.mxu0 0.0
  %158 = vmatpush1.msra.mxu0 0.0
  %159 = vmatprep.subr.mxu0 0.0
  %160 = vmatpush1.msra.mxu0 0.0
  %161 = vmatprep.subr.mxu0 0.0
  %162 = vmatpush1.msra.mxu0 0.0
  %163 = vmatprep.subr.mxu0 0.0
  %164 = vmatpush1.msra.mxu0 0.0
  %165 = vmatprep.subr.mxu0 0.0
  %166 = vmatpush1.msra.mxu0 0.0
  %167 = vmatprep.subr.mxu0 0.0
  %168 = vmatpush1.msra.mxu0 0.0
  %169 = vmatprep.mubr.f32.mxu0 0.0
  %170 = vmatmul.mubr.f32.gmra.mrb[0].mxu0 %v32
  %v171 = vpop.f32.mrb[0].mxu0
  %v172 = vadd.f32 0.0, %v171
  %v173 = vpop.f32.mrb[0].mxu0
  %v174 = vadd.f32 0.0, %v173
  %175 = vdwg.mxu0
  %176 = vmatprep.subr.mxu0 %v23
  %177 = vmatpush1.msra.mxu0 %v22
  %178 = vmatprep.subr.mxu0 %v29
  %179 = vmatpush1.msra.mxu0 %v28
  %180 = vmatprep.subr.mxu0 0.0
  %181 = vmatpush1.msra.mxu0 0.0
  %182 = vmatprep.subr.mxu0 0.0
  %183 = vmatpush1.msra.mxu0 0.0
  %184 = vmatprep.subr.mxu0 0.0
  %185 = vmatpush1.msra.mxu0 0.0
  %186 = vmatprep.subr.mxu0 0.0
  %187 = vmatpush1.msra.mxu0 0.0
  %188 = vmatprep.subr.mxu0 0.0
  %189 = vmatpush1.msra.mxu0 0.0
  %190 = vmatprep.subr.mxu0 0.0
  %191 = vmatpush1.msra.mxu0 0.0
  %192 = vmatprep.subr.mxu0 0.0
  %193 = vmatpush1.msra.mxu0 0.0
  %194 = vmatprep.subr.mxu0 0.0
  %195 = vmatpush1.msra.mxu0 0.0
  %196 = vmatprep.subr.mxu0 0.0
  %197 = vmatpush1.msra.mxu0 0.0
  %198 = vmatprep.subr.mxu0 0.0
  %199 = vmatpush1.msra.mxu0 0.0
  %200 = vmatprep.subr.mxu0 0.0
  %201 = vmatpush1.msra.mxu0 0.0
  %202 = vmatprep.subr.mxu0 0.0
  %203 = vmatpush1.msra.mxu0 0.0
  %204 = vmatprep.subr.mxu0 0.0
  %205 = vmatpush1.msra.mxu0 0.0
  %206 = vmatprep.subr.mxu0 0.0
  %207 = vmatpush1.msra.mxu0 0.0
  %208 = vmatprep.subr.mxu0 0.0
  %209 = vmatpush1.msra.mxu0 0.0
  %210 = vmatprep.subr.mxu0 0.0
  %211 = vmatpush1.msra.mxu0 0.0
  %212 = vmatprep.subr.mxu0 0.0
  %213 = vmatpush1.msra.mxu0 0.0
  %214 = vmatprep.subr.mxu0 0.0
  %215 = vmatpush1.msra.mxu0 0.0
  %216 = vmatprep.subr.mxu0 0.0
  %217 = vmatpush1.msra.mxu0 0.0
  %218 = vmatprep.subr.mxu0 0.0
  %219 = vmatpush1.msra.mxu0 0.0
  %220 = vmatprep.subr.mxu0 0.0
  %221 = vmatpush1.msra.mxu0 0.0
  %222 = vmatprep.subr.mxu0 0.0
  %223 = vmatpush1.msra.mxu0 0.0
  %224 = vmatprep.subr.mxu0 0.0
  %225 = vmatpush1.msra.mxu0 0.0
  %226 = vmatprep.subr.mxu0 0.0
  %227 = vmatpush1.msra.mxu0 0.0
  %228 = vmatprep.subr.mxu0 0.0
  %229 = vmatpush1.msra.mxu0 0.0
  %230 = vmatprep.subr.mxu0 0.0
  %231 = vmatpush1.msra.mxu0 0.0
  %232 = vmatprep.subr.mxu0 0.0
  %233 = vmatpush1.msra.mxu0 0.0
  %234 = vmatprep.subr.mxu0 0.0
  %235 = vmatpush1.msra.mxu0 0.0
  %236 = vmatprep.subr.mxu0 0.0
  %237 = vmatpush1.msra.mxu0 0.0
  %238 = vmatprep.subr.mxu0 0.0
  %239 = vmatpush1.msra.mxu0 0.0
  %240 = vmatprep.mubr.f32.mxu0 0.0
  %241 = vmatmul.mubr.f32.gmra.mrb[0].mxu0 %v32
  %v242 = vpop.f32.mrb[0].mxu0
  %v243 = vadd.f32 0.0, %v242
  %v244 = vpop.f32.mrb[0].mxu0
  %v245 = vadd.f32 0.0, %v244
  %246 = vdwg.mxu0
  %v247 = vmax.f32 %v101, 0.0
  %v248 = vmax.f32 %v103, 0.0
  %v249 = vmax.f32 %v172, 0.0
  %v250 = vmax.f32 %v174, 0.0
  %v251 = vmax.f32 %v243, 0.0
  %v252 = vmax.f32 %v245, 0.0
  %v253 = vld [vmem:[%s1] sm:$0xff]
  %255 = vset.pattern.permute.xlu0 0
  %256 = vperm.xlu0 %255, %v253
  %v257 = vpop.permute.xlu0 %256
  %v259 = vmul.f32 %v247, %v257
  %v260 = vmul.f32 %v248, %v257
  %v261 = vmul.f32 %v249, %v257
  %v262 = vmul.f32 %v250, %v257
  %v263 = vmul.f32 %v251, %v257
  %v264 = vmul.f32 %v252, %v257
  %265 = vst [vmem:[#allocation2] sm:$0xff] %v259
  %266 = vst [vmem:[#allocation2 + $0x8] sm:$0xff] %v260
  %267 = vst [vmem:[#allocation2 + $0x10] sm:$0xff] %v261
  %268 = vst [vmem:[#allocation2 + $0x18] sm:$0xff] %v262
  %269 = vst [vmem:[#allocation2 + $0x20] sm:$0xff] %v263
  %270 = vst [vmem:[#allocation2 + $0x28] sm:$0xff] %v264
  %s271 = smul.u32 0, 6
  %s272 = smul.addr %s271, 8
  %s273 = scalar_lea.vmem [#allocation2], %s272
  %v274 = vld [vmem:[%s273] sm:$0xff]
  %v275 = vld [vmem:[%s273 + $0x8] sm:$0xff]
  %v276 = vld [vmem:[%s273 + $0x10] sm:$0xff]
  %v277 = vld [vmem:[%s273 + $0x18] sm:$0xff]
  %v278 = vld [vmem:[%s273 + $0x20] sm:$0xff]
  %v279 = vld [vmem:[%s273 + $0x28] sm:$0xff]
  %v286 = vrot.slane %v274, 7
  %v287 = vrot.slane %v275, 7
  %v288 = vrot.slane %v276, 7
  %v289 = vrot.slane %v277, 7
  %v290 = vrot.slane %v278, 7
  %v291 = vrot.slane %v279, 7
  %vm298 = vcmask 1040384
  %v299 = vsel %vm298, 0.0, %v286
  %v300 = vsel %vm298, 0.0, %v287
  %v301 = vsel %vm298, 0.0, %v288
  %v302 = vsel %vm298, 0.0, %v289
  %v303 = vsel %vm298, 0.0, %v290
  %v304 = vsel %vm298, 0.0, %v291
  %v305 = vadd.f32 %v274, %v299
  %v306 = vadd.f32 %v275, %v300
  %v307 = vadd.f32 %v276, %v301
  %v308 = vadd.f32 %v277, %v302
  %v309 = vadd.f32 %v278, %v303
  %v310 = vadd.f32 %v279, %v304
  %v317 = vrot.slane %v305, 6
  %v318 = vrot.slane %v306, 6
  %v319 = vrot.slane %v307, 6
  %v320 = vrot.slane %v308, 6
  %v321 = vrot.slane %v309, 6
  %v322 = vrot.slane %v310, 6
  %vm329 = vcmask 1041408
  %v330 = vsel %vm329, 0.0, %v317
  %v331 = vsel %vm329, 0.0, %v318
  %v332 = vsel %vm329, 0.0, %v319
  %v333 = vsel %vm329, 0.0, %v320
  %v334 = vsel %vm329, 0.0, %v321
  %v335 = vsel %vm329, 0.0, %v322
  %v336 = vadd.f32 %v305, %v330
  %v337 = vadd.f32 %v306, %v331
  %v338 = vadd.f32 %v307, %v332
  %v339 = vadd.f32 %v308, %v333
  %v340 = vadd.f32 %v309, %v334
  %v341 = vadd.f32 %v310, %v335
  %v348 = vrot.slane %v336, 4
  %v349 = vrot.slane %v337, 4
  %v350 = vrot.slane %v338, 4
  %v351 = vrot.slane %v339, 4
  %v352 = vrot.slane %v340, 4
  %v353 = vrot.slane %v341, 4
  %vm360 = vcmask 1043456
  %v361 = vsel %vm360, 0.0, %v348
  %v362 = vsel %vm360, 0.0, %v349
  %v363 = vsel %vm360, 0.0, %v350
  %v364 = vsel %vm360, 0.0, %v351
  %v365 = vsel %vm360, 0.0, %v352
  %v366 = vsel %vm360, 0.0, %v353
  %v367 = vadd.f32 %v336, %v361
  %v368 = vadd.f32 %v337, %v362
  %v369 = vadd.f32 %v338, %v363
  %v370 = vadd.f32 %v339, %v364
  %v371 = vadd.f32 %v340, %v365
  %v372 = vadd.f32 %v341, %v366
  %v373 = vsub.f32 0.0, %v367
  %v374 = vsub.f32 0.0, %v368
  %v375 = vsub.f32 0.0, %v369
  %v376 = vsub.f32 0.0, %v370
  %v377 = vsub.f32 0.0, %v371
  %v378 = vsub.f32 0.0, %v372
  %v379 = vmul.f32 %v373, 1.442695
  %v380 = vpow.pop %v379
  %v381 = vmul.f32 %v374, 1.442695
  %v382 = vpow.pop %v381
  %v383 = vmul.f32 %v375, 1.442695
  %v384 = vpow.pop %v383
  %v385 = vmul.f32 %v376, 1.442695
  %v386 = vpow.pop %v385
  %v387 = vmul.f32 %v377, 1.442695
  %v388 = vpow.pop %v387
  %v389 = vmul.f32 %v378, 1.442695
  %v390 = vpow.pop %v389
  %v397 = vrot.slane %v380, 7
  %v398 = vrot.slane %v382, 7
  %v399 = vrot.slane %v384, 7
  %v400 = vrot.slane %v386, 7
  %v401 = vrot.slane %v388, 7
  %v402 = vrot.slane %v390, 7
  %v409 = vsel %vm298, 1.0, %v397
  %v410 = vsel %vm298, 1.0, %v398
  %v411 = vsel %vm298, 1.0, %v399
  %v412 = vsel %vm298, 1.0, %v400
  %v413 = vsel %vm298, 1.0, %v401
  %v414 = vsel %vm298, 1.0, %v402
  %v415 = vsub.f32 %v409, %v380
  %v416 = vsub.f32 %v410, %v382
  %v417 = vsub.f32 %v411, %v384
  %v418 = vsub.f32 %v412, %v386
  %v419 = vsub.f32 %v413, %v388
  %v420 = vsub.f32 %v414, %v390
  %v421 = vld [vmem:[%s0] sm:$0xff]
  %422 = vxpose.xlu0.b32.start [1/16] %v421, 128
  %423 = vxpose.xlu0.b32.cont [2/16] 0.0, 128
  %424 = vxpose.xlu0.b32.cont [3/16] 0.0, 128
  %425 = vxpose.xlu0.b32.cont [4/16] 0.0, 128
  %426 = vxpose.xlu0.b32.cont [5/16] 0.0, 128
  %427 = vxpose.xlu0.b32.cont [6/16] 0.0, 128
  %428 = vxpose.xlu0.b32.cont [7/16] 0.0, 128
  %429 = vxpose.xlu0.b32.cont [8/16] 0.0, 128
  %430 = vxpose.xlu0.b32.cont [9/16] 0.0, 128
  %431 = vxpose.xlu0.b32.cont [10/16] 0.0, 128
  %432 = vxpose.xlu0.b32.cont [11/16] 0.0, 128
  %433 = vxpose.xlu0.b32.cont [12/16] 0.0, 128
  %434 = vxpose.xlu0.b32.cont [13/16] 0.0, 128
  %435 = vxpose.xlu0.b32.cont [14/16] 0.0, 128
  %436 = vxpose.xlu0.b32.cont [15/16] 0.0, 128
  %437 = vxpose.xlu0.b32.end [16/16] 0.0, 128
  %v438 = vpop.trf.xlu0
  %v439 = vpop.trf.xlu0
  %v440 = vpop.trf.xlu0
  %v441 = vpop.trf.xlu0
  %v442 = vpop.trf.xlu0
  %v443 = vpop.trf.xlu0
  %v444 = vpop.trf.xlu0
  %v445 = vpop.trf.xlu0
  %v446 = vpop.trf.xlu0
  %v447 = vpop.trf.xlu0
  %v448 = vpop.trf.xlu0
  %v449 = vpop.trf.xlu0
  %v450 = vpop.trf.xlu0
  %v451 = vpop.trf.xlu0
  %v452 = vpop.trf.xlu0
  %v453 = vpop.trf.xlu0
  %vm454 = vcmask 64512
  %v456 = vsel %vm454, %v438, 0
  %v459 = vsel %vm454, %v439, 0
  %461 = vmatprep.subr.mxu0 %v416
  %462 = vmatpush1.msra.mxu0 %v415
  %463 = vmatprep.subr.mxu0 0.0
  %464 = vmatpush1.msra.mxu0 0.0
  %465 = vmatprep.subr.mxu0 0.0
  %466 = vmatpush1.msra.mxu0 0.0
  %467 = vmatprep.subr.mxu0 0.0
  %468 = vmatpush1.msra.mxu0 0.0
  %469 = vmatprep.subr.mxu0 0.0
  %470 = vmatpush1.msra.mxu0 0.0
  %471 = vmatprep.subr.mxu0 0.0
  %472 = vmatpush1.msra.mxu0 0.0
  %473 = vmatprep.subr.mxu0 0.0
  %474 = vmatpush1.msra.mxu0 0.0
  %475 = vmatprep.subr.mxu0 0.0
  %476 = vmatpush1.msra.mxu0 0.0
  %477 = vmatprep.subr.mxu0 0.0
  %478 = vmatpush1.msra.mxu0 0.0
  %479 = vmatprep.subr.mxu0 0.0
  %480 = vmatpush1.msra.mxu0 0.0
  %481 = vmatprep.subr.mxu0 0.0
  %482 = vmatpush1.msra.mxu0 0.0
  %483 = vmatprep.subr.mxu0 0.0
  %484 = vmatpush1.msra.mxu0 0.0
  %485 = vmatprep.subr.mxu0 0.0
  %486 = vmatpush1.msra.mxu0 0.0
  %487 = vmatprep.subr.mxu0 0.0
  %488 = vmatpush1.msra.mxu0 0.0
  %489 = vmatprep.subr.mxu0 0.0
  %490 = vmatpush1.msra.mxu0 0.0
  %491 = vmatprep.subr.mxu0 0.0
  %492 = vmatpush1.msra.mxu0 0.0
  %493 = vmatprep.subr.mxu0 0.0
  %494 = vmatpush1.msra.mxu0 0.0
  %495 = vmatprep.subr.mxu0 0.0
  %496 = vmatpush1.msra.mxu0 0.0
  %497 = vmatprep.subr.mxu0 0.0
  %498 = vmatpush1.msra.mxu0 0.0
  %499 = vmatprep.subr.mxu0 0.0
  %500 = vmatpush1.msra.mxu0 0.0
  %501 = vmatprep.subr.mxu0 0.0
  %502 = vmatpush1.msra.mxu0 0.0
  %503 = vmatprep.subr.mxu0 0.0
  %504 = vmatpush1.msra.mxu0 0.0
  %505 = vmatprep.subr.mxu0 0.0
  %506 = vmatpush1.msra.mxu0 0.0
  %507 = vmatprep.subr.mxu0 0.0
  %508 = vmatpush1.msra.mxu0 0.0
  %509 = vmatprep.subr.mxu0 0.0
  %510 = vmatpush1.msra.mxu0 0.0
  %511 = vmatprep.subr.mxu0 0.0
  %512 = vmatpush1.msra.mxu0 0.0
  %513 = vmatprep.subr.mxu0 0.0
  %514 = vmatpush1.msra.mxu0 0.0
  %515 = vmatprep.subr.mxu0 0.0
  %516 = vmatpush1.msra.mxu0 0.0
  %517 = vmatprep.subr.mxu0 0.0
  %518 = vmatpush1.msra.mxu0 0.0
  %519 = vmatprep.subr.mxu0 0.0
  %520 = vmatpush1.msra.mxu0 0.0
  %521 = vmatprep.subr.mxu0 0.0
  %522 = vmatpush1.msra.mxu0 0.0
  %523 = vmatprep.subr.mxu0 0.0
  %524 = vmatpush1.msra.mxu0 0.0
  %525 = vmatprep.mubr.f32.mxu0 0.0
  %526 = vmatmul.mubr.f32.gmra.mrb[0].mxu0 %v456
  %v527 = vpop.f32.mrb[0].mxu0
  %v528 = vadd.f32 0.0, %v527
  %v529 = vpop.f32.mrb[0].mxu0
  %v530 = vadd.f32 0.0, %v529
  %531 = vmatprep.mubr.f32.mxu0 0.0
  %532 = vmatmul.mubr.f32.gmra.mrb[0].mxu0 %v459
  %v533 = vpop.f32.mrb[0].mxu0
  %v534 = vadd.f32 0.0, %v533
  %v535 = vpop.f32.mrb[0].mxu0
  %v536 = vadd.f32 0.0, %v535
  %537 = vdwg.mxu0
  %538 = vmatprep.subr.mxu0 %v418
  %539 = vmatpush1.msra.mxu0 %v417
  %540 = vmatprep.subr.mxu0 0.0
  %541 = vmatpush1.msra.mxu0 0.0
  %542 = vmatprep.subr.mxu0 0.0
  %543 = vmatpush1.msra.mxu0 0.0
  %544 = vmatprep.subr.mxu0 0.0
  %545 = vmatpush1.msra.mxu0 0.0
  %546 = vmatprep.subr.mxu0 0.0
  %547 = vmatpush1.msra.mxu0 0.0
  %548 = vmatprep.subr.mxu0 0.0
  %549 = vmatpush1.msra.mxu0 0.0
  %550 = vmatprep.subr.mxu0 0.0
  %551 = vmatpush1.msra.mxu0 0.0
  %552 = vmatprep.subr.mxu0 0.0
  %553 = vmatpush1.msra.mxu0 0.0
  %554 = vmatprep.subr.mxu0 0.0
  %555 = vmatpush1.msra.mxu0 0.0
  %556 = vmatprep.subr.mxu0 0.0
  %557 = vmatpush1.msra.mxu0 0.0
  %558 = vmatprep.subr.mxu0 0.0
  %559 = vmatpush1.msra.mxu0 0.0
  %560 = vmatprep.subr.mxu0 0.0
  %561 = vmatpush1.msra.mxu0 0.0
  %562 = vmatprep.subr.mxu0 0.0
  %563 = vmatpush1.msra.mxu0 0.0
  %564 = vmatprep.subr.mxu0 0.0
  %565 = vmatpush1.msra.mxu0 0.0
  %566 = vmatprep.subr.mxu0 0.0
  %567 = vmatpush1.msra.mxu0 0.0
  %568 = vmatprep.subr.mxu0 0.0
  %569 = vmatpush1.msra.mxu0 0.0
  %570 = vmatprep.subr.mxu0 0.0
  %571 = vmatpush1.msra.mxu0 0.0
  %572 = vmatprep.subr.mxu0 0.0
  %573 = vmatpush1.msra.mxu0 0.0
  %574 = vmatprep.subr.mxu0 0.0
  %575 = vmatpush1.msra.mxu0 0.0
  %576 = vmatprep.subr.mxu0 0.0
  %577 = vmatpush1.msra.mxu0 0.0
  %578 = vmatprep.subr.mxu0 0.0
  %579 = vmatpush1.msra.mxu0 0.0
  %580 = vmatprep.subr.mxu0 0.0
  %581 = vmatpush1.msra.mxu0 0.0
  %582 = vmatprep.subr.mxu0 0.0
  %583 = vmatpush1.msra.mxu0 0.0
  %584 = vmatprep.subr.mxu0 0.0
  %585 = vmatpush1.msra.mxu0 0.0
  %586 = vmatprep.subr.mxu0 0.0
  %587 = vmatpush1.msra.mxu0 0.0
  %588 = vmatprep.subr.mxu0 0.0
  %589 = vmatpush1.msra.mxu0 0.0
  %590 = vmatprep.subr.mxu0 0.0
  %591 = vmatpush1.msra.mxu0 0.0
  %592 = vmatprep.subr.mxu0 0.0
  %593 = vmatpush1.msra.mxu0 0.0
  %594 = vmatprep.subr.mxu0 0.0
  %595 = vmatpush1.msra.mxu0 0.0
  %596 = vmatprep.subr.mxu0 0.0
  %597 = vmatpush1.msra.mxu0 0.0
  %598 = vmatprep.subr.mxu0 0.0
  %599 = vmatpush1.msra.mxu0 0.0
  %600 = vmatprep.subr.mxu0 0.0
  %601 = vmatpush1.msra.mxu0 0.0
  %602 = vmatprep.mubr.f32.mxu0 0.0
  %603 = vmatmul.mubr.f32.gmra.mrb[0].mxu0 %v456
  %v604 = vpop.f32.mrb[0].mxu0
  %v605 = vadd.f32 0.0, %v604
  %v606 = vpop.f32.mrb[0].mxu0
  %v607 = vadd.f32 0.0, %v606
  %608 = vmatprep.mubr.f32.mxu0 0.0
  %609 = vmatmul.mubr.f32.gmra.mrb[0].mxu0 %v459
  %v610 = vpop.f32.mrb[0].mxu0
  %v611 = vadd.f32 0.0, %v610
  %v612 = vpop.f32.mrb[0].mxu0
  %v613 = vadd.f32 0.0, %v612
  %614 = vdwg.mxu0
  %615 = vmatprep.subr.mxu0 %v420
  %616 = vmatpush1.msra.mxu0 %v419
  %617 = vmatprep.subr.mxu0 0.0
  %618 = vmatpush1.msra.mxu0 0.0
  %619 = vmatprep.subr.mxu0 0.0
  %620 = vmatpush1.msra.mxu0 0.0
  %621 = vmatprep.subr.mxu0 0.0
  %622 = vmatpush1.msra.mxu0 0.0
  %623 = vmatprep.subr.mxu0 0.0
  %624 = vmatpush1.msra.mxu0 0.0
  %625 = vmatprep.subr.mxu0 0.0
  %626 = vmatpush1.msra.mxu0 0.0
  %627 = vmatprep.subr.mxu0 0.0
  %628 = vmatpush1.msra.mxu0 0.0
  %629 = vmatprep.subr.mxu0 0.0
  %630 = vmatpush1.msra.mxu0 0.0
  %631 = vmatprep.subr.mxu0 0.0
  %632 = vmatpush1.msra.mxu0 0.0
  %633 = vmatprep.subr.mxu0 0.0
  %634 = vmatpush1.msra.mxu0 0.0
  %635 = vmatprep.subr.mxu0 0.0
  %636 = vmatpush1.msra.mxu0 0.0
  %637 = vmatprep.subr.mxu0 0.0
  %638 = vmatpush1.msra.mxu0 0.0
  %639 = vmatprep.subr.mxu0 0.0
  %640 = vmatpush1.msra.mxu0 0.0
  %641 = vmatprep.subr.mxu0 0.0
  %642 = vmatpush1.msra.mxu0 0.0
  %643 = vmatprep.subr.mxu0 0.0
  %644 = vmatpush1.msra.mxu0 0.0
  %645 = vmatprep.subr.mxu0 0.0
  %646 = vmatpush1.msra.mxu0 0.0
  %647 = vmatprep.subr.mxu0 0.0
  %648 = vmatpush1.msra.mxu0 0.0
  %649 = vmatprep.subr.mxu0 0.0
  %650 = vmatpush1.msra.mxu0 0.0
  %651 = vmatprep.subr.mxu0 0.0
  %652 = vmatpush1.msra.mxu0 0.0
  %653 = vmatprep.subr.mxu0 0.0
  %654 = vmatpush1.msra.mxu0 0.0
  %655 = vmatprep.subr.mxu0 0.0
  %656 = vmatpush1.msra.mxu0 0.0
  %657 = vmatprep.subr.mxu0 0.0
  %658 = vmatpush1.msra.mxu0 0.0
  %659 = vmatprep.subr.mxu0 0.0
  %660 = vmatpush1.msra.mxu0 0.0
  %661 = vmatprep.subr.mxu0 0.0
  %662 = vmatpush1.msra.mxu0 0.0
  %663 = vmatprep.subr.mxu0 0.0
  %664 = vmatpush1.msra.mxu0 0.0
  %665 = vmatprep.subr.mxu0 0.0
  %666 = vmatpush1.msra.mxu0 0.0
  %667 = vmatprep.subr.mxu0 0.0
  %668 = vmatpush1.msra.mxu0 0.0
  %669 = vmatprep.subr.mxu0 0.0
  %670 = vmatpush1.msra.mxu0 0.0
  %671 = vmatprep.subr.mxu0 0.0
  %672 = vmatpush1.msra.mxu0 0.0
  %673 = vmatprep.subr.mxu0 0.0
  %674 = vmatpush1.msra.mxu0 0.0
  %675 = vmatprep.subr.mxu0 0.0
  %676 = vmatpush1.msra.mxu0 0.0
  %677 = vmatprep.subr.mxu0 0.0
  %678 = vmatpush1.msra.mxu0 0.0
  %679 = vmatprep.mubr.f32.mxu0 0.0
  %680 = vmatmul.mubr.f32.gmra.mrb[0].mxu0 %v456
  %v681 = vpop.f32.mrb[0].mxu0
  %v682 = vadd.f32 0.0, %v681
  %v683 = vpop.f32.mrb[0].mxu0
  %v684 = vadd.f32 0.0, %v683
  %685 = vmatprep.mubr.f32.mxu0 0.0
  %686 = vmatmul.mubr.f32.gmra.mrb[0].mxu0 %v459
  %v687 = vpop.f32.mrb[0].mxu0
  %v688 = vadd.f32 0.0, %v687
  %v689 = vpop.f32.mrb[0].mxu0
  %v690 = vadd.f32 0.0, %v689
  %691 = vdwg.mxu0
  %692 = vst [vmem:[#allocation3] sm:$0xff] %v528
  %693 = vst [vmem:[#allocation3 + $0x8] sm:$0xff] %v530
  %694 = vst [vmem:[#allocation3 + $0x10] sm:$0xff] %v605
  %695 = vst [vmem:[#allocation3 + $0x18] sm:$0xff] %v607
  %696 = vst [vmem:[#allocation3 + $0x20] sm:$0xff] %v682
  %697 = vst [vmem:[#allocation3 + $0x28] sm:$0xff] %v684
  %698 = vst [vmem:[#allocation3 + $0x30] sm:$0xff] %v534
  %699 = vst [vmem:[#allocation3 + $0x38] sm:$0xff] %v536
  %700 = vst [vmem:[#allocation3 + $0x40] sm:$0xff] %v611
  %701 = vst [vmem:[#allocation3 + $0x48] sm:$0xff] %v613
  %702 = vst [vmem:[#allocation3 + $0x50] sm:$0xff] %v688
  %703 = vst [vmem:[#allocation3 + $0x58] sm:$0xff] %v690
  %v704 = vld [vmem:[%s3] sm:$0xff]
  %v705 = vld [vmem:[%s3 + $0x8] sm:$0xff]
  %v706 = vld [vmem:[%s3 + $0x10] sm:$0xff]
  %v707 = vld [vmem:[%s3 + $0x18] sm:$0xff]
  %v708 = vld [vmem:[%s3 + $0x20] sm:$0xff]
  %v709 = vld [vmem:[%s3 + $0x28] sm:$0xff]
  %v710 = vld [vmem:[#allocation3] ss:$8 sm:$0xf]
  %v711 = vld [vmem:[#allocation3] ss:$8 sm:$0x30]
  %v712 = vor.u32 %v710, %v711
  %v714 = vlaneseq
  %v715 = vshrl.u32 %v714, 7
  %v716 = vsub.s32 0, %v715
  %v717 = vrot.slane %v712, %v716
  %v718 = vlaneseq
  %v719 = vshrl.u32 %v718, 7
  %v720 = vsub.s32 1, %v719
  %v721 = vrot.slane %v712, %v720
  %v722 = vlaneseq
  %v723 = vshrl.u32 %v722, 7
  %v724 = vsub.s32 2, %v723
  %v725 = vrot.slane %v712, %v724
  %v726 = vlaneseq
  %v727 = vshrl.u32 %v726, 7
  %v728 = vsub.s32 3, %v727
  %v729 = vrot.slane %v712, %v728
  %v730 = vlaneseq
  %v731 = vshrl.u32 %v730, 7
  %v732 = vsub.s32 4, %v731
  %v733 = vrot.slane %v712, %v732
  %v734 = vlaneseq
  %v735 = vshrl.u32 %v734, 7
  %v736 = vsub.s32 5, %v735
  %v737 = vrot.slane %v712, %v736
  %v744 = vmul.f32 %v704, %v717
  %v745 = vmul.f32 %v705, %v721
  %v746 = vmul.f32 %v706, %v725
  %v747 = vmul.f32 %v707, %v729
  %v748 = vmul.f32 %v708, %v733
  %v749 = vmul.f32 %v709, %v737
  %v750 = vadd.f32 %v744, 0.0
  %v751 = vadd.f32 %v745, 0.0
  %v752 = vadd.f32 %v746, 0.0
  %v753 = vadd.f32 %v747, 0.0
  %v754 = vadd.f32 %v748, 0.0
  %v755 = vadd.f32 %v749, 0.0
  %s756 = scalar_lea.vmem %s3, 192
  %v757 = vld [vmem:[%s756] sm:$0xff]
  %v758 = vld [vmem:[%s756 + $0x8] sm:$0xff]
  %v759 = vld [vmem:[%s756 + $0x10] sm:$0xff]
  %v760 = vld [vmem:[%s756 + $0x18] sm:$0xff]
  %v761 = vld [vmem:[%s756 + $0x20] sm:$0xff]
  %v762 = vld [vmem:[%s756 + $0x28] sm:$0xff]
  %s763 = scalar_lea.vmem [#allocation3], 1
  %v764 = vld [vmem:[%s763] ss:$8 sm:$0xf]
  %v765 = vld [vmem:[%s763] ss:$8 sm:$0x30]
  %v766 = vor.u32 %v764, %v765
  %v768 = vlaneseq
  %v769 = vshrl.u32 %v768, 7
  %v770 = vsub.s32 0, %v769
  %v771 = vrot.slane %v766, %v770
  %v772 = vlaneseq
  %v773 = vshrl.u32 %v772, 7
  %v774 = vsub.s32 1, %v773
  %v775 = vrot.slane %v766, %v774
  %v776 = vlaneseq
  %v777 = vshrl.u32 %v776, 7
  %v778 = vsub.s32 2, %v777
  %v779 = vrot.slane %v766, %v778
  %v780 = vlaneseq
  %v781 = vshrl.u32 %v780, 7
  %v782 = vsub.s32 3, %v781
  %v783 = vrot.slane %v766, %v782
  %v784 = vlaneseq
  %v785 = vshrl.u32 %v784, 7
  %v786 = vsub.s32 4, %v785
  %v787 = vrot.slane %v766, %v786
  %v788 = vlaneseq
  %v789 = vshrl.u32 %v788, 7
  %v790 = vsub.s32 5, %v789
  %v791 = vrot.slane %v766, %v790
  %v798 = vmul.f32 %v757, %v771
  %v799 = vmul.f32 %v758, %v775
  %v800 = vmul.f32 %v759, %v779
  %v801 = vmul.f32 %v760, %v783
  %v802 = vmul.f32 %v761, %v787
  %v803 = vmul.f32 %v762, %v791
  %v804 = vadd.f32 %v750, %v798
  %v805 = vadd.f32 %v751, %v799
  %v806 = vadd.f32 %v752, %v800
  %v807 = vadd.f32 %v753, %v801
  %v808 = vadd.f32 %v754, %v802
  %v809 = vadd.f32 %v755, %v803
  %s810 = scalar_lea.vmem %s3, 384
  %v811 = vld [vmem:[%s810] sm:$0xff]
  %v812 = vld [vmem:[%s810 + $0x8] sm:$0xff]
  %v813 = vld [vmem:[%s810 + $0x10] sm:$0xff]
  %v814 = vld [vmem:[%s810 + $0x18] sm:$0xff]
  %v815 = vld [vmem:[%s810 + $0x20] sm:$0xff]
  %v816 = vld [vmem:[%s810 + $0x28] sm:$0xff]
  %s817 = scalar_lea.vmem [#allocation3], 2
  %v818 = vld [vmem:[%s817] ss:$8 sm:$0xf]
  %v819 = vld [vmem:[%s817] ss:$8 sm:$0x30]
  %v820 = vor.u32 %v818, %v819
  %v822 = vlaneseq
  %v823 = vshrl.u32 %v822, 7
  %v824 = vsub.s32 0, %v823
  %v825 = vrot.slane %v820, %v824
  %v826 = vlaneseq
  %v827 = vshrl.u32 %v826, 7
  %v828 = vsub.s32 1, %v827
  %v829 = vrot.slane %v820, %v828
  %v830 = vlaneseq
  %v831 = vshrl.u32 %v830, 7
  %v832 = vsub.s32 2, %v831
  %v833 = vrot.slane %v820, %v832
  %v834 = vlaneseq
  %v835 = vshrl.u32 %v834, 7
  %v836 = vsub.s32 3, %v835
  %v837 = vrot.slane %v820, %v836
  %v838 = vlaneseq
  %v839 = vshrl.u32 %v838, 7
  %v840 = vsub.s32 4, %v839
  %v841 = vrot.slane %v820, %v840
  %v842 = vlaneseq
  %v843 = vshrl.u32 %v842, 7
  %v844 = vsub.s32 5, %v843
  %v845 = vrot.slane %v820, %v844
  %v852 = vmul.f32 %v811, %v825
  %v853 = vmul.f32 %v812, %v829
  %v854 = vmul.f32 %v813, %v833
  %v855 = vmul.f32 %v814, %v837
  %v856 = vmul.f32 %v815, %v841
  %v857 = vmul.f32 %v816, %v845
  %v858 = vadd.f32 %v804, %v852
  %v859 = vadd.f32 %v805, %v853
  %v860 = vadd.f32 %v806, %v854
  %v861 = vadd.f32 %v807, %v855
  %v862 = vadd.f32 %v808, %v856
  %v863 = vadd.f32 %v809, %v857
  %s864 = scalar_lea.vmem %s3, 576
  %v865 = vld [vmem:[%s864] sm:$0xff]
  %v866 = vld [vmem:[%s864 + $0x8] sm:$0xff]
  %v867 = vld [vmem:[%s864 + $0x10] sm:$0xff]
  %v868 = vld [vmem:[%s864 + $0x18] sm:$0xff]
  %v869 = vld [vmem:[%s864 + $0x20] sm:$0xff]
  %v870 = vld [vmem:[%s864 + $0x28] sm:$0xff]
  %s871 = scalar_lea.vmem [#allocation3], 3
  %v872 = vld [vmem:[%s871] ss:$8 sm:$0xf]
  %v873 = vld [vmem:[%s871] ss:$8 sm:$0x30]
  %v874 = vor.u32 %v872, %v873
  %v876 = vlaneseq
  %v877 = vshrl.u32 %v876, 7
  %v878 = vsub.s32 0, %v877
  %v879 = vrot.slane %v874, %v878
  %v880 = vlaneseq
  %v881 = vshrl.u32 %v880, 7
  %v882 = vsub.s32 1, %v881
  %v883 = vrot.slane %v874, %v882
  %v884 = vlaneseq
  %v885 = vshrl.u32 %v884, 7
  %v886 = vsub.s32 2, %v885
  %v887 = vrot.slane %v874, %v886
  %v888 = vlaneseq
  %v889 = vshrl.u32 %v888, 7
  %v890 = vsub.s32 3, %v889
  %v891 = vrot.slane %v874, %v890
  %v892 = vlaneseq
  %v893 = vshrl.u32 %v892, 7
  %v894 = vsub.s32 4, %v893
  %v895 = vrot.slane %v874, %v894
  %v896 = vlaneseq
  %v897 = vshrl.u32 %v896, 7
  %v898 = vsub.s32 5, %v897
  %v899 = vrot.slane %v874, %v898
  %v906 = vmul.f32 %v865, %v879
  %v907 = vmul.f32 %v866, %v883
  %v908 = vmul.f32 %v867, %v887
  %v909 = vmul.f32 %v868, %v891
  %v910 = vmul.f32 %v869, %v895
  %v911 = vmul.f32 %v870, %v899
  %v912 = vadd.f32 %v858, %v906
  %v913 = vadd.f32 %v859, %v907
  %v914 = vadd.f32 %v860, %v908
  %v915 = vadd.f32 %v861, %v909
  %v916 = vadd.f32 %v862, %v910
  %v917 = vadd.f32 %v863, %v911
  %s918 = scalar_lea.vmem %s3, 768
  %v919 = vld [vmem:[%s918] sm:$0xff]
  %v920 = vld [vmem:[%s918 + $0x8] sm:$0xff]
  %v921 = vld [vmem:[%s918 + $0x10] sm:$0xff]
  %v922 = vld [vmem:[%s918 + $0x18] sm:$0xff]
  %v923 = vld [vmem:[%s918 + $0x20] sm:$0xff]
  %v924 = vld [vmem:[%s918 + $0x28] sm:$0xff]
  %s925 = scalar_lea.vmem [#allocation3], 4
  %v926 = vld [vmem:[%s925] ss:$8 sm:$0xf]
  %v927 = vld [vmem:[%s925] ss:$8 sm:$0x30]
  %v928 = vor.u32 %v926, %v927
  %v930 = vlaneseq
  %v931 = vshrl.u32 %v930, 7
  %v932 = vsub.s32 0, %v931
  %v933 = vrot.slane %v928, %v932
  %v934 = vlaneseq
  %v935 = vshrl.u32 %v934, 7
  %v936 = vsub.s32 1, %v935
  %v937 = vrot.slane %v928, %v936
  %v938 = vlaneseq
  %v939 = vshrl.u32 %v938, 7
  %v940 = vsub.s32 2, %v939
  %v941 = vrot.slane %v928, %v940
  %v942 = vlaneseq
  %v943 = vshrl.u32 %v942, 7
  %v944 = vsub.s32 3, %v943
  %v945 = vrot.slane %v928, %v944
  %v946 = vlaneseq
  %v947 = vshrl.u32 %v946, 7
  %v948 = vsub.s32 4, %v947
  %v949 = vrot.slane %v928, %v948
  %v950 = vlaneseq
  %v951 = vshrl.u32 %v950, 7
  %v952 = vsub.s32 5, %v951
  %v953 = vrot.slane %v928, %v952
  %v960 = vmul.f32 %v919, %v933
  %v961 = vmul.f32 %v920, %v937
  %v962 = vmul.f32 %v921, %v941
  %v963 = vmul.f32 %v922, %v945
  %v964 = vmul.f32 %v923, %v949
  %v965 = vmul.f32 %v924, %v953
  %v966 = vadd.f32 %v912, %v960
  %v967 = vadd.f32 %v913, %v961
  %v968 = vadd.f32 %v914, %v962
  %v969 = vadd.f32 %v915, %v963
  %v970 = vadd.f32 %v916, %v964
  %v971 = vadd.f32 %v917, %v965
  %s972 = scalar_lea.vmem %s3, 960
  %v973 = vld [vmem:[%s972] sm:$0xff]
  %v974 = vld [vmem:[%s972 + $0x8] sm:$0xff]
  %v975 = vld [vmem:[%s972 + $0x10] sm:$0xff]
  %v976 = vld [vmem:[%s972 + $0x18] sm:$0xff]
  %v977 = vld [vmem:[%s972 + $0x20] sm:$0xff]
  %v978 = vld [vmem:[%s972 + $0x28] sm:$0xff]
  %s979 = scalar_lea.vmem [#allocation3], 5
  %v980 = vld [vmem:[%s979] ss:$8 sm:$0xf]
  %v981 = vld [vmem:[%s979] ss:$8 sm:$0x30]
  %v982 = vor.u32 %v980, %v981
  %v984 = vlaneseq
  %v985 = vshrl.u32 %v984, 7
  %v986 = vsub.s32 0, %v985
  %v987 = vrot.slane %v982, %v986
  %v988 = vlaneseq
  %v989 = vshrl.u32 %v988, 7
  %v990 = vsub.s32 1, %v989
  %v991 = vrot.slane %v982, %v990
  %v992 = vlaneseq
  %v993 = vshrl.u32 %v992, 7
  %v994 = vsub.s32 2, %v993
  %v995 = vrot.slane %v982, %v994
  %v996 = vlaneseq
  %v997 = vshrl.u32 %v996, 7
  %v998 = vsub.s32 3, %v997
  %v999 = vrot.slane %v982, %v998
  %v1000 = vlaneseq
  %v1001 = vshrl.u32 %v1000, 7
  %v1002 = vsub.s32 4, %v1001
  %v1003 = vrot.slane %v982, %v1002
  %v1004 = vlaneseq
  %v1005 = vshrl.u32 %v1004, 7
  %v1006 = vsub.s32 5, %v1005
  %v1007 = vrot.slane %v982, %v1006
  %v1014 = vmul.f32 %v973, %v987
  %v1015 = vmul.f32 %v974, %v991
  %v1016 = vmul.f32 %v975, %v995
  %v1017 = vmul.f32 %v976, %v999
  %v1018 = vmul.f32 %v977, %v1003
  %v1019 = vmul.f32 %v978, %v1007
  %v1020 = vadd.f32 %v966, %v1014
  %v1021 = vadd.f32 %v967, %v1015
  %v1022 = vadd.f32 %v968, %v1016
  %v1023 = vadd.f32 %v969, %v1017
  %v1024 = vadd.f32 %v970, %v1018
  %v1025 = vadd.f32 %v971, %v1019
  %s1026 = scalar_lea.vmem %s3, 1152
  %v1027 = vld [vmem:[%s1026] sm:$0xff]
  %v1028 = vld [vmem:[%s1026 + $0x8] sm:$0xff]
  %v1029 = vld [vmem:[%s1026 + $0x10] sm:$0xff]
  %v1030 = vld [vmem:[%s1026 + $0x18] sm:$0xff]
  %v1031 = vld [vmem:[%s1026 + $0x20] sm:$0xff]
  %v1032 = vld [vmem:[%s1026 + $0x28] sm:$0xff]
  %s1033 = scalar_lea.vmem [#allocation3], 6
  %v1034 = vld [vmem:[%s1033] ss:$8 sm:$0xf]
  %v1035 = vld [vmem:[%s1033] ss:$8 sm:$0x30]
  %v1036 = vor.u32 %v1034, %v1035
  %v1038 = vlaneseq
  %v1039 = vshrl.u32 %v1038, 7
  %v1040 = vsub.s32 0, %v1039
  %v1041 = vrot.slane %v1036, %v1040
  %v1042 = vlaneseq
  %v1043 = vshrl.u32 %v1042, 7
  %v1044 = vsub.s32 1, %v1043
  %v1045 = vrot.slane %v1036, %v1044
  %v1046 = vlaneseq
  %v1047 = vshrl.u32 %v1046, 7
  %v1048 = vsub.s32 2, %v1047
  %v1049 = vrot.slane %v1036, %v1048
  %v1050 = vlaneseq
  %v1051 = vshrl.u32 %v1050, 7
  %v1052 = vsub.s32 3, %v1051
  %v1053 = vrot.slane %v1036, %v1052
  %v1054 = vlaneseq
  %v1055 = vshrl.u32 %v1054, 7
  %v1056 = vsub.s32 4, %v1055
  %v1057 = vrot.slane %v1036, %v1056
  %v1058 = vlaneseq
  %v1059 = vshrl.u32 %v1058, 7
  %v1060 = vsub.s32 5, %v1059
  %v1061 = vrot.slane %v1036, %v1060
  %v1068 = vmul.f32 %v1027, %v1041
  %v1069 = vmul.f32 %v1028, %v1045
  %v1070 = vmul.f32 %v1029, %v1049
  %v1071 = vmul.f32 %v1030, %v1053
  %v1072 = vmul.f32 %v1031, %v1057
  %v1073 = vmul.f32 %v1032, %v1061
  %v1074 = vadd.f32 %v1020, %v1068
  %v1075 = vadd.f32 %v1021, %v1069
  %v1076 = vadd.f32 %v1022, %v1070
  %v1077 = vadd.f32 %v1023, %v1071
  %v1078 = vadd.f32 %v1024, %v1072
  %v1079 = vadd.f32 %v1025, %v1073
  %s1080 = scalar_lea.vmem %s3, 1344
  %v1081 = vld [vmem:[%s1080] sm:$0xff]
  %v1082 = vld [vmem:[%s1080 + $0x8] sm:$0xff]
  %v1083 = vld [vmem:[%s1080 + $0x10] sm:$0xff]
  %v1084 = vld [vmem:[%s1080 + $0x18] sm:$0xff]
  %v1085 = vld [vmem:[%s1080 + $0x20] sm:$0xff]
  %v1086 = vld [vmem:[%s1080 + $0x28] sm:$0xff]
  %s1087 = scalar_lea.vmem [#allocation3], 7
  %v1088 = vld [vmem:[%s1087] ss:$8 sm:$0xf]
  %v1089 = vld [vmem:[%s1087] ss:$8 sm:$0x30]
  %v1090 = vor.u32 %v1088, %v1089
  %v1092 = vlaneseq
  %v1093 = vshrl.u32 %v1092, 7
  %v1094 = vsub.s32 0, %v1093
  %v1095 = vrot.slane %v1090, %v1094
  %v1096 = vlaneseq
  %v1097 = vshrl.u32 %v1096, 7
  %v1098 = vsub.s32 1, %v1097
  %v1099 = vrot.slane %v1090, %v1098
  %v1100 = vlaneseq
  %v1101 = vshrl.u32 %v1100, 7
  %v1102 = vsub.s32 2, %v1101
  %v1103 = vrot.slane %v1090, %v1102
  %v1104 = vlaneseq
  %v1105 = vshrl.u32 %v1104, 7
  %v1106 = vsub.s32 3, %v1105
  %v1107 = vrot.slane %v1090, %v1106
  %v1108 = vlaneseq
  %v1109 = vshrl.u32 %v1108, 7
  %v1110 = vsub.s32 4, %v1109
  %v1111 = vrot.slane %v1090, %v1110
  %v1112 = vlaneseq
  %v1113 = vshrl.u32 %v1112, 7
  %v1114 = vsub.s32 5, %v1113
  %v1115 = vrot.slane %v1090, %v1114
  %v1122 = vmul.f32 %v1081, %v1095
  %v1123 = vmul.f32 %v1082, %v1099
  %v1124 = vmul.f32 %v1083, %v1103
  %v1125 = vmul.f32 %v1084, %v1107
  %v1126 = vmul.f32 %v1085, %v1111
  %v1127 = vmul.f32 %v1086, %v1115
  %v1128 = vadd.f32 %v1074, %v1122
  %v1129 = vadd.f32 %v1075, %v1123
  %v1130 = vadd.f32 %v1076, %v1124
  %v1131 = vadd.f32 %v1077, %v1125
  %v1132 = vadd.f32 %v1078, %v1126
  %v1133 = vadd.f32 %v1079, %v1127
  %s1134 = scalar_lea.vmem %s3, 1536
  %v1135 = vld [vmem:[%s1134] sm:$0xff]
  %v1136 = vld [vmem:[%s1134 + $0x8] sm:$0xff]
  %v1137 = vld [vmem:[%s1134 + $0x10] sm:$0xff]
  %v1138 = vld [vmem:[%s1134 + $0x18] sm:$0xff]
  %v1139 = vld [vmem:[%s1134 + $0x20] sm:$0xff]
  %v1140 = vld [vmem:[%s1134 + $0x28] sm:$0xff]
  %s1141 = scalar_lea.vmem [#allocation3], 48
  %v1142 = vld [vmem:[%s1141] ss:$8 sm:$0xf]
  %v1143 = vld [vmem:[%s1141] ss:$8 sm:$0x30]
  %v1144 = vor.u32 %v1142, %v1143
  %v1146 = vlaneseq
  %v1147 = vshrl.u32 %v1146, 7
  %v1148 = vsub.s32 0, %v1147
  %v1149 = vrot.slane %v1144, %v1148
  %v1150 = vlaneseq
  %v1151 = vshrl.u32 %v1150, 7
  %v1152 = vsub.s32 1, %v1151
  %v1153 = vrot.slane %v1144, %v1152
  %v1154 = vlaneseq
  %v1155 = vshrl.u32 %v1154, 7
  %v1156 = vsub.s32 2, %v1155
  %v1157 = vrot.slane %v1144, %v1156
  %v1158 = vlaneseq
  %v1159 = vshrl.u32 %v1158, 7
  %v1160 = vsub.s32 3, %v1159
  %v1161 = vrot.slane %v1144, %v1160
  %v1162 = vlaneseq
  %v1163 = vshrl.u32 %v1162, 7
  %v1164 = vsub.s32 4, %v1163
  %v1165 = vrot.slane %v1144, %v1164
  %v1166 = vlaneseq
  %v1167 = vshrl.u32 %v1166, 7
  %v1168 = vsub.s32 5, %v1167
  %v1169 = vrot.slane %v1144, %v1168
  %v1176 = vmul.f32 %v1135, %v1149
  %v1177 = vmul.f32 %v1136, %v1153
  %v1178 = vmul.f32 %v1137, %v1157
  %v1179 = vmul.f32 %v1138, %v1161
  %v1180 = vmul.f32 %v1139, %v1165
  %v1181 = vmul.f32 %v1140, %v1169
  %v1182 = vadd.f32 %v1128, %v1176
  %v1183 = vadd.f32 %v1129, %v1177
  %v1184 = vadd.f32 %v1130, %v1178
  %v1185 = vadd.f32 %v1131, %v1179
  %v1186 = vadd.f32 %v1132, %v1180
  %v1187 = vadd.f32 %v1133, %v1181
  %s1188 = scalar_lea.vmem %s3, 1728
  %v1189 = vld [vmem:[%s1188] sm:$0xff]
  %v1190 = vld [vmem:[%s1188 + $0x8] sm:$0xff]
  %v1191 = vld [vmem:[%s1188 + $0x10] sm:$0xff]
  %v1192 = vld [vmem:[%s1188 + $0x18] sm:$0xff]
  %v1193 = vld [vmem:[%s1188 + $0x20] sm:$0xff]
  %v1194 = vld [vmem:[%s1188 + $0x28] sm:$0xff]
  %s1195 = scalar_lea.vmem [#allocation3], 49
  %v1196 = vld [vmem:[%s1195] ss:$8 sm:$0xf]
  %v1197 = vld [vmem:[%s1195] ss:$8 sm:$0x30]
  %v1198 = vor.u32 %v1196, %v1197
  %v1200 = vlaneseq
  %v1201 = vshrl.u32 %v1200, 7
  %v1202 = vsub.s32 0, %v1201
  %v1203 = vrot.slane %v1198, %v1202
  %v1204 = vlaneseq
  %v1205 = vshrl.u32 %v1204, 7
  %v1206 = vsub.s32 1, %v1205
  %v1207 = vrot.slane %v1198, %v1206
  %v1208 = vlaneseq
  %v1209 = vshrl.u32 %v1208, 7
  %v1210 = vsub.s32 2, %v1209
  %v1211 = vrot.slane %v1198, %v1210
  %v1212 = vlaneseq
  %v1213 = vshrl.u32 %v1212, 7
  %v1214 = vsub.s32 3, %v1213
  %v1215 = vrot.slane %v1198, %v1214
  %v1216 = vlaneseq
  %v1217 = vshrl.u32 %v1216, 7
  %v1218 = vsub.s32 4, %v1217
  %v1219 = vrot.slane %v1198, %v1218
  %v1220 = vlaneseq
  %v1221 = vshrl.u32 %v1220, 7
  %v1222 = vsub.s32 5, %v1221
  %v1223 = vrot.slane %v1198, %v1222
  %v1230 = vmul.f32 %v1189, %v1203
  %v1231 = vmul.f32 %v1190, %v1207
  %v1232 = vmul.f32 %v1191, %v1211
  %v1233 = vmul.f32 %v1192, %v1215
  %v1234 = vmul.f32 %v1193, %v1219
  %v1235 = vmul.f32 %v1194, %v1223
  %v1236 = vadd.f32 %v1182, %v1230
  %v1237 = vadd.f32 %v1183, %v1231
  %v1238 = vadd.f32 %v1184, %v1232
  %v1239 = vadd.f32 %v1185, %v1233
  %v1240 = vadd.f32 %v1186, %v1234
  %v1241 = vadd.f32 %v1187, %v1235
  %s1242 = scalar_lea.vmem %s3, 1920
  %v1243 = vld [vmem:[%s1242] sm:$0xff]
  %v1244 = vld [vmem:[%s1242 + $0x8] sm:$0xff]
  %v1245 = vld [vmem:[%s1242 + $0x10] sm:$0xff]
  %v1246 = vld [vmem:[%s1242 + $0x18] sm:$0xff]
  %v1247 = vld [vmem:[%s1242 + $0x20] sm:$0xff]
  %v1248 = vld [vmem:[%s1242 + $0x28] sm:$0xff]
  %s1249 = scalar_lea.vmem [#allocation3], 50
  %v1250 = vld [vmem:[%s1249] ss:$8 sm:$0xf]
  %v1251 = vld [vmem:[%s1249] ss:$8 sm:$0x30]
  %v1252 = vor.u32 %v1250, %v1251
  %v1254 = vlaneseq
  %v1255 = vshrl.u32 %v1254, 7
  %v1256 = vsub.s32 0, %v1255
  %v1257 = vrot.slane %v1252, %v1256
  %v1258 = vlaneseq
  %v1259 = vshrl.u32 %v1258, 7
  %v1260 = vsub.s32 1, %v1259
  %v1261 = vrot.slane %v1252, %v1260
  %v1262 = vlaneseq
  %v1263 = vshrl.u32 %v1262, 7
  %v1264 = vsub.s32 2, %v1263
  %v1265 = vrot.slane %v1252, %v1264
  %v1266 = vlaneseq
  %v1267 = vshrl.u32 %v1266, 7
  %v1268 = vsub.s32 3, %v1267
  %v1269 = vrot.slane %v1252, %v1268
  %v1270 = vlaneseq
  %v1271 = vshrl.u32 %v1270, 7
  %v1272 = vsub.s32 4, %v1271
  %v1273 = vrot.slane %v1252, %v1272
  %v1274 = vlaneseq
  %v1275 = vshrl.u32 %v1274, 7
  %v1276 = vsub.s32 5, %v1275
  %v1277 = vrot.slane %v1252, %v1276
  %v1284 = vmul.f32 %v1243, %v1257
  %v1285 = vmul.f32 %v1244, %v1261
  %v1286 = vmul.f32 %v1245, %v1265
  %v1287 = vmul.f32 %v1246, %v1269
  %v1288 = vmul.f32 %v1247, %v1273
  %v1289 = vmul.f32 %v1248, %v1277
  %v1290 = vadd.f32 %v1236, %v1284
  %v1291 = vadd.f32 %v1237, %v1285
  %v1292 = vadd.f32 %v1238, %v1286
  %v1293 = vadd.f32 %v1239, %v1287
  %v1294 = vadd.f32 %v1240, %v1288
  %v1295 = vadd.f32 %v1241, %v1289
  %s1296 = scalar_lea.vmem %s3, 2112
  %v1297 = vld [vmem:[%s1296] sm:$0xff]
  %v1298 = vld [vmem:[%s1296 + $0x8] sm:$0xff]
  %v1299 = vld [vmem:[%s1296 + $0x10] sm:$0xff]
  %v1300 = vld [vmem:[%s1296 + $0x18] sm:$0xff]
  %v1301 = vld [vmem:[%s1296 + $0x20] sm:$0xff]
  %v1302 = vld [vmem:[%s1296 + $0x28] sm:$0xff]
  %s1303 = scalar_lea.vmem [#allocation3], 51
  %v1304 = vld [vmem:[%s1303] ss:$8 sm:$0xf]
  %v1305 = vld [vmem:[%s1303] ss:$8 sm:$0x30]
  %v1306 = vor.u32 %v1304, %v1305
  %v1308 = vlaneseq
  %v1309 = vshrl.u32 %v1308, 7
  %v1310 = vsub.s32 0, %v1309
  %v1311 = vrot.slane %v1306, %v1310
  %v1312 = vlaneseq
  %v1313 = vshrl.u32 %v1312, 7
  %v1314 = vsub.s32 1, %v1313
  %v1315 = vrot.slane %v1306, %v1314
  %v1316 = vlaneseq
  %v1317 = vshrl.u32 %v1316, 7
  %v1318 = vsub.s32 2, %v1317
  %v1319 = vrot.slane %v1306, %v1318
  %v1320 = vlaneseq
  %v1321 = vshrl.u32 %v1320, 7
  %v1322 = vsub.s32 3, %v1321
  %v1323 = vrot.slane %v1306, %v1322
  %v1324 = vlaneseq
  %v1325 = vshrl.u32 %v1324, 7
  %v1326 = vsub.s32 4, %v1325
  %v1327 = vrot.slane %v1306, %v1326
  %v1328 = vlaneseq
  %v1329 = vshrl.u32 %v1328, 7
  %v1330 = vsub.s32 5, %v1329
  %v1331 = vrot.slane %v1306, %v1330
  %v1338 = vmul.f32 %v1297, %v1311
  %v1339 = vmul.f32 %v1298, %v1315
  %v1340 = vmul.f32 %v1299, %v1319
  %v1341 = vmul.f32 %v1300, %v1323
  %v1342 = vmul.f32 %v1301, %v1327
  %v1343 = vmul.f32 %v1302, %v1331
  %v1344 = vadd.f32 %v1290, %v1338
  %v1345 = vadd.f32 %v1291, %v1339
  %v1346 = vadd.f32 %v1292, %v1340
  %v1347 = vadd.f32 %v1293, %v1341
  %v1348 = vadd.f32 %v1294, %v1342
  %v1349 = vadd.f32 %v1295, %v1343
  %s1350 = scalar_lea.vmem %s3, 2304
  %v1351 = vld [vmem:[%s1350] sm:$0xff]
  %v1352 = vld [vmem:[%s1350 + $0x8] sm:$0xff]
  %v1353 = vld [vmem:[%s1350 + $0x10] sm:$0xff]
  %v1354 = vld [vmem:[%s1350 + $0x18] sm:$0xff]
  %v1355 = vld [vmem:[%s1350 + $0x20] sm:$0xff]
  %v1356 = vld [vmem:[%s1350 + $0x28] sm:$0xff]
  %s1357 = scalar_lea.vmem [#allocation3], 52
  %v1358 = vld [vmem:[%s1357] ss:$8 sm:$0xf]
  %v1359 = vld [vmem:[%s1357] ss:$8 sm:$0x30]
  %v1360 = vor.u32 %v1358, %v1359
  %v1362 = vlaneseq
  %v1363 = vshrl.u32 %v1362, 7
  %v1364 = vsub.s32 0, %v1363
  %v1365 = vrot.slane %v1360, %v1364
  %v1366 = vlaneseq
  %v1367 = vshrl.u32 %v1366, 7
  %v1368 = vsub.s32 1, %v1367
  %v1369 = vrot.slane %v1360, %v1368
  %v1370 = vlaneseq
  %v1371 = vshrl.u32 %v1370, 7
  %v1372 = vsub.s32 2, %v1371
  %v1373 = vrot.slane %v1360, %v1372
  %v1374 = vlaneseq
  %v1375 = vshrl.u32 %v1374, 7
  %v1376 = vsub.s32 3, %v1375
  %v1377 = vrot.slane %v1360, %v1376
  %v1378 = vlaneseq
  %v1379 = vshrl.u32 %v1378, 7
  %v1380 = vsub.s32 4, %v1379
  %v1381 = vrot.slane %v1360, %v1380
  %v1382 = vlaneseq
  %v1383 = vshrl.u32 %v1382, 7
  %v1384 = vsub.s32 5, %v1383
  %v1385 = vrot.slane %v1360, %v1384
  %v1392 = vmul.f32 %v1351, %v1365
  %v1393 = vmul.f32 %v1352, %v1369
  %v1394 = vmul.f32 %v1353, %v1373
  %v1395 = vmul.f32 %v1354, %v1377
  %v1396 = vmul.f32 %v1355, %v1381
  %v1397 = vmul.f32 %v1356, %v1385
  %v1398 = vadd.f32 %v1344, %v1392
  %v1399 = vadd.f32 %v1345, %v1393
  %v1400 = vadd.f32 %v1346, %v1394
  %v1401 = vadd.f32 %v1347, %v1395
  %v1402 = vadd.f32 %v1348, %v1396
  %v1403 = vadd.f32 %v1349, %v1397
  %s1404 = scalar_lea.vmem %s3, 2496
  %v1405 = vld [vmem:[%s1404] sm:$0xff]
  %v1406 = vld [vmem:[%s1404 + $0x8] sm:$0xff]
  %v1407 = vld [vmem:[%s1404 + $0x10] sm:$0xff]
  %v1408 = vld [vmem:[%s1404 + $0x18] sm:$0xff]
  %v1409 = vld [vmem:[%s1404 + $0x20] sm:$0xff]
  %v1410 = vld [vmem:[%s1404 + $0x28] sm:$0xff]
  %s1411 = scalar_lea.vmem [#allocation3], 53
  %v1412 = vld [vmem:[%s1411] ss:$8 sm:$0xf]
  %v1413 = vld [vmem:[%s1411] ss:$8 sm:$0x30]
  %v1414 = vor.u32 %v1412, %v1413
  %v1416 = vlaneseq
  %v1417 = vshrl.u32 %v1416, 7
  %v1418 = vsub.s32 0, %v1417
  %v1419 = vrot.slane %v1414, %v1418
  %v1420 = vlaneseq
  %v1421 = vshrl.u32 %v1420, 7
  %v1422 = vsub.s32 1, %v1421
  %v1423 = vrot.slane %v1414, %v1422
  %v1424 = vlaneseq
  %v1425 = vshrl.u32 %v1424, 7
  %v1426 = vsub.s32 2, %v1425
  %v1427 = vrot.slane %v1414, %v1426
  %v1428 = vlaneseq
  %v1429 = vshrl.u32 %v1428, 7
  %v1430 = vsub.s32 3, %v1429
  %v1431 = vrot.slane %v1414, %v1430
  %v1432 = vlaneseq
  %v1433 = vshrl.u32 %v1432, 7
  %v1434 = vsub.s32 4, %v1433
  %v1435 = vrot.slane %v1414, %v1434
  %v1436 = vlaneseq
  %v1437 = vshrl.u32 %v1436, 7
  %v1438 = vsub.s32 5, %v1437
  %v1439 = vrot.slane %v1414, %v1438
  %v1446 = vmul.f32 %v1405, %v1419
  %v1447 = vmul.f32 %v1406, %v1423
  %v1448 = vmul.f32 %v1407, %v1427
  %v1449 = vmul.f32 %v1408, %v1431
  %v1450 = vmul.f32 %v1409, %v1435
  %v1451 = vmul.f32 %v1410, %v1439
  %v1452 = vadd.f32 %v1398, %v1446
  %v1453 = vadd.f32 %v1399, %v1447
  %v1454 = vadd.f32 %v1400, %v1448
  %v1455 = vadd.f32 %v1401, %v1449
  %v1456 = vadd.f32 %v1402, %v1450
  %v1457 = vadd.f32 %v1403, %v1451
  %s1458 = scalar_lea.vmem %s3, 2688
  %v1459 = vld [vmem:[%s1458] sm:$0xff]
  %v1460 = vld [vmem:[%s1458 + $0x8] sm:$0xff]
  %v1461 = vld [vmem:[%s1458 + $0x10] sm:$0xff]
  %v1462 = vld [vmem:[%s1458 + $0x18] sm:$0xff]
  %v1463 = vld [vmem:[%s1458 + $0x20] sm:$0xff]
  %v1464 = vld [vmem:[%s1458 + $0x28] sm:$0xff]
  %s1465 = scalar_lea.vmem [#allocation3], 54
  %v1466 = vld [vmem:[%s1465] ss:$8 sm:$0xf]
  %v1467 = vld [vmem:[%s1465] ss:$8 sm:$0x30]
  %v1468 = vor.u32 %v1466, %v1467
  %v1470 = vlaneseq
  %v1471 = vshrl.u32 %v1470, 7
  %v1472 = vsub.s32 0, %v1471
  %v1473 = vrot.slane %v1468, %v1472
  %v1474 = vlaneseq
  %v1475 = vshrl.u32 %v1474, 7
  %v1476 = vsub.s32 1, %v1475
  %v1477 = vrot.slane %v1468, %v1476
  %v1478 = vlaneseq
  %v1479 = vshrl.u32 %v1478, 7
  %v1480 = vsub.s32 2, %v1479
  %v1481 = vrot.slane %v1468, %v1480
  %v1482 = vlaneseq
  %v1483 = vshrl.u32 %v1482, 7
  %v1484 = vsub.s32 3, %v1483
  %v1485 = vrot.slane %v1468, %v1484
  %v1486 = vlaneseq
  %v1487 = vshrl.u32 %v1486, 7
  %v1488 = vsub.s32 4, %v1487
  %v1489 = vrot.slane %v1468, %v1488
  %v1490 = vlaneseq
  %v1491 = vshrl.u32 %v1490, 7
  %v1492 = vsub.s32 5, %v1491
  %v1493 = vrot.slane %v1468, %v1492
  %v1500 = vmul.f32 %v1459, %v1473
  %v1501 = vmul.f32 %v1460, %v1477
  %v1502 = vmul.f32 %v1461, %v1481
  %v1503 = vmul.f32 %v1462, %v1485
  %v1504 = vmul.f32 %v1463, %v1489
  %v1505 = vmul.f32 %v1464, %v1493
  %v1506 = vadd.f32 %v1452, %v1500
  %v1507 = vadd.f32 %v1453, %v1501
  %v1508 = vadd.f32 %v1454, %v1502
  %v1509 = vadd.f32 %v1455, %v1503
  %v1510 = vadd.f32 %v1456, %v1504
  %v1511 = vadd.f32 %v1457, %v1505
  %s1512 = scalar_lea.vmem %s3, 2880
  %v1513 = vld [vmem:[%s1512] sm:$0xff]
  %v1514 = vld [vmem:[%s1512 + $0x8] sm:$0xff]
  %v1515 = vld [vmem:[%s1512 + $0x10] sm:$0xff]
  %v1516 = vld [vmem:[%s1512 + $0x18] sm:$0xff]
  %v1517 = vld [vmem:[%s1512 + $0x20] sm:$0xff]
  %v1518 = vld [vmem:[%s1512 + $0x28] sm:$0xff]
  %s1519 = scalar_lea.vmem [#allocation3], 55
  %v1520 = vld [vmem:[%s1519] ss:$8 sm:$0xf]
  %v1521 = vld [vmem:[%s1519] ss:$8 sm:$0x30]
  %v1522 = vor.u32 %v1520, %v1521
  %v1524 = vlaneseq
  %v1525 = vshrl.u32 %v1524, 7
  %v1526 = vsub.s32 0, %v1525
  %v1527 = vrot.slane %v1522, %v1526
  %v1528 = vlaneseq
  %v1529 = vshrl.u32 %v1528, 7
  %v1530 = vsub.s32 1, %v1529
  %v1531 = vrot.slane %v1522, %v1530
  %v1532 = vlaneseq
  %v1533 = vshrl.u32 %v1532, 7
  %v1534 = vsub.s32 2, %v1533
  %v1535 = vrot.slane %v1522, %v1534
  %v1536 = vlaneseq
  %v1537 = vshrl.u32 %v1536, 7
  %v1538 = vsub.s32 3, %v1537
  %v1539 = vrot.slane %v1522, %v1538
  %v1540 = vlaneseq
  %v1541 = vshrl.u32 %v1540, 7
  %v1542 = vsub.s32 4, %v1541
  %v1543 = vrot.slane %v1522, %v1542
  %v1544 = vlaneseq
  %v1545 = vshrl.u32 %v1544, 7
  %v1546 = vsub.s32 5, %v1545
  %v1547 = vrot.slane %v1522, %v1546
  %v1554 = vmul.f32 %v1513, %v1527
  %v1555 = vmul.f32 %v1514, %v1531
  %v1556 = vmul.f32 %v1515, %v1535
  %v1557 = vmul.f32 %v1516, %v1539
  %v1558 = vmul.f32 %v1517, %v1543
  %v1559 = vmul.f32 %v1518, %v1547
  %v1560 = vadd.f32 %v1506, %v1554
  %v1561 = vadd.f32 %v1507, %v1555
  %v1562 = vadd.f32 %v1508, %v1556
  %v1563 = vadd.f32 %v1509, %v1557
  %v1564 = vadd.f32 %v1510, %v1558
  %v1565 = vadd.f32 %v1511, %v1559
  %1566 = vst [vmem:[%s4] sm:$0xff] %v1560
  %1567 = vst [vmem:[%s4 + $0x8] sm:$0xff] %v1561
  %1568 = vst [vmem:[%s4 + $0x10] sm:$0xff] %v1562
  %1569 = vst [vmem:[%s4 + $0x18] sm:$0xff] %v1563
  %1570 = vst [vmem:[%s4 + $0x20] sm:$0xff] %v1564
  %1571 = vst [vmem:[%s4 + $0x28] sm:$0xff] %v1565
  %v1572 = vld [vmem:[%s3 + $0x30] sm:$0xff]
  %v1573 = vld [vmem:[%s3 + $0x38] sm:$0xff]
  %v1574 = vld [vmem:[%s3 + $0x40] sm:$0xff]
  %v1575 = vld [vmem:[%s3 + $0x48] sm:$0xff]
  %v1576 = vld [vmem:[%s3 + $0x50] sm:$0xff]
  %v1577 = vld [vmem:[%s3 + $0x58] sm:$0xff]
  %v1578 = vld [vmem:[#allocation3] ss:$8 sm:$0xf]
  %v1579 = vld [vmem:[#allocation3] ss:$8 sm:$0x30]
  %v1580 = vor.u32 %v1578, %v1579
  %v1582 = vlaneseq
  %v1583 = vshrl.u32 %v1582, 7
  %v1584 = vsub.s32 0, %v1583
  %v1585 = vrot.slane %v1580, %v1584
  %v1586 = vlaneseq
  %v1587 = vshrl.u32 %v1586, 7
  %v1588 = vsub.s32 1, %v1587
  %v1589 = vrot.slane %v1580, %v1588
  %v1590 = vlaneseq
  %v1591 = vshrl.u32 %v1590, 7
  %v1592 = vsub.s32 2, %v1591
  %v1593 = vrot.slane %v1580, %v1592
  %v1594 = vlaneseq
  %v1595 = vshrl.u32 %v1594, 7
  %v1596 = vsub.s32 3, %v1595
  %v1597 = vrot.slane %v1580, %v1596
  %v1598 = vlaneseq
  %v1599 = vshrl.u32 %v1598, 7
  %v1600 = vsub.s32 4, %v1599
  %v1601 = vrot.slane %v1580, %v1600
  %v1602 = vlaneseq
  %v1603 = vshrl.u32 %v1602, 7
  %v1604 = vsub.s32 5, %v1603
  %v1605 = vrot.slane %v1580, %v1604
  %v1612 = vmul.f32 %v1572, %v1585
  %v1613 = vmul.f32 %v1573, %v1589
  %v1614 = vmul.f32 %v1574, %v1593
  %v1615 = vmul.f32 %v1575, %v1597
  %v1616 = vmul.f32 %v1576, %v1601
  %v1617 = vmul.f32 %v1577, %v1605
  %v1618 = vadd.f32 %v1612, 0.0
  %v1619 = vadd.f32 %v1613, 0.0
  %v1620 = vadd.f32 %v1614, 0.0
  %v1621 = vadd.f32 %v1615, 0.0
  %v1622 = vadd.f32 %v1616, 0.0
  %v1623 = vadd.f32 %v1617, 0.0
  %v1624 = vld [vmem:[%s756 + $0x30] sm:$0xff]
  %v1625 = vld [vmem:[%s756 + $0x38] sm:$0xff]
  %v1626 = vld [vmem:[%s756 + $0x40] sm:$0xff]
  %v1627 = vld [vmem:[%s756 + $0x48] sm:$0xff]
  %v1628 = vld [vmem:[%s756 + $0x50] sm:$0xff]
  %v1629 = vld [vmem:[%s756 + $0x58] sm:$0xff]
  %v1630 = vld [vmem:[%s763] ss:$8 sm:$0xf]
  %v1631 = vld [vmem:[%s763] ss:$8 sm:$0x30]
  %v1632 = vor.u32 %v1630, %v1631
  %v1634 = vlaneseq
  %v1635 = vshrl.u32 %v1634, 7
  %v1636 = vsub.s32 0, %v1635
  %v1637 = vrot.slane %v1632, %v1636
  %v1638 = vlaneseq
  %v1639 = vshrl.u32 %v1638, 7
  %v1640 = vsub.s32 1, %v1639
  %v1641 = vrot.slane %v1632, %v1640
  %v1642 = vlaneseq
  %v1643 = vshrl.u32 %v1642, 7
  %v1644 = vsub.s32 2, %v1643
  %v1645 = vrot.slane %v1632, %v1644
  %v1646 = vlaneseq
  %v1647 = vshrl.u32 %v1646, 7
  %v1648 = vsub.s32 3, %v1647
  %v1649 = vrot.slane %v1632, %v1648
  %v1650 = vlaneseq
  %v1651 = vshrl.u32 %v1650, 7
  %v1652 = vsub.s32 4, %v1651
  %v1653 = vrot.slane %v1632, %v1652
  %v1654 = vlaneseq
  %v1655 = vshrl.u32 %v1654, 7
  %v1656 = vsub.s32 5, %v1655
  %v1657 = vrot.slane %v1632, %v1656
  %v1664 = vmul.f32 %v1624, %v1637
  %v1665 = vmul.f32 %v1625, %v1641
  %v1666 = vmul.f32 %v1626, %v1645
  %v1667 = vmul.f32 %v1627, %v1649
  %v1668 = vmul.f32 %v1628, %v1653
  %v1669 = vmul.f32 %v1629, %v1657
  %v1670 = vadd.f32 %v1618, %v1664
  %v1671 = vadd.f32 %v1619, %v1665
  %v1672 = vadd.f32 %v1620, %v1666
  %v1673 = vadd.f32 %v1621, %v1667
  %v1674 = vadd.f32 %v1622, %v1668
  %v1675 = vadd.f32 %v1623, %v1669
  %v1676 = vld [vmem:[%s810 + $0x30] sm:$0xff]
  %v1677 = vld [vmem:[%s810 + $0x38] sm:$0xff]
  %v1678 = vld [vmem:[%s810 + $0x40] sm:$0xff]
  %v1679 = vld [vmem:[%s810 + $0x48] sm:$0xff]
  %v1680 = vld [vmem:[%s810 + $0x50] sm:$0xff]
  %v1681 = vld [vmem:[%s810 + $0x58] sm:$0xff]
  %v1682 = vld [vmem:[%s817] ss:$8 sm:$0xf]
  %v1683 = vld [vmem:[%s817] ss:$8 sm:$0x30]
  %v1684 = vor.u32 %v1682, %v1683
  %v1686 = vlaneseq
  %v1687 = vshrl.u32 %v1686, 7
  %v1688 = vsub.s32 0, %v1687
  %v1689 = vrot.slane %v1684, %v1688
  %v1690 = vlaneseq
  %v1691 = vshrl.u32 %v1690, 7
  %v1692 = vsub.s32 1, %v1691
  %v1693 = vrot.slane %v1684, %v1692
  %v1694 = vlaneseq
  %v1695 = vshrl.u32 %v1694, 7
  %v1696 = vsub.s32 2, %v1695
  %v1697 = vrot.slane %v1684, %v1696
  %v1698 = vlaneseq
  %v1699 = vshrl.u32 %v1698, 7
  %v1700 = vsub.s32 3, %v1699
  %v1701 = vrot.slane %v1684, %v1700
  %v1702 = vlaneseq
  %v1703 = vshrl.u32 %v1702, 7
  %v1704 = vsub.s32 4, %v1703
  %v1705 = vrot.slane %v1684, %v1704
  %v1706 = vlaneseq
  %v1707 = vshrl.u32 %v1706, 7
  %v1708 = vsub.s32 5, %v1707
  %v1709 = vrot.slane %v1684, %v1708
  %v1716 = vmul.f32 %v1676, %v1689
  %v1717 = vmul.f32 %v1677, %v1693
  %v1718 = vmul.f32 %v1678, %v1697
  %v1719 = vmul.f32 %v1679, %v1701
  %v1720 = vmul.f32 %v1680, %v1705
  %v1721 = vmul.f32 %v1681, %v1709
  %v1722 = vadd.f32 %v1670, %v1716
  %v1723 = vadd.f32 %v1671, %v1717
  %v1724 = vadd.f32 %v1672, %v1718
  %v1725 = vadd.f32 %v1673, %v1719
  %v1726 = vadd.f32 %v1674, %v1720
  %v1727 = vadd.f32 %v1675, %v1721
  %v1728 = vld [vmem:[%s864 + $0x30] sm:$0xff]
  %v1729 = vld [vmem:[%s864 + $0x38] sm:$0xff]
  %v1730 = vld [vmem:[%s864 + $0x40] sm:$0xff]
  %v1731 = vld [vmem:[%s864 + $0x48] sm:$0xff]
  %v1732 = vld [vmem:[%s864 + $0x50] sm:$0xff]
  %v1733 = vld [vmem:[%s864 + $0x58] sm:$0xff]
  %v1734 = vld [vmem:[%s871] ss:$8 sm:$0xf]
  %v1735 = vld [vmem:[%s871] ss:$8 sm:$0x30]
  %v1736 = vor.u32 %v1734, %v1735
  %v1738 = vlaneseq
  %v1739 = vshrl.u32 %v1738, 7
  %v1740 = vsub.s32 0, %v1739
  %v1741 = vrot.slane %v1736, %v1740
  %v1742 = vlaneseq
  %v1743 = vshrl.u32 %v1742, 7
  %v1744 = vsub.s32 1, %v1743
  %v1745 = vrot.slane %v1736, %v1744
  %v1746 = vlaneseq
  %v1747 = vshrl.u32 %v1746, 7
  %v1748 = vsub.s32 2, %v1747
  %v1749 = vrot.slane %v1736, %v1748
  %v1750 = vlaneseq
  %v1751 = vshrl.u32 %v1750, 7
  %v1752 = vsub.s32 3, %v1751
  %v1753 = vrot.slane %v1736, %v1752
  %v1754 = vlaneseq
  %v1755 = vshrl.u32 %v1754, 7
  %v1756 = vsub.s32 4, %v1755
  %v1757 = vrot.slane %v1736, %v1756
  %v1758 = vlaneseq
  %v1759 = vshrl.u32 %v1758, 7
  %v1760 = vsub.s32 5, %v1759
  %v1761 = vrot.slane %v1736, %v1760
  %v1768 = vmul.f32 %v1728, %v1741
  %v1769 = vmul.f32 %v1729, %v1745
  %v1770 = vmul.f32 %v1730, %v1749
  %v1771 = vmul.f32 %v1731, %v1753
  %v1772 = vmul.f32 %v1732, %v1757
  %v1773 = vmul.f32 %v1733, %v1761
  %v1774 = vadd.f32 %v1722, %v1768
  %v1775 = vadd.f32 %v1723, %v1769
  %v1776 = vadd.f32 %v1724, %v1770
  %v1777 = vadd.f32 %v1725, %v1771
  %v1778 = vadd.f32 %v1726, %v1772
  %v1779 = vadd.f32 %v1727, %v1773
  %v1780 = vld [vmem:[%s918 + $0x30] sm:$0xff]
  %v1781 = vld [vmem:[%s918 + $0x38] sm:$0xff]
  %v1782 = vld [vmem:[%s918 + $0x40] sm:$0xff]
  %v1783 = vld [vmem:[%s918 + $0x48] sm:$0xff]
  %v1784 = vld [vmem:[%s918 + $0x50] sm:$0xff]
  %v1785 = vld [vmem:[%s918 + $0x58] sm:$0xff]
  %v1786 = vld [vmem:[%s925] ss:$8 sm:$0xf]
  %v1787 = vld [vmem:[%s925] ss:$8 sm:$0x30]
  %v1788 = vor.u32 %v1786, %v1787
  %v1790 = vlaneseq
  %v1791 = vshrl.u32 %v1790, 7
  %v1792 = vsub.s32 0, %v1791
  %v1793 = vrot.slane %v1788, %v1792
  %v1794 = vlaneseq
  %v1795 = vshrl.u32 %v1794, 7
  %v1796 = vsub.s32 1, %v1795
  %v1797 = vrot.slane %v1788, %v1796
  %v1798 = vlaneseq
  %v1799 = vshrl.u32 %v1798, 7
  %v1800 = vsub.s32 2, %v1799
  %v1801 = vrot.slane %v1788, %v1800
  %v1802 = vlaneseq
  %v1803 = vshrl.u32 %v1802, 7
  %v1804 = vsub.s32 3, %v1803
  %v1805 = vrot.slane %v1788, %v1804
  %v1806 = vlaneseq
  %v1807 = vshrl.u32 %v1806, 7
  %v1808 = vsub.s32 4, %v1807
  %v1809 = vrot.slane %v1788, %v1808
  %v1810 = vlaneseq
  %v1811 = vshrl.u32 %v1810, 7
  %v1812 = vsub.s32 5, %v1811
  %v1813 = vrot.slane %v1788, %v1812
  %v1820 = vmul.f32 %v1780, %v1793
  %v1821 = vmul.f32 %v1781, %v1797
  %v1822 = vmul.f32 %v1782, %v1801
  %v1823 = vmul.f32 %v1783, %v1805
  %v1824 = vmul.f32 %v1784, %v1809
  %v1825 = vmul.f32 %v1785, %v1813
  %v1826 = vadd.f32 %v1774, %v1820
  %v1827 = vadd.f32 %v1775, %v1821
  %v1828 = vadd.f32 %v1776, %v1822
  %v1829 = vadd.f32 %v1777, %v1823
  %v1830 = vadd.f32 %v1778, %v1824
  %v1831 = vadd.f32 %v1779, %v1825
  %v1832 = vld [vmem:[%s972 + $0x30] sm:$0xff]
  %v1833 = vld [vmem:[%s972 + $0x38] sm:$0xff]
  %v1834 = vld [vmem:[%s972 + $0x40] sm:$0xff]
  %v1835 = vld [vmem:[%s972 + $0x48] sm:$0xff]
  %v1836 = vld [vmem:[%s972 + $0x50] sm:$0xff]
  %v1837 = vld [vmem:[%s972 + $0x58] sm:$0xff]
  %v1838 = vld [vmem:[%s979] ss:$8 sm:$0xf]
  %v1839 = vld [vmem:[%s979] ss:$8 sm:$0x30]
  %v1840 = vor.u32 %v1838, %v1839
  %v1842 = vlaneseq
  %v1843 = vshrl.u32 %v1842, 7
  %v1844 = vsub.s32 0, %v1843
  %v1845 = vrot.slane %v1840, %v1844
  %v1846 = vlaneseq
  %v1847 = vshrl.u32 %v1846, 7
  %v1848 = vsub.s32 1, %v1847
  %v1849 = vrot.slane %v1840, %v1848
  %v1850 = vlaneseq
  %v1851 = vshrl.u32 %v1850, 7
  %v1852 = vsub.s32 2, %v1851
  %v1853 = vrot.slane %v1840, %v1852
  %v1854 = vlaneseq
  %v1855 = vshrl.u32 %v1854, 7
  %v1856 = vsub.s32 3, %v1855
  %v1857 = vrot.slane %v1840, %v1856
  %v1858 = vlaneseq
  %v1859 = vshrl.u32 %v1858, 7
  %v1860 = vsub.s32 4, %v1859
  %v1861 = vrot.slane %v1840, %v1860
  %v1862 = vlaneseq
  %v1863 = vshrl.u32 %v1862, 7
  %v1864 = vsub.s32 5, %v1863
  %v1865 = vrot.slane %v1840, %v1864
  %v1872 = vmul.f32 %v1832, %v1845
  %v1873 = vmul.f32 %v1833, %v1849
  %v1874 = vmul.f32 %v1834, %v1853
  %v1875 = vmul.f32 %v1835, %v1857
  %v1876 = vmul.f32 %v1836, %v1861
  %v1877 = vmul.f32 %v1837, %v1865
  %v1878 = vadd.f32 %v1826, %v1872
  %v1879 = vadd.f32 %v1827, %v1873
  %v1880 = vadd.f32 %v1828, %v1874
  %v1881 = vadd.f32 %v1829, %v1875
  %v1882 = vadd.f32 %v1830, %v1876
  %v1883 = vadd.f32 %v1831, %v1877
  %v1884 = vld [vmem:[%s1026 + $0x30] sm:$0xff]
  %v1885 = vld [vmem:[%s1026 + $0x38] sm:$0xff]
  %v1886 = vld [vmem:[%s1026 + $0x40] sm:$0xff]
  %v1887 = vld [vmem:[%s1026 + $0x48] sm:$0xff]
  %v1888 = vld [vmem:[%s1026 + $0x50] sm:$0xff]
  %v1889 = vld [vmem:[%s1026 + $0x58] sm:$0xff]
  %v1890 = vld [vmem:[%s1033] ss:$8 sm:$0xf]
  %v1891 = vld [vmem:[%s1033] ss:$8 sm:$0x30]
  %v1892 = vor.u32 %v1890, %v1891
  %v1894 = vlaneseq
  %v1895 = vshrl.u32 %v1894, 7
  %v1896 = vsub.s32 0, %v1895
  %v1897 = vrot.slane %v1892, %v1896
  %v1898 = vlaneseq
  %v1899 = vshrl.u32 %v1898, 7
  %v1900 = vsub.s32 1, %v1899
  %v1901 = vrot.slane %v1892, %v1900
  %v1902 = vlaneseq
  %v1903 = vshrl.u32 %v1902, 7
  %v1904 = vsub.s32 2, %v1903
  %v1905 = vrot.slane %v1892, %v1904
  %v1906 = vlaneseq
  %v1907 = vshrl.u32 %v1906, 7
  %v1908 = vsub.s32 3, %v1907
  %v1909 = vrot.slane %v1892, %v1908
  %v1910 = vlaneseq
  %v1911 = vshrl.u32 %v1910, 7
  %v1912 = vsub.s32 4, %v1911
  %v1913 = vrot.slane %v1892, %v1912
  %v1914 = vlaneseq
  %v1915 = vshrl.u32 %v1914, 7
  %v1916 = vsub.s32 5, %v1915
  %v1917 = vrot.slane %v1892, %v1916
  %v1924 = vmul.f32 %v1884, %v1897
  %v1925 = vmul.f32 %v1885, %v1901
  %v1926 = vmul.f32 %v1886, %v1905
  %v1927 = vmul.f32 %v1887, %v1909
  %v1928 = vmul.f32 %v1888, %v1913
  %v1929 = vmul.f32 %v1889, %v1917
  %v1930 = vadd.f32 %v1878, %v1924
  %v1931 = vadd.f32 %v1879, %v1925
  %v1932 = vadd.f32 %v1880, %v1926
  %v1933 = vadd.f32 %v1881, %v1927
  %v1934 = vadd.f32 %v1882, %v1928
  %v1935 = vadd.f32 %v1883, %v1929
  %v1936 = vld [vmem:[%s1080 + $0x30] sm:$0xff]
  %v1937 = vld [vmem:[%s1080 + $0x38] sm:$0xff]
  %v1938 = vld [vmem:[%s1080 + $0x40] sm:$0xff]
  %v1939 = vld [vmem:[%s1080 + $0x48] sm:$0xff]
  %v1940 = vld [vmem:[%s1080 + $0x50] sm:$0xff]
  %v1941 = vld [vmem:[%s1080 + $0x58] sm:$0xff]
  %v1942 = vld [vmem:[%s1087] ss:$8 sm:$0xf]
  %v1943 = vld [vmem:[%s1087] ss:$8 sm:$0x30]
  %v1944 = vor.u32 %v1942, %v1943
  %v1946 = vlaneseq
  %v1947 = vshrl.u32 %v1946, 7
  %v1948 = vsub.s32 0, %v1947
  %v1949 = vrot.slane %v1944, %v1948
  %v1950 = vlaneseq
  %v1951 = vshrl.u32 %v1950, 7
  %v1952 = vsub.s32 1, %v1951
  %v1953 = vrot.slane %v1944, %v1952
  %v1954 = vlaneseq
  %v1955 = vshrl.u32 %v1954, 7
  %v1956 = vsub.s32 2, %v1955
  %v1957 = vrot.slane %v1944, %v1956
  %v1958 = vlaneseq
  %v1959 = vshrl.u32 %v1958, 7
  %v1960 = vsub.s32 3, %v1959
  %v1961 = vrot.slane %v1944, %v1960
  %v1962 = vlaneseq
  %v1963 = vshrl.u32 %v1962, 7
  %v1964 = vsub.s32 4, %v1963
  %v1965 = vrot.slane %v1944, %v1964
  %v1966 = vlaneseq
  %v1967 = vshrl.u32 %v1966, 7
  %v1968 = vsub.s32 5, %v1967
  %v1969 = vrot.slane %v1944, %v1968
  %v1976 = vmul.f32 %v1936, %v1949
  %v1977 = vmul.f32 %v1937, %v1953
  %v1978 = vmul.f32 %v1938, %v1957
  %v1979 = vmul.f32 %v1939, %v1961
  %v1980 = vmul.f32 %v1940, %v1965
  %v1981 = vmul.f32 %v1941, %v1969
  %v1982 = vadd.f32 %v1930, %v1976
  %v1983 = vadd.f32 %v1931, %v1977
  %v1984 = vadd.f32 %v1932, %v1978
  %v1985 = vadd.f32 %v1933, %v1979
  %v1986 = vadd.f32 %v1934, %v1980
  %v1987 = vadd.f32 %v1935, %v1981
  %v1988 = vld [vmem:[%s1134 + $0x30] sm:$0xff]
  %v1989 = vld [vmem:[%s1134 + $0x38] sm:$0xff]
  %v1990 = vld [vmem:[%s1134 + $0x40] sm:$0xff]
  %v1991 = vld [vmem:[%s1134 + $0x48] sm:$0xff]
  %v1992 = vld [vmem:[%s1134 + $0x50] sm:$0xff]
  %v1993 = vld [vmem:[%s1134 + $0x58] sm:$0xff]
  %v1994 = vld [vmem:[%s1141] ss:$8 sm:$0xf]
  %v1995 = vld [vmem:[%s1141] ss:$8 sm:$0x30]
  %v1996 = vor.u32 %v1994, %v1995
  %v1998 = vlaneseq
  %v1999 = vshrl.u32 %v1998, 7
  %v2000 = vsub.s32 0, %v1999
  %v2001 = vrot.slane %v1996, %v2000
  %v2002 = vlaneseq
  %v2003 = vshrl.u32 %v2002, 7
  %v2004 = vsub.s32 1, %v2003
  %v2005 = vrot.slane %v1996, %v2004
  %v2006 = vlaneseq
  %v2007 = vshrl.u32 %v2006, 7
  %v2008 = vsub.s32 2, %v2007
  %v2009 = vrot.slane %v1996, %v2008
  %v2010 = vlaneseq
  %v2011 = vshrl.u32 %v2010, 7
  %v2012 = vsub.s32 3, %v2011
  %v2013 = vrot.slane %v1996, %v2012
  %v2014 = vlaneseq
  %v2015 = vshrl.u32 %v2014, 7
  %v2016 = vsub.s32 4, %v2015
  %v2017 = vrot.slane %v1996, %v2016
  %v2018 = vlaneseq
  %v2019 = vshrl.u32 %v2018, 7
  %v2020 = vsub.s32 5, %v2019
  %v2021 = vrot.slane %v1996, %v2020
  %v2028 = vmul.f32 %v1988, %v2001
  %v2029 = vmul.f32 %v1989, %v2005
  %v2030 = vmul.f32 %v1990, %v2009
  %v2031 = vmul.f32 %v1991, %v2013
  %v2032 = vmul.f32 %v1992, %v2017
  %v2033 = vmul.f32 %v1993, %v2021
  %v2034 = vadd.f32 %v1982, %v2028
  %v2035 = vadd.f32 %v1983, %v2029
  %v2036 = vadd.f32 %v1984, %v2030
  %v2037 = vadd.f32 %v1985, %v2031
  %v2038 = vadd.f32 %v1986, %v2032
  %v2039 = vadd.f32 %v1987, %v2033
  %v2040 = vld [vmem:[%s1188 + $0x30] sm:$0xff]
  %v2041 = vld [vmem:[%s1188 + $0x38] sm:$0xff]
  %v2042 = vld [vmem:[%s1188 + $0x40] sm:$0xff]
  %v2043 = vld [vmem:[%s1188 + $0x48] sm:$0xff]
  %v2044 = vld [vmem:[%s1188 + $0x50] sm:$0xff]
  %v2045 = vld [vmem:[%s1188 + $0x58] sm:$0xff]
  %v2046 = vld [vmem:[%s1195] ss:$8 sm:$0xf]
  %v2047 = vld [vmem:[%s1195] ss:$8 sm:$0x30]
  %v2048 = vor.u32 %v2046, %v2047
  %v2050 = vlaneseq
  %v2051 = vshrl.u32 %v2050, 7
  %v2052 = vsub.s32 0, %v2051
  %v2053 = vrot.slane %v2048, %v2052
  %v2054 = vlaneseq
  %v2055 = vshrl.u32 %v2054, 7
  %v2056 = vsub.s32 1, %v2055
  %v2057 = vrot.slane %v2048, %v2056
  %v2058 = vlaneseq
  %v2059 = vshrl.u32 %v2058, 7
  %v2060 = vsub.s32 2, %v2059
  %v2061 = vrot.slane %v2048, %v2060
  %v2062 = vlaneseq
  %v2063 = vshrl.u32 %v2062, 7
  %v2064 = vsub.s32 3, %v2063
  %v2065 = vrot.slane %v2048, %v2064
  %v2066 = vlaneseq
  %v2067 = vshrl.u32 %v2066, 7
  %v2068 = vsub.s32 4, %v2067
  %v2069 = vrot.slane %v2048, %v2068
  %v2070 = vlaneseq
  %v2071 = vshrl.u32 %v2070, 7
  %v2072 = vsub.s32 5, %v2071
  %v2073 = vrot.slane %v2048, %v2072
  %v2080 = vmul.f32 %v2040, %v2053
  %v2081 = vmul.f32 %v2041, %v2057
  %v2082 = vmul.f32 %v2042, %v2061
  %v2083 = vmul.f32 %v2043, %v2065
  %v2084 = vmul.f32 %v2044, %v2069
  %v2085 = vmul.f32 %v2045, %v2073
  %v2086 = vadd.f32 %v2034, %v2080
  %v2087 = vadd.f32 %v2035, %v2081
  %v2088 = vadd.f32 %v2036, %v2082
  %v2089 = vadd.f32 %v2037, %v2083
  %v2090 = vadd.f32 %v2038, %v2084
  %v2091 = vadd.f32 %v2039, %v2085
  %v2092 = vld [vmem:[%s1242 + $0x30] sm:$0xff]
  %v2093 = vld [vmem:[%s1242 + $0x38] sm:$0xff]
  %v2094 = vld [vmem:[%s1242 + $0x40] sm:$0xff]
  %v2095 = vld [vmem:[%s1242 + $0x48] sm:$0xff]
  %v2096 = vld [vmem:[%s1242 + $0x50] sm:$0xff]
  %v2097 = vld [vmem:[%s1242 + $0x58] sm:$0xff]
  %v2098 = vld [vmem:[%s1249] ss:$8 sm:$0xf]
  %v2099 = vld [vmem:[%s1249] ss:$8 sm:$0x30]
  %v2100 = vor.u32 %v2098, %v2099
  %v2102 = vlaneseq
  %v2103 = vshrl.u32 %v2102, 7
  %v2104 = vsub.s32 0, %v2103
  %v2105 = vrot.slane %v2100, %v2104
  %v2106 = vlaneseq
  %v2107 = vshrl.u32 %v2106, 7
  %v2108 = vsub.s32 1, %v2107
  %v2109 = vrot.slane %v2100, %v2108
  %v2110 = vlaneseq
  %v2111 = vshrl.u32 %v2110, 7
  %v2112 = vsub.s32 2, %v2111
  %v2113 = vrot.slane %v2100, %v2112
  %v2114 = vlaneseq
  %v2115 = vshrl.u32 %v2114, 7
  %v2116 = vsub.s32 3, %v2115
  %v2117 = vrot.slane %v2100, %v2116
  %v2118 = vlaneseq
  %v2119 = vshrl.u32 %v2118, 7
  %v2120 = vsub.s32 4, %v2119
  %v2121 = vrot.slane %v2100, %v2120
  %v2122 = vlaneseq
  %v2123 = vshrl.u32 %v2122, 7
  %v2124 = vsub.s32 5, %v2123
  %v2125 = vrot.slane %v2100, %v2124
  %v2132 = vmul.f32 %v2092, %v2105
  %v2133 = vmul.f32 %v2093, %v2109
  %v2134 = vmul.f32 %v2094, %v2113
  %v2135 = vmul.f32 %v2095, %v2117
  %v2136 = vmul.f32 %v2096, %v2121
  %v2137 = vmul.f32 %v2097, %v2125
  %v2138 = vadd.f32 %v2086, %v2132
  %v2139 = vadd.f32 %v2087, %v2133
  %v2140 = vadd.f32 %v2088, %v2134
  %v2141 = vadd.f32 %v2089, %v2135
  %v2142 = vadd.f32 %v2090, %v2136
  %v2143 = vadd.f32 %v2091, %v2137
  %v2144 = vld [vmem:[%s1296 + $0x30] sm:$0xff]
  %v2145 = vld [vmem:[%s1296 + $0x38] sm:$0xff]
  %v2146 = vld [vmem:[%s1296 + $0x40] sm:$0xff]
  %v2147 = vld [vmem:[%s1296 + $0x48] sm:$0xff]
  %v2148 = vld [vmem:[%s1296 + $0x50] sm:$0xff]
  %v2149 = vld [vmem:[%s1296 + $0x58] sm:$0xff]
  %v2150 = vld [vmem:[%s1303] ss:$8 sm:$0xf]
  %v2151 = vld [vmem:[%s1303] ss:$8 sm:$0x30]
  %v2152 = vor.u32 %v2150, %v2151
  %v2154 = vlaneseq
  %v2155 = vshrl.u32 %v2154, 7
  %v2156 = vsub.s32 0, %v2155
  %v2157 = vrot.slane %v2152, %v2156
  %v2158 = vlaneseq
  %v2159 = vshrl.u32 %v2158, 7
  %v2160 = vsub.s32 1, %v2159
  %v2161 = vrot.slane %v2152, %v2160
  %v2162 = vlaneseq
  %v2163 = vshrl.u32 %v2162, 7
  %v2164 = vsub.s32 2, %v2163
  %v2165 = vrot.slane %v2152, %v2164
  %v2166 = vlaneseq
  %v2167 = vshrl.u32 %v2166, 7
  %v2168 = vsub.s32 3, %v2167
  %v2169 = vrot.slane %v2152, %v2168
  %v2170 = vlaneseq
  %v2171 = vshrl.u32 %v2170, 7
  %v2172 = vsub.s32 4, %v2171
  %v2173 = vrot.slane %v2152, %v2172
  %v2174 = vlaneseq
  %v2175 = vshrl.u32 %v2174, 7
  %v2176 = vsub.s32 5, %v2175
  %v2177 = vrot.slane %v2152, %v2176
  %v2184 = vmul.f32 %v2144, %v2157
  %v2185 = vmul.f32 %v2145, %v2161
  %v2186 = vmul.f32 %v2146, %v2165
  %v2187 = vmul.f32 %v2147, %v2169
  %v2188 = vmul.f32 %v2148, %v2173
  %v2189 = vmul.f32 %v2149, %v2177
  %v2190 = vadd.f32 %v2138, %v2184
  %v2191 = vadd.f32 %v2139, %v2185
  %v2192 = vadd.f32 %v2140, %v2186
  %v2193 = vadd.f32 %v2141, %v2187
  %v2194 = vadd.f32 %v2142, %v2188
  %v2195 = vadd.f32 %v2143, %v2189
  %v2196 = vld [vmem:[%s1350 + $0x30] sm:$0xff]
  %v2197 = vld [vmem:[%s1350 + $0x38] sm:$0xff]
  %v2198 = vld [vmem:[%s1350 + $0x40] sm:$0xff]
  %v2199 = vld [vmem:[%s1350 + $0x48] sm:$0xff]
  %v2200 = vld [vmem:[%s1350 + $0x50] sm:$0xff]
  %v2201 = vld [vmem:[%s1350 + $0x58] sm:$0xff]
  %v2202 = vld [vmem:[%s1357] ss:$8 sm:$0xf]
  %v2203 = vld [vmem:[%s1357] ss:$8 sm:$0x30]
  %v2204 = vor.u32 %v2202, %v2203
  %v2206 = vlaneseq
  %v2207 = vshrl.u32 %v2206, 7
  %v2208 = vsub.s32 0, %v2207
  %v2209 = vrot.slane %v2204, %v2208
  %v2210 = vlaneseq
  %v2211 = vshrl.u32 %v2210, 7
  %v2212 = vsub.s32 1, %v2211
  %v2213 = vrot.slane %v2204, %v2212
  %v2214 = vlaneseq
  %v2215 = vshrl.u32 %v2214, 7
  %v2216 = vsub.s32 2, %v2215
  %v2217 = vrot.slane %v2204, %v2216
  %v2218 = vlaneseq
  %v2219 = vshrl.u32 %v2218, 7
  %v2220 = vsub.s32 3, %v2219
  %v2221 = vrot.slane %v2204, %v2220
  %v2222 = vlaneseq
  %v2223 = vshrl.u32 %v2222, 7
  %v2224 = vsub.s32 4, %v2223
  %v2225 = vrot.slane %v2204, %v2224
  %v2226 = vlaneseq
  %v2227 = vshrl.u32 %v2226, 7
  %v2228 = vsub.s32 5, %v2227
  %v2229 = vrot.slane %v2204, %v2228
  %v2236 = vmul.f32 %v2196, %v2209
  %v2237 = vmul.f32 %v2197, %v2213
  %v2238 = vmul.f32 %v2198, %v2217
  %v2239 = vmul.f32 %v2199, %v2221
  %v2240 = vmul.f32 %v2200, %v2225
  %v2241 = vmul.f32 %v2201, %v2229
  %v2242 = vadd.f32 %v2190, %v2236
  %v2243 = vadd.f32 %v2191, %v2237
  %v2244 = vadd.f32 %v2192, %v2238
  %v2245 = vadd.f32 %v2193, %v2239
  %v2246 = vadd.f32 %v2194, %v2240
  %v2247 = vadd.f32 %v2195, %v2241
  %v2248 = vld [vmem:[%s1404 + $0x30] sm:$0xff]
  %v2249 = vld [vmem:[%s1404 + $0x38] sm:$0xff]
  %v2250 = vld [vmem:[%s1404 + $0x40] sm:$0xff]
  %v2251 = vld [vmem:[%s1404 + $0x48] sm:$0xff]
  %v2252 = vld [vmem:[%s1404 + $0x50] sm:$0xff]
  %v2253 = vld [vmem:[%s1404 + $0x58] sm:$0xff]
  %v2254 = vld [vmem:[%s1411] ss:$8 sm:$0xf]
  %v2255 = vld [vmem:[%s1411] ss:$8 sm:$0x30]
  %v2256 = vor.u32 %v2254, %v2255
  %v2258 = vlaneseq
  %v2259 = vshrl.u32 %v2258, 7
  %v2260 = vsub.s32 0, %v2259
  %v2261 = vrot.slane %v2256, %v2260
  %v2262 = vlaneseq
  %v2263 = vshrl.u32 %v2262, 7
  %v2264 = vsub.s32 1, %v2263
  %v2265 = vrot.slane %v2256, %v2264
  %v2266 = vlaneseq
  %v2267 = vshrl.u32 %v2266, 7
  %v2268 = vsub.s32 2, %v2267
  %v2269 = vrot.slane %v2256, %v2268
  %v2270 = vlaneseq
  %v2271 = vshrl.u32 %v2270, 7
  %v2272 = vsub.s32 3, %v2271
  %v2273 = vrot.slane %v2256, %v2272
  %v2274 = vlaneseq
  %v2275 = vshrl.u32 %v2274, 7
  %v2276 = vsub.s32 4, %v2275
  %v2277 = vrot.slane %v2256, %v2276
  %v2278 = vlaneseq
  %v2279 = vshrl.u32 %v2278, 7
  %v2280 = vsub.s32 5, %v2279
  %v2281 = vrot.slane %v2256, %v2280
  %v2288 = vmul.f32 %v2248, %v2261
  %v2289 = vmul.f32 %v2249, %v2265
  %v2290 = vmul.f32 %v2250, %v2269
  %v2291 = vmul.f32 %v2251, %v2273
  %v2292 = vmul.f32 %v2252, %v2277
  %v2293 = vmul.f32 %v2253, %v2281
  %v2294 = vadd.f32 %v2242, %v2288
  %v2295 = vadd.f32 %v2243, %v2289
  %v2296 = vadd.f32 %v2244, %v2290
  %v2297 = vadd.f32 %v2245, %v2291
  %v2298 = vadd.f32 %v2246, %v2292
  %v2299 = vadd.f32 %v2247, %v2293
  %v2300 = vld [vmem:[%s1458 + $0x30] sm:$0xff]
  %v2301 = vld [vmem:[%s1458 + $0x38] sm:$0xff]
  %v2302 = vld [vmem:[%s1458 + $0x40] sm:$0xff]
  %v2303 = vld [vmem:[%s1458 + $0x48] sm:$0xff]
  %v2304 = vld [vmem:[%s1458 + $0x50] sm:$0xff]
  %v2305 = vld [vmem:[%s1458 + $0x58] sm:$0xff]
  %v2306 = vld [vmem:[%s1465] ss:$8 sm:$0xf]
  %v2307 = vld [vmem:[%s1465] ss:$8 sm:$0x30]
  %v2308 = vor.u32 %v2306, %v2307
  %v2310 = vlaneseq
  %v2311 = vshrl.u32 %v2310, 7
  %v2312 = vsub.s32 0, %v2311
  %v2313 = vrot.slane %v2308, %v2312
  %v2314 = vlaneseq
  %v2315 = vshrl.u32 %v2314, 7
  %v2316 = vsub.s32 1, %v2315
  %v2317 = vrot.slane %v2308, %v2316
  %v2318 = vlaneseq
  %v2319 = vshrl.u32 %v2318, 7
  %v2320 = vsub.s32 2, %v2319
  %v2321 = vrot.slane %v2308, %v2320
  %v2322 = vlaneseq
  %v2323 = vshrl.u32 %v2322, 7
  %v2324 = vsub.s32 3, %v2323
  %v2325 = vrot.slane %v2308, %v2324
  %v2326 = vlaneseq
  %v2327 = vshrl.u32 %v2326, 7
  %v2328 = vsub.s32 4, %v2327
  %v2329 = vrot.slane %v2308, %v2328
  %v2330 = vlaneseq
  %v2331 = vshrl.u32 %v2330, 7
  %v2332 = vsub.s32 5, %v2331
  %v2333 = vrot.slane %v2308, %v2332
  %v2340 = vmul.f32 %v2300, %v2313
  %v2341 = vmul.f32 %v2301, %v2317
  %v2342 = vmul.f32 %v2302, %v2321
  %v2343 = vmul.f32 %v2303, %v2325
  %v2344 = vmul.f32 %v2304, %v2329
  %v2345 = vmul.f32 %v2305, %v2333
  %v2346 = vadd.f32 %v2294, %v2340
  %v2347 = vadd.f32 %v2295, %v2341
  %v2348 = vadd.f32 %v2296, %v2342
  %v2349 = vadd.f32 %v2297, %v2343
  %v2350 = vadd.f32 %v2298, %v2344
  %v2351 = vadd.f32 %v2299, %v2345
  %v2352 = vld [vmem:[%s1512 + $0x30] sm:$0xff]
  %v2353 = vld [vmem:[%s1512 + $0x38] sm:$0xff]
  %v2354 = vld [vmem:[%s1512 + $0x40] sm:$0xff]
  %v2355 = vld [vmem:[%s1512 + $0x48] sm:$0xff]
  %v2356 = vld [vmem:[%s1512 + $0x50] sm:$0xff]
  %v2357 = vld [vmem:[%s1512 + $0x58] sm:$0xff]
  %v2358 = vld [vmem:[%s1519] ss:$8 sm:$0xf]
  %v2359 = vld [vmem:[%s1519] ss:$8 sm:$0x30]
  %v2360 = vor.u32 %v2358, %v2359
  %v2362 = vlaneseq
  %v2363 = vshrl.u32 %v2362, 7
  %v2364 = vsub.s32 0, %v2363
  %v2365 = vrot.slane %v2360, %v2364
  %v2366 = vlaneseq
  %v2367 = vshrl.u32 %v2366, 7
  %v2368 = vsub.s32 1, %v2367
  %v2369 = vrot.slane %v2360, %v2368
  %v2370 = vlaneseq
  %v2371 = vshrl.u32 %v2370, 7
  %v2372 = vsub.s32 2, %v2371
  %v2373 = vrot.slane %v2360, %v2372
  %v2374 = vlaneseq
  %v2375 = vshrl.u32 %v2374, 7
  %v2376 = vsub.s32 3, %v2375
  %v2377 = vrot.slane %v2360, %v2376
  %v2378 = vlaneseq
  %v2379 = vshrl.u32 %v2378, 7
  %v2380 = vsub.s32 4, %v2379
  %v2381 = vrot.slane %v2360, %v2380
  %v2382 = vlaneseq
  %v2383 = vshrl.u32 %v2382, 7
  %v2384 = vsub.s32 5, %v2383
  %v2385 = vrot.slane %v2360, %v2384
  %v2392 = vmul.f32 %v2352, %v2365
  %v2393 = vmul.f32 %v2353, %v2369
  %v2394 = vmul.f32 %v2354, %v2373
  %v2395 = vmul.f32 %v2355, %v2377
  %v2396 = vmul.f32 %v2356, %v2381
  %v2397 = vmul.f32 %v2357, %v2385
  %v2398 = vadd.f32 %v2346, %v2392
  %v2399 = vadd.f32 %v2347, %v2393
  %v2400 = vadd.f32 %v2348, %v2394
  %v2401 = vadd.f32 %v2349, %v2395
  %v2402 = vadd.f32 %v2350, %v2396
  %v2403 = vadd.f32 %v2351, %v2397
  %2404 = vst [vmem:[%s4 + $0x30] sm:$0xff] %v2398
  %2405 = vst [vmem:[%s4 + $0x38] sm:$0xff] %v2399
  %2406 = vst [vmem:[%s4 + $0x40] sm:$0xff] %v2400
  %2407 = vst [vmem:[%s4 + $0x48] sm:$0xff] %v2401
  %2408 = vst [vmem:[%s4 + $0x50] sm:$0xff] %v2402
  %2409 = vst [vmem:[%s4 + $0x58] sm:$0xff] %v2403
  %v2410 = vld [vmem:[%s3 + $0x60] sm:$0xff]
  %v2411 = vld [vmem:[%s3 + $0x68] sm:$0xff]
  %v2412 = vld [vmem:[%s3 + $0x70] sm:$0xff]
  %v2413 = vld [vmem:[%s3 + $0x78] sm:$0xff]
  %v2414 = vld [vmem:[%s3 + $0x80] sm:$0xff]
  %v2415 = vld [vmem:[%s3 + $0x88] sm:$0xff]
  %v2416 = vld [vmem:[#allocation3] ss:$8 sm:$0xf]
  %v2417 = vld [vmem:[#allocation3] ss:$8 sm:$0x30]
  %v2418 = vor.u32 %v2416, %v2417
  %v2420 = vlaneseq
  %v2421 = vshrl.u32 %v2420, 7
  %v2422 = vsub.s32 0, %v2421
  %v2423 = vrot.slane %v2418, %v2422
  %v2424 = vlaneseq
  %v2425 = vshrl.u32 %v2424, 7
  %v2426 = vsub.s32 1, %v2425
  %v2427 = vrot.slane %v2418, %v2426
  %v2428 = vlaneseq
  %v2429 = vshrl.u32 %v2428, 7
  %v2430 = vsub.s32 2, %v2429
  %v2431 = vrot.slane %v2418, %v2430
  %v2432 = vlaneseq
  %v2433 = vshrl.u32 %v2432, 7
  %v2434 = vsub.s32 3, %v2433
  %v2435 = vrot.slane %v2418, %v2434
  %v2436 = vlaneseq
  %v2437 = vshrl.u32 %v2436, 7
  %v2438 = vsub.s32 4, %v2437
  %v2439 = vrot.slane %v2418, %v2438
  %v2440 = vlaneseq
  %v2441 = vshrl.u32 %v2440, 7
  %v2442 = vsub.s32 5, %v2441
  %v2443 = vrot.slane %v2418, %v2442
  %v2450 = vmul.f32 %v2410, %v2423
  %v2451 = vmul.f32 %v2411, %v2427
  %v2452 = vmul.f32 %v2412, %v2431
  %v2453 = vmul.f32 %v2413, %v2435
  %v2454 = vmul.f32 %v2414, %v2439
  %v2455 = vmul.f32 %v2415, %v2443
  %v2456 = vadd.f32 %v2450, 0.0
  %v2457 = vadd.f32 %v2451, 0.0
  %v2458 = vadd.f32 %v2452, 0.0
  %v2459 = vadd.f32 %v2453, 0.0
  %v2460 = vadd.f32 %v2454, 0.0
  %v2461 = vadd.f32 %v2455, 0.0
  %v2462 = vld [vmem:[%s756 + $0x60] sm:$0xff]
  %v2463 = vld [vmem:[%s756 + $0x68] sm:$0xff]
  %v2464 = vld [vmem:[%s756 + $0x70] sm:$0xff]
  %v2465 = vld [vmem:[%s756 + $0x78] sm:$0xff]
  %v2466 = vld [vmem:[%s756 + $0x80] sm:$0xff]
  %v2467 = vld [vmem:[%s756 + $0x88] sm:$0xff]
  %v2468 = vld [vmem:[%s763] ss:$8 sm:$0xf]
  %v2469 = vld [vmem:[%s763] ss:$8 sm:$0x30]
  %v2470 = vor.u32 %v2468, %v2469
  %v2472 = vlaneseq
  %v2473 = vshrl.u32 %v2472, 7
  %v2474 = vsub.s32 0, %v2473
  %v2475 = vrot.slane %v2470, %v2474
  %v2476 = vlaneseq
  %v2477 = vshrl.u32 %v2476, 7
  %v2478 = vsub.s32 1, %v2477
  %v2479 = vrot.slane %v2470, %v2478
  %v2480 = vlaneseq
  %v2481 = vshrl.u32 %v2480, 7
  %v2482 = vsub.s32 2, %v2481
  %v2483 = vrot.slane %v2470, %v2482
  %v2484 = vlaneseq
  %v2485 = vshrl.u32 %v2484, 7
  %v2486 = vsub.s32 3, %v2485
  %v2487 = vrot.slane %v2470, %v2486
  %v2488 = vlaneseq
  %v2489 = vshrl.u32 %v2488, 7
  %v2490 = vsub.s32 4, %v2489
  %v2491 = vrot.slane %v2470, %v2490
  %v2492 = vlaneseq
  %v2493 = vshrl.u32 %v2492, 7
  %v2494 = vsub.s32 5, %v2493
  %v2495 = vrot.slane %v2470, %v2494
  %v2502 = vmul.f32 %v2462, %v2475
  %v2503 = vmul.f32 %v2463, %v2479
  %v2504 = vmul.f32 %v2464, %v2483
  %v2505 = vmul.f32 %v2465, %v2487
  %v2506 = vmul.f32 %v2466, %v2491
  %v2507 = vmul.f32 %v2467, %v2495
  %v2508 = vadd.f32 %v2456, %v2502
  %v2509 = vadd.f32 %v2457, %v2503
  %v2510 = vadd.f32 %v2458, %v2504
  %v2511 = vadd.f32 %v2459, %v2505
  %v2512 = vadd.f32 %v2460, %v2506
  %v2513 = vadd.f32 %v2461, %v2507
  %v2514 = vld [vmem:[%s810 + $0x60] sm:$0xff]
  %v2515 = vld [vmem:[%s810 + $0x68] sm:$0xff]
  %v2516 = vld [vmem:[%s810 + $0x70] sm:$0xff]
  %v2517 = vld [vmem:[%s810 + $0x78] sm:$0xff]
  %v2518 = vld [vmem:[%s810 + $0x80] sm:$0xff]
  %v2519 = vld [vmem:[%s810 + $0x88] sm:$0xff]
  %v2520 = vld [vmem:[%s817] ss:$8 sm:$0xf]
  %v2521 = vld [vmem:[%s817] ss:$8 sm:$0x30]
  %v2522 = vor.u32 %v2520, %v2521
  %v2524 = vlaneseq
  %v2525 = vshrl.u32 %v2524, 7
  %v2526 = vsub.s32 0, %v2525
  %v2527 = vrot.slane %v2522, %v2526
  %v2528 = vlaneseq
  %v2529 = vshrl.u32 %v2528, 7
  %v2530 = vsub.s32 1, %v2529
  %v2531 = vrot.slane %v2522, %v2530
  %v2532 = vlaneseq
  %v2533 = vshrl.u32 %v2532, 7
  %v2534 = vsub.s32 2, %v2533
  %v2535 = vrot.slane %v2522, %v2534
  %v2536 = vlaneseq
  %v2537 = vshrl.u32 %v2536, 7
  %v2538 = vsub.s32 3, %v2537
  %v2539 = vrot.slane %v2522, %v2538
  %v2540 = vlaneseq
  %v2541 = vshrl.u32 %v2540, 7
  %v2542 = vsub.s32 4, %v2541
  %v2543 = vrot.slane %v2522, %v2542
  %v2544 = vlaneseq
  %v2545 = vshrl.u32 %v2544, 7
  %v2546 = vsub.s32 5, %v2545
  %v2547 = vrot.slane %v2522, %v2546
  %v2554 = vmul.f32 %v2514, %v2527
  %v2555 = vmul.f32 %v2515, %v2531
  %v2556 = vmul.f32 %v2516, %v2535
  %v2557 = vmul.f32 %v2517, %v2539
  %v2558 = vmul.f32 %v2518, %v2543
  %v2559 = vmul.f32 %v2519, %v2547
  %v2560 = vadd.f32 %v2508, %v2554
  %v2561 = vadd.f32 %v2509, %v2555
  %v2562 = vadd.f32 %v2510, %v2556
  %v2563 = vadd.f32 %v2511, %v2557
  %v2564 = vadd.f32 %v2512, %v2558
  %v2565 = vadd.f32 %v2513, %v2559
  %v2566 = vld [vmem:[%s864 + $0x60] sm:$0xff]
  %v2567 = vld [vmem:[%s864 + $0x68] sm:$0xff]
  %v2568 = vld [vmem:[%s864 + $0x70] sm:$0xff]
  %v2569 = vld [vmem:[%s864 + $0x78] sm:$0xff]
  %v2570 = vld [vmem:[%s864 + $0x80] sm:$0xff]
  %v2571 = vld [vmem:[%s864 + $0x88] sm:$0xff]
  %v2572 = vld [vmem:[%s871] ss:$8 sm:$0xf]
  %v2573 = vld [vmem:[%s871] ss:$8 sm:$0x30]
  %v2574 = vor.u32 %v2572, %v2573
  %v2576 = vlaneseq
  %v2577 = vshrl.u32 %v2576, 7
  %v2578 = vsub.s32 0, %v2577
  %v2579 = vrot.slane %v2574, %v2578
  %v2580 = vlaneseq
  %v2581 = vshrl.u32 %v2580, 7
  %v2582 = vsub.s32 1, %v2581
  %v2583 = vrot.slane %v2574, %v2582
  %v2584 = vlaneseq
  %v2585 = vshrl.u32 %v2584, 7
  %v2586 = vsub.s32 2, %v2585
  %v2587 = vrot.slane %v2574, %v2586
  %v2588 = vlaneseq
  %v2589 = vshrl.u32 %v2588, 7
  %v2590 = vsub.s32 3, %v2589
  %v2591 = vrot.slane %v2574, %v2590
  %v2592 = vlaneseq
  %v2593 = vshrl.u32 %v2592, 7
  %v2594 = vsub.s32 4, %v2593
  %v2595 = vrot.slane %v2574, %v2594
  %v2596 = vlaneseq
  %v2597 = vshrl.u32 %v2596, 7
  %v2598 = vsub.s32 5, %v2597
  %v2599 = vrot.slane %v2574, %v2598
  %v2606 = vmul.f32 %v2566, %v2579
  %v2607 = vmul.f32 %v2567, %v2583
  %v2608 = vmul.f32 %v2568, %v2587
  %v2609 = vmul.f32 %v2569, %v2591
  %v2610 = vmul.f32 %v2570, %v2595
  %v2611 = vmul.f32 %v2571, %v2599
  %v2612 = vadd.f32 %v2560, %v2606
  %v2613 = vadd.f32 %v2561, %v2607
  %v2614 = vadd.f32 %v2562, %v2608
  %v2615 = vadd.f32 %v2563, %v2609
  %v2616 = vadd.f32 %v2564, %v2610
  %v2617 = vadd.f32 %v2565, %v2611
  %v2618 = vld [vmem:[%s918 + $0x60] sm:$0xff]
  %v2619 = vld [vmem:[%s918 + $0x68] sm:$0xff]
  %v2620 = vld [vmem:[%s918 + $0x70] sm:$0xff]
  %v2621 = vld [vmem:[%s918 + $0x78] sm:$0xff]
  %v2622 = vld [vmem:[%s918 + $0x80] sm:$0xff]
  %v2623 = vld [vmem:[%s918 + $0x88] sm:$0xff]
  %v2624 = vld [vmem:[%s925] ss:$8 sm:$0xf]
  %v2625 = vld [vmem:[%s925] ss:$8 sm:$0x30]
  %v2626 = vor.u32 %v2624, %v2625
  %v2628 = vlaneseq
  %v2629 = vshrl.u32 %v2628, 7
  %v2630 = vsub.s32 0, %v2629
  %v2631 = vrot.slane %v2626, %v2630
  %v2632 = vlaneseq
  %v2633 = vshrl.u32 %v2632, 7
  %v2634 = vsub.s32 1, %v2633
  %v2635 = vrot.slane %v2626, %v2634
  %v2636 = vlaneseq
  %v2637 = vshrl.u32 %v2636, 7
  %v2638 = vsub.s32 2, %v2637
  %v2639 = vrot.slane %v2626, %v2638
  %v2640 = vlaneseq
  %v2641 = vshrl.u32 %v2640, 7
  %v2642 = vsub.s32 3, %v2641
  %v2643 = vrot.slane %v2626, %v2642
  %v2644 = vlaneseq
  %v2645 = vshrl.u32 %v2644, 7
  %v2646 = vsub.s32 4, %v2645
  %v2647 = vrot.slane %v2626, %v2646
  %v2648 = vlaneseq
  %v2649 = vshrl.u32 %v2648, 7
  %v2650 = vsub.s32 5, %v2649
  %v2651 = vrot.slane %v2626, %v2650
  %v2658 = vmul.f32 %v2618, %v2631
  %v2659 = vmul.f32 %v2619, %v2635
  %v2660 = vmul.f32 %v2620, %v2639
  %v2661 = vmul.f32 %v2621, %v2643
  %v2662 = vmul.f32 %v2622, %v2647
  %v2663 = vmul.f32 %v2623, %v2651
  %v2664 = vadd.f32 %v2612, %v2658
  %v2665 = vadd.f32 %v2613, %v2659
  %v2666 = vadd.f32 %v2614, %v2660
  %v2667 = vadd.f32 %v2615, %v2661
  %v2668 = vadd.f32 %v2616, %v2662
  %v2669 = vadd.f32 %v2617, %v2663
  %v2670 = vld [vmem:[%s972 + $0x60] sm:$0xff]
  %v2671 = vld [vmem:[%s972 + $0x68] sm:$0xff]
  %v2672 = vld [vmem:[%s972 + $0x70] sm:$0xff]
  %v2673 = vld [vmem:[%s972 + $0x78] sm:$0xff]
  %v2674 = vld [vmem:[%s972 + $0x80] sm:$0xff]
  %v2675 = vld [vmem:[%s972 + $0x88] sm:$0xff]
  %v2676 = vld [vmem:[%s979] ss:$8 sm:$0xf]
  %v2677 = vld [vmem:[%s979] ss:$8 sm:$0x30]
  %v2678 = vor.u32 %v2676, %v2677
  %v2680 = vlaneseq
  %v2681 = vshrl.u32 %v2680, 7
  %v2682 = vsub.s32 0, %v2681
  %v2683 = vrot.slane %v2678, %v2682
  %v2684 = vlaneseq
  %v2685 = vshrl.u32 %v2684, 7
  %v2686 = vsub.s32 1, %v2685
  %v2687 = vrot.slane %v2678, %v2686
  %v2688 = vlaneseq
  %v2689 = vshrl.u32 %v2688, 7
  %v2690 = vsub.s32 2, %v2689
  %v2691 = vrot.slane %v2678, %v2690
  %v2692 = vlaneseq
  %v2693 = vshrl.u32 %v2692, 7
  %v2694 = vsub.s32 3, %v2693
  %v2695 = vrot.slane %v2678, %v2694
  %v2696 = vlaneseq
  %v2697 = vshrl.u32 %v2696, 7
  %v2698 = vsub.s32 4, %v2697
  %v2699 = vrot.slane %v2678, %v2698
  %v2700 = vlaneseq
  %v2701 = vshrl.u32 %v2700, 7
  %v2702 = vsub.s32 5, %v2701
  %v2703 = vrot.slane %v2678, %v2702
  %v2710 = vmul.f32 %v2670, %v2683
  %v2711 = vmul.f32 %v2671, %v2687
  %v2712 = vmul.f32 %v2672, %v2691
  %v2713 = vmul.f32 %v2673, %v2695
  %v2714 = vmul.f32 %v2674, %v2699
  %v2715 = vmul.f32 %v2675, %v2703
  %v2716 = vadd.f32 %v2664, %v2710
  %v2717 = vadd.f32 %v2665, %v2711
  %v2718 = vadd.f32 %v2666, %v2712
  %v2719 = vadd.f32 %v2667, %v2713
  %v2720 = vadd.f32 %v2668, %v2714
  %v2721 = vadd.f32 %v2669, %v2715
  %v2722 = vld [vmem:[%s1026 + $0x60] sm:$0xff]
  %v2723 = vld [vmem:[%s1026 + $0x68] sm:$0xff]
  %v2724 = vld [vmem:[%s1026 + $0x70] sm:$0xff]
  %v2725 = vld [vmem:[%s1026 + $0x78] sm:$0xff]
  %v2726 = vld [vmem:[%s1026 + $0x80] sm:$0xff]
  %v2727 = vld [vmem:[%s1026 + $0x88] sm:$0xff]
  %v2728 = vld [vmem:[%s1033] ss:$8 sm:$0xf]
  %v2729 = vld [vmem:[%s1033] ss:$8 sm:$0x30]
  %v2730 = vor.u32 %v2728, %v2729
  %v2732 = vlaneseq
  %v2733 = vshrl.u32 %v2732, 7
  %v2734 = vsub.s32 0, %v2733
  %v2735 = vrot.slane %v2730, %v2734
  %v2736 = vlaneseq
  %v2737 = vshrl.u32 %v2736, 7
  %v2738 = vsub.s32 1, %v2737
  %v2739 = vrot.slane %v2730, %v2738
  %v2740 = vlaneseq
  %v2741 = vshrl.u32 %v2740, 7
  %v2742 = vsub.s32 2, %v2741
  %v2743 = vrot.slane %v2730, %v2742
  %v2744 = vlaneseq
  %v2745 = vshrl.u32 %v2744, 7
  %v2746 = vsub.s32 3, %v2745
  %v2747 = vrot.slane %v2730, %v2746
  %v2748 = vlaneseq
  %v2749 = vshrl.u32 %v2748, 7
  %v2750 = vsub.s32 4, %v2749
  %v2751 = vrot.slane %v2730, %v2750
  %v2752 = vlaneseq
  %v2753 = vshrl.u32 %v2752, 7
  %v2754 = vsub.s32 5, %v2753
  %v2755 = vrot.slane %v2730, %v2754
  %v2762 = vmul.f32 %v2722, %v2735
  %v2763 = vmul.f32 %v2723, %v2739
  %v2764 = vmul.f32 %v2724, %v2743
  %v2765 = vmul.f32 %v2725, %v2747
  %v2766 = vmul.f32 %v2726, %v2751
  %v2767 = vmul.f32 %v2727, %v2755
  %v2768 = vadd.f32 %v2716, %v2762
  %v2769 = vadd.f32 %v2717, %v2763
  %v2770 = vadd.f32 %v2718, %v2764
  %v2771 = vadd.f32 %v2719, %v2765
  %v2772 = vadd.f32 %v2720, %v2766
  %v2773 = vadd.f32 %v2721, %v2767
  %v2774 = vld [vmem:[%s1080 + $0x60] sm:$0xff]
  %v2775 = vld [vmem:[%s1080 + $0x68] sm:$0xff]
  %v2776 = vld [vmem:[%s1080 + $0x70] sm:$0xff]
  %v2777 = vld [vmem:[%s1080 + $0x78] sm:$0xff]
  %v2778 = vld [vmem:[%s1080 + $0x80] sm:$0xff]
  %v2779 = vld [vmem:[%s1080 + $0x88] sm:$0xff]
  %v2780 = vld [vmem:[%s1087] ss:$8 sm:$0xf]
  %v2781 = vld [vmem:[%s1087] ss:$8 sm:$0x30]
  %v2782 = vor.u32 %v2780, %v2781
  %v2784 = vlaneseq
  %v2785 = vshrl.u32 %v2784, 7
  %v2786 = vsub.s32 0, %v2785
  %v2787 = vrot.slane %v2782, %v2786
  %v2788 = vlaneseq
  %v2789 = vshrl.u32 %v2788, 7
  %v2790 = vsub.s32 1, %v2789
  %v2791 = vrot.slane %v2782, %v2790
  %v2792 = vlaneseq
  %v2793 = vshrl.u32 %v2792, 7
  %v2794 = vsub.s32 2, %v2793
  %v2795 = vrot.slane %v2782, %v2794
  %v2796 = vlaneseq
  %v2797 = vshrl.u32 %v2796, 7
  %v2798 = vsub.s32 3, %v2797
  %v2799 = vrot.slane %v2782, %v2798
  %v2800 = vlaneseq
  %v2801 = vshrl.u32 %v2800, 7
  %v2802 = vsub.s32 4, %v2801
  %v2803 = vrot.slane %v2782, %v2802
  %v2804 = vlaneseq
  %v2805 = vshrl.u32 %v2804, 7
  %v2806 = vsub.s32 5, %v2805
  %v2807 = vrot.slane %v2782, %v2806
  %v2814 = vmul.f32 %v2774, %v2787
  %v2815 = vmul.f32 %v2775, %v2791
  %v2816 = vmul.f32 %v2776, %v2795
  %v2817 = vmul.f32 %v2777, %v2799
  %v2818 = vmul.f32 %v2778, %v2803
  %v2819 = vmul.f32 %v2779, %v2807
  %v2820 = vadd.f32 %v2768, %v2814
  %v2821 = vadd.f32 %v2769, %v2815
  %v2822 = vadd.f32 %v2770, %v2816
  %v2823 = vadd.f32 %v2771, %v2817
  %v2824 = vadd.f32 %v2772, %v2818
  %v2825 = vadd.f32 %v2773, %v2819
  %v2826 = vld [vmem:[%s1134 + $0x60] sm:$0xff]
  %v2827 = vld [vmem:[%s1134 + $0x68] sm:$0xff]
  %v2828 = vld [vmem:[%s1134 + $0x70] sm:$0xff]
  %v2829 = vld [vmem:[%s1134 + $0x78] sm:$0xff]
  %v2830 = vld [vmem:[%s1134 + $0x80] sm:$0xff]
  %v2831 = vld [vmem:[%s1134 + $0x88] sm:$0xff]
  %v2832 = vld [vmem:[%s1141] ss:$8 sm:$0xf]
  %v2833 = vld [vmem:[%s1141] ss:$8 sm:$0x30]
  %v2834 = vor.u32 %v2832, %v2833
  %v2836 = vlaneseq
  %v2837 = vshrl.u32 %v2836, 7
  %v2838 = vsub.s32 0, %v2837
  %v2839 = vrot.slane %v2834, %v2838
  %v2840 = vlaneseq
  %v2841 = vshrl.u32 %v2840, 7
  %v2842 = vsub.s32 1, %v2841
  %v2843 = vrot.slane %v2834, %v2842
  %v2844 = vlaneseq
  %v2845 = vshrl.u32 %v2844, 7
  %v2846 = vsub.s32 2, %v2845
  %v2847 = vrot.slane %v2834, %v2846
  %v2848 = vlaneseq
  %v2849 = vshrl.u32 %v2848, 7
  %v2850 = vsub.s32 3, %v2849
  %v2851 = vrot.slane %v2834, %v2850
  %v2852 = vlaneseq
  %v2853 = vshrl.u32 %v2852, 7
  %v2854 = vsub.s32 4, %v2853
  %v2855 = vrot.slane %v2834, %v2854
  %v2856 = vlaneseq
  %v2857 = vshrl.u32 %v2856, 7
  %v2858 = vsub.s32 5, %v2857
  %v2859 = vrot.slane %v2834, %v2858
  %v2866 = vmul.f32 %v2826, %v2839
  %v2867 = vmul.f32 %v2827, %v2843
  %v2868 = vmul.f32 %v2828, %v2847
  %v2869 = vmul.f32 %v2829, %v2851
  %v2870 = vmul.f32 %v2830, %v2855
  %v2871 = vmul.f32 %v2831, %v2859
  %v2872 = vadd.f32 %v2820, %v2866
  %v2873 = vadd.f32 %v2821, %v2867
  %v2874 = vadd.f32 %v2822, %v2868
  %v2875 = vadd.f32 %v2823, %v2869
  %v2876 = vadd.f32 %v2824, %v2870
  %v2877 = vadd.f32 %v2825, %v2871
  %v2878 = vld [vmem:[%s1188 + $0x60] sm:$0xff]
  %v2879 = vld [vmem:[%s1188 + $0x68] sm:$0xff]
  %v2880 = vld [vmem:[%s1188 + $0x70] sm:$0xff]
  %v2881 = vld [vmem:[%s1188 + $0x78] sm:$0xff]
  %v2882 = vld [vmem:[%s1188 + $0x80] sm:$0xff]
  %v2883 = vld [vmem:[%s1188 + $0x88] sm:$0xff]
  %v2884 = vld [vmem:[%s1195] ss:$8 sm:$0xf]
  %v2885 = vld [vmem:[%s1195] ss:$8 sm:$0x30]
  %v2886 = vor.u32 %v2884, %v2885
  %v2888 = vlaneseq
  %v2889 = vshrl.u32 %v2888, 7
  %v2890 = vsub.s32 0, %v2889
  %v2891 = vrot.slane %v2886, %v2890
  %v2892 = vlaneseq
  %v2893 = vshrl.u32 %v2892, 7
  %v2894 = vsub.s32 1, %v2893
  %v2895 = vrot.slane %v2886, %v2894
  %v2896 = vlaneseq
  %v2897 = vshrl.u32 %v2896, 7
  %v2898 = vsub.s32 2, %v2897
  %v2899 = vrot.slane %v2886, %v2898
  %v2900 = vlaneseq
  %v2901 = vshrl.u32 %v2900, 7
  %v2902 = vsub.s32 3, %v2901
  %v2903 = vrot.slane %v2886, %v2902
  %v2904 = vlaneseq
  %v2905 = vshrl.u32 %v2904, 7
  %v2906 = vsub.s32 4, %v2905
  %v2907 = vrot.slane %v2886, %v2906
  %v2908 = vlaneseq
  %v2909 = vshrl.u32 %v2908, 7
  %v2910 = vsub.s32 5, %v2909
  %v2911 = vrot.slane %v2886, %v2910
  %v2918 = vmul.f32 %v2878, %v2891
  %v2919 = vmul.f32 %v2879, %v2895
  %v2920 = vmul.f32 %v2880, %v2899
  %v2921 = vmul.f32 %v2881, %v2903
  %v2922 = vmul.f32 %v2882, %v2907
  %v2923 = vmul.f32 %v2883, %v2911
  %v2924 = vadd.f32 %v2872, %v2918
  %v2925 = vadd.f32 %v2873, %v2919
  %v2926 = vadd.f32 %v2874, %v2920
  %v2927 = vadd.f32 %v2875, %v2921
  %v2928 = vadd.f32 %v2876, %v2922
  %v2929 = vadd.f32 %v2877, %v2923
  %v2930 = vld [vmem:[%s1242 + $0x60] sm:$0xff]
  %v2931 = vld [vmem:[%s1242 + $0x68] sm:$0xff]
  %v2932 = vld [vmem:[%s1242 + $0x70] sm:$0xff]
  %v2933 = vld [vmem:[%s1242 + $0x78] sm:$0xff]
  %v2934 = vld [vmem:[%s1242 + $0x80] sm:$0xff]
  %v2935 = vld [vmem:[%s1242 + $0x88] sm:$0xff]
  %v2936 = vld [vmem:[%s1249] ss:$8 sm:$0xf]
  %v2937 = vld [vmem:[%s1249] ss:$8 sm:$0x30]
  %v2938 = vor.u32 %v2936, %v2937
  %v2940 = vlaneseq
  %v2941 = vshrl.u32 %v2940, 7
  %v2942 = vsub.s32 0, %v2941
  %v2943 = vrot.slane %v2938, %v2942
  %v2944 = vlaneseq
  %v2945 = vshrl.u32 %v2944, 7
  %v2946 = vsub.s32 1, %v2945
  %v2947 = vrot.slane %v2938, %v2946
  %v2948 = vlaneseq
  %v2949 = vshrl.u32 %v2948, 7
  %v2950 = vsub.s32 2, %v2949
  %v2951 = vrot.slane %v2938, %v2950
  %v2952 = vlaneseq
  %v2953 = vshrl.u32 %v2952, 7
  %v2954 = vsub.s32 3, %v2953
  %v2955 = vrot.slane %v2938, %v2954
  %v2956 = vlaneseq
  %v2957 = vshrl.u32 %v2956, 7
  %v2958 = vsub.s32 4, %v2957
  %v2959 = vrot.slane %v2938, %v2958
  %v2960 = vlaneseq
  %v2961 = vshrl.u32 %v2960, 7
  %v2962 = vsub.s32 5, %v2961
  %v2963 = vrot.slane %v2938, %v2962
  %v2970 = vmul.f32 %v2930, %v2943
  %v2971 = vmul.f32 %v2931, %v2947
  %v2972 = vmul.f32 %v2932, %v2951
  %v2973 = vmul.f32 %v2933, %v2955
  %v2974 = vmul.f32 %v2934, %v2959
  %v2975 = vmul.f32 %v2935, %v2963
  %v2976 = vadd.f32 %v2924, %v2970
  %v2977 = vadd.f32 %v2925, %v2971
  %v2978 = vadd.f32 %v2926, %v2972
  %v2979 = vadd.f32 %v2927, %v2973
  %v2980 = vadd.f32 %v2928, %v2974
  %v2981 = vadd.f32 %v2929, %v2975
  %v2982 = vld [vmem:[%s1296 + $0x60] sm:$0xff]
  %v2983 = vld [vmem:[%s1296 + $0x68] sm:$0xff]
  %v2984 = vld [vmem:[%s1296 + $0x70] sm:$0xff]
  %v2985 = vld [vmem:[%s1296 + $0x78] sm:$0xff]
  %v2986 = vld [vmem:[%s1296 + $0x80] sm:$0xff]
  %v2987 = vld [vmem:[%s1296 + $0x88] sm:$0xff]
  %v2988 = vld [vmem:[%s1303] ss:$8 sm:$0xf]
  %v2989 = vld [vmem:[%s1303] ss:$8 sm:$0x30]
  %v2990 = vor.u32 %v2988, %v2989
  %v2992 = vlaneseq
  %v2993 = vshrl.u32 %v2992, 7
  %v2994 = vsub.s32 0, %v2993
  %v2995 = vrot.slane %v2990, %v2994
  %v2996 = vlaneseq
  %v2997 = vshrl.u32 %v2996, 7
  %v2998 = vsub.s32 1, %v2997
  %v2999 = vrot.slane %v2990, %v2998
  %v3000 = vlaneseq
  %v3001 = vshrl.u32 %v3000, 7
  %v3002 = vsub.s32 2, %v3001
  %v3003 = vrot.slane %v2990, %v3002
  %v3004 = vlaneseq
  %v3005 = vshrl.u32 %v3004, 7
  %v3006 = vsub.s32 3, %v3005
  %v3007 = vrot.slane %v2990, %v3006
  %v3008 = vlaneseq
  %v3009 = vshrl.u32 %v3008, 7
  %v3010 = vsub.s32 4, %v3009
  %v3011 = vrot.slane %v2990, %v3010
  %v3012 = vlaneseq
  %v3013 = vshrl.u32 %v3012, 7
  %v3014 = vsub.s32 5, %v3013
  %v3015 = vrot.slane %v2990, %v3014
  %v3022 = vmul.f32 %v2982, %v2995
  %v3023 = vmul.f32 %v2983, %v2999
  %v3024 = vmul.f32 %v2984, %v3003
  %v3025 = vmul.f32 %v2985, %v3007
  %v3026 = vmul.f32 %v2986, %v3011
  %v3027 = vmul.f32 %v2987, %v3015
  %v3028 = vadd.f32 %v2976, %v3022
  %v3029 = vadd.f32 %v2977, %v3023
  %v3030 = vadd.f32 %v2978, %v3024
  %v3031 = vadd.f32 %v2979, %v3025
  %v3032 = vadd.f32 %v2980, %v3026
  %v3033 = vadd.f32 %v2981, %v3027
  %v3034 = vld [vmem:[%s1350 + $0x60] sm:$0xff]
  %v3035 = vld [vmem:[%s1350 + $0x68] sm:$0xff]
  %v3036 = vld [vmem:[%s1350 + $0x70] sm:$0xff]
  %v3037 = vld [vmem:[%s1350 + $0x78] sm:$0xff]
  %v3038 = vld [vmem:[%s1350 + $0x80] sm:$0xff]
  %v3039 = vld [vmem:[%s1350 + $0x88] sm:$0xff]
  %v3040 = vld [vmem:[%s1357] ss:$8 sm:$0xf]
  %v3041 = vld [vmem:[%s1357] ss:$8 sm:$0x30]
  %v3042 = vor.u32 %v3040, %v3041
  %v3044 = vlaneseq
  %v3045 = vshrl.u32 %v3044, 7
  %v3046 = vsub.s32 0, %v3045
  %v3047 = vrot.slane %v3042, %v3046
  %v3048 = vlaneseq
  %v3049 = vshrl.u32 %v3048, 7
  %v3050 = vsub.s32 1, %v3049
  %v3051 = vrot.slane %v3042, %v3050
  %v3052 = vlaneseq
  %v3053 = vshrl.u32 %v3052, 7
  %v3054 = vsub.s32 2, %v3053
  %v3055 = vrot.slane %v3042, %v3054
  %v3056 = vlaneseq
  %v3057 = vshrl.u32 %v3056, 7
  %v3058 = vsub.s32 3, %v3057
  %v3059 = vrot.slane %v3042, %v3058
  %v3060 = vlaneseq
  %v3061 = vshrl.u32 %v3060, 7
  %v3062 = vsub.s32 4, %v3061
  %v3063 = vrot.slane %v3042, %v3062
  %v3064 = vlaneseq
  %v3065 = vshrl.u32 %v3064, 7
  %v3066 = vsub.s32 5, %v3065
  %v3067 = vrot.slane %v3042, %v3066
  %v3074 = vmul.f32 %v3034, %v3047
  %v3075 = vmul.f32 %v3035, %v3051
  %v3076 = vmul.f32 %v3036, %v3055
  %v3077 = vmul.f32 %v3037, %v3059
  %v3078 = vmul.f32 %v3038, %v3063
  %v3079 = vmul.f32 %v3039, %v3067
  %v3080 = vadd.f32 %v3028, %v3074
  %v3081 = vadd.f32 %v3029, %v3075
  %v3082 = vadd.f32 %v3030, %v3076
  %v3083 = vadd.f32 %v3031, %v3077
  %v3084 = vadd.f32 %v3032, %v3078
  %v3085 = vadd.f32 %v3033, %v3079
  %v3086 = vld [vmem:[%s1404 + $0x60] sm:$0xff]
  %v3087 = vld [vmem:[%s1404 + $0x68] sm:$0xff]
  %v3088 = vld [vmem:[%s1404 + $0x70] sm:$0xff]
  %v3089 = vld [vmem:[%s1404 + $0x78] sm:$0xff]
  %v3090 = vld [vmem:[%s1404 + $0x80] sm:$0xff]
  %v3091 = vld [vmem:[%s1404 + $0x88] sm:$0xff]
  %v3092 = vld [vmem:[%s1411] ss:$8 sm:$0xf]
  %v3093 = vld [vmem:[%s1411] ss:$8 sm:$0x30]
  %v3094 = vor.u32 %v3092, %v3093
  %v3096 = vlaneseq
  %v3097 = vshrl.u32 %v3096, 7
  %v3098 = vsub.s32 0, %v3097
  %v3099 = vrot.slane %v3094, %v3098
  %v3100 = vlaneseq
  %v3101 = vshrl.u32 %v3100, 7
  %v3102 = vsub.s32 1, %v3101
  %v3103 = vrot.slane %v3094, %v3102
  %v3104 = vlaneseq
  %v3105 = vshrl.u32 %v3104, 7
  %v3106 = vsub.s32 2, %v3105
  %v3107 = vrot.slane %v3094, %v3106
  %v3108 = vlaneseq
  %v3109 = vshrl.u32 %v3108, 7
  %v3110 = vsub.s32 3, %v3109
  %v3111 = vrot.slane %v3094, %v3110
  %v3112 = vlaneseq
  %v3113 = vshrl.u32 %v3112, 7
  %v3114 = vsub.s32 4, %v3113
  %v3115 = vrot.slane %v3094, %v3114
  %v3116 = vlaneseq
  %v3117 = vshrl.u32 %v3116, 7
  %v3118 = vsub.s32 5, %v3117
  %v3119 = vrot.slane %v3094, %v3118
  %v3126 = vmul.f32 %v3086, %v3099
  %v3127 = vmul.f32 %v3087, %v3103
  %v3128 = vmul.f32 %v3088, %v3107
  %v3129 = vmul.f32 %v3089, %v3111
  %v3130 = vmul.f32 %v3090, %v3115
  %v3131 = vmul.f32 %v3091, %v3119
  %v3132 = vadd.f32 %v3080, %v3126
  %v3133 = vadd.f32 %v3081, %v3127
  %v3134 = vadd.f32 %v3082, %v3128
  %v3135 = vadd.f32 %v3083, %v3129
  %v3136 = vadd.f32 %v3084, %v3130
  %v3137 = vadd.f32 %v3085, %v3131
  %v3138 = vld [vmem:[%s1458 + $0x60] sm:$0xff]
  %v3139 = vld [vmem:[%s1458 + $0x68] sm:$0xff]
  %v3140 = vld [vmem:[%s1458 + $0x70] sm:$0xff]
  %v3141 = vld [vmem:[%s1458 + $0x78] sm:$0xff]
  %v3142 = vld [vmem:[%s1458 + $0x80] sm:$0xff]
  %v3143 = vld [vmem:[%s1458 + $0x88] sm:$0xff]
  %v3144 = vld [vmem:[%s1465] ss:$8 sm:$0xf]
  %v3145 = vld [vmem:[%s1465] ss:$8 sm:$0x30]
  %v3146 = vor.u32 %v3144, %v3145
  %v3148 = vlaneseq
  %v3149 = vshrl.u32 %v3148, 7
  %v3150 = vsub.s32 0, %v3149
  %v3151 = vrot.slane %v3146, %v3150
  %v3152 = vlaneseq
  %v3153 = vshrl.u32 %v3152, 7
  %v3154 = vsub.s32 1, %v3153
  %v3155 = vrot.slane %v3146, %v3154
  %v3156 = vlaneseq
  %v3157 = vshrl.u32 %v3156, 7
  %v3158 = vsub.s32 2, %v3157
  %v3159 = vrot.slane %v3146, %v3158
  %v3160 = vlaneseq
  %v3161 = vshrl.u32 %v3160, 7
  %v3162 = vsub.s32 3, %v3161
  %v3163 = vrot.slane %v3146, %v3162
  %v3164 = vlaneseq
  %v3165 = vshrl.u32 %v3164, 7
  %v3166 = vsub.s32 4, %v3165
  %v3167 = vrot.slane %v3146, %v3166
  %v3168 = vlaneseq
  %v3169 = vshrl.u32 %v3168, 7
  %v3170 = vsub.s32 5, %v3169
  %v3171 = vrot.slane %v3146, %v3170
  %v3178 = vmul.f32 %v3138, %v3151
  %v3179 = vmul.f32 %v3139, %v3155
  %v3180 = vmul.f32 %v3140, %v3159
  %v3181 = vmul.f32 %v3141, %v3163
  %v3182 = vmul.f32 %v3142, %v3167
  %v3183 = vmul.f32 %v3143, %v3171
  %v3184 = vadd.f32 %v3132, %v3178
  %v3185 = vadd.f32 %v3133, %v3179
  %v3186 = vadd.f32 %v3134, %v3180
  %v3187 = vadd.f32 %v3135, %v3181
  %v3188 = vadd.f32 %v3136, %v3182
  %v3189 = vadd.f32 %v3137, %v3183
  %v3190 = vld [vmem:[%s1512 + $0x60] sm:$0xff]
  %v3191 = vld [vmem:[%s1512 + $0x68] sm:$0xff]
  %v3192 = vld [vmem:[%s1512 + $0x70] sm:$0xff]
  %v3193 = vld [vmem:[%s1512 + $0x78] sm:$0xff]
  %v3194 = vld [vmem:[%s1512 + $0x80] sm:$0xff]
  %v3195 = vld [vmem:[%s1512 + $0x88] sm:$0xff]
  %v3196 = vld [vmem:[%s1519] ss:$8 sm:$0xf]
  %v3197 = vld [vmem:[%s1519] ss:$8 sm:$0x30]
  %v3198 = vor.u32 %v3196, %v3197
  %v3200 = vlaneseq
  %v3201 = vshrl.u32 %v3200, 7
  %v3202 = vsub.s32 0, %v3201
  %v3203 = vrot.slane %v3198, %v3202
  %v3204 = vlaneseq
  %v3205 = vshrl.u32 %v3204, 7
  %v3206 = vsub.s32 1, %v3205
  %v3207 = vrot.slane %v3198, %v3206
  %v3208 = vlaneseq
  %v3209 = vshrl.u32 %v3208, 7
  %v3210 = vsub.s32 2, %v3209
  %v3211 = vrot.slane %v3198, %v3210
  %v3212 = vlaneseq
  %v3213 = vshrl.u32 %v3212, 7
  %v3214 = vsub.s32 3, %v3213
  %v3215 = vrot.slane %v3198, %v3214
  %v3216 = vlaneseq
  %v3217 = vshrl.u32 %v3216, 7
  %v3218 = vsub.s32 4, %v3217
  %v3219 = vrot.slane %v3198, %v3218
  %v3220 = vlaneseq
  %v3221 = vshrl.u32 %v3220, 7
  %v3222 = vsub.s32 5, %v3221
  %v3223 = vrot.slane %v3198, %v3222
  %v3230 = vmul.f32 %v3190, %v3203
  %v3231 = vmul.f32 %v3191, %v3207
  %v3232 = vmul.f32 %v3192, %v3211
  %v3233 = vmul.f32 %v3193, %v3215
  %v3234 = vmul.f32 %v3194, %v3219
  %v3235 = vmul.f32 %v3195, %v3223
  %v3236 = vadd.f32 %v3184, %v3230
  %v3237 = vadd.f32 %v3185, %v3231
  %v3238 = vadd.f32 %v3186, %v3232
  %v3239 = vadd.f32 %v3187, %v3233
  %v3240 = vadd.f32 %v3188, %v3234
  %v3241 = vadd.f32 %v3189, %v3235
  %3242 = vst [vmem:[%s4 + $0x60] sm:$0xff] %v3236
  %3243 = vst [vmem:[%s4 + $0x68] sm:$0xff] %v3237
  %3244 = vst [vmem:[%s4 + $0x70] sm:$0xff] %v3238
  %3245 = vst [vmem:[%s4 + $0x78] sm:$0xff] %v3239
  %3246 = vst [vmem:[%s4 + $0x80] sm:$0xff] %v3240
  %3247 = vst [vmem:[%s4 + $0x88] sm:$0xff] %v3241
  %v3248 = vld [vmem:[%s3 + $0x90] sm:$0x3f]
  %v3249 = vld [vmem:[%s3 + $0x98] sm:$0x3f]
  %v3250 = vld [vmem:[%s3 + $0xa0] sm:$0x3f]
  %v3251 = vld [vmem:[%s3 + $0xa8] sm:$0x3f]
  %v3252 = vld [vmem:[%s3 + $0xb0] sm:$0x3f]
  %v3253 = vld [vmem:[%s3 + $0xb8] sm:$0x3f]
  %v3254 = vld [vmem:[#allocation3] ss:$8 sm:$0xf]
  %v3255 = vld [vmem:[#allocation3] ss:$8 sm:$0x30]
  %v3256 = vor.u32 %v3254, %v3255
  %v3258 = vlaneseq
  %v3259 = vshrl.u32 %v3258, 7
  %v3260 = vsub.s32 0, %v3259
  %v3261 = vrot.slane %v3256, %v3260
  %v3262 = vlaneseq
  %v3263 = vshrl.u32 %v3262, 7
  %v3264 = vsub.s32 1, %v3263
  %v3265 = vrot.slane %v3256, %v3264
  %v3266 = vlaneseq
  %v3267 = vshrl.u32 %v3266, 7
  %v3268 = vsub.s32 2, %v3267
  %v3269 = vrot.slane %v3256, %v3268
  %v3270 = vlaneseq
  %v3271 = vshrl.u32 %v3270, 7
  %v3272 = vsub.s32 3, %v3271
  %v3273 = vrot.slane %v3256, %v3272
  %v3274 = vlaneseq
  %v3275 = vshrl.u32 %v3274, 7
  %v3276 = vsub.s32 4, %v3275
  %v3277 = vrot.slane %v3256, %v3276
  %v3278 = vlaneseq
  %v3279 = vshrl.u32 %v3278, 7
  %v3280 = vsub.s32 5, %v3279
  %v3281 = vrot.slane %v3256, %v3280
  %v3288 = vmul.f32 %v3248, %v3261
  %v3289 = vmul.f32 %v3249, %v3265
  %v3290 = vmul.f32 %v3250, %v3269
  %v3291 = vmul.f32 %v3251, %v3273
  %v3292 = vmul.f32 %v3252, %v3277
  %v3293 = vmul.f32 %v3253, %v3281
  %v3294 = vadd.f32 %v3288, 0.0
  %v3295 = vadd.f32 %v3289, 0.0
  %v3296 = vadd.f32 %v3290, 0.0
  %v3297 = vadd.f32 %v3291, 0.0
  %v3298 = vadd.f32 %v3292, 0.0
  %v3299 = vadd.f32 %v3293, 0.0
  %v3300 = vld [vmem:[%s756 + $0x90] sm:$0x3f]
  %v3301 = vld [vmem:[%s756 + $0x98] sm:$0x3f]
  %v3302 = vld [vmem:[%s756 + $0xa0] sm:$0x3f]
  %v3303 = vld [vmem:[%s756 + $0xa8] sm:$0x3f]
  %v3304 = vld [vmem:[%s756 + $0xb0] sm:$0x3f]
  %v3305 = vld [vmem:[%s756 + $0xb8] sm:$0x3f]
  %v3306 = vld [vmem:[%s763] ss:$8 sm:$0xf]
  %v3307 = vld [vmem:[%s763] ss:$8 sm:$0x30]
  %v3308 = vor.u32 %v3306, %v3307
  %v3310 = vlaneseq
  %v3311 = vshrl.u32 %v3310, 7
  %v3312 = vsub.s32 0, %v3311
  %v3313 = vrot.slane %v3308, %v3312
  %v3314 = vlaneseq
  %v3315 = vshrl.u32 %v3314, 7
  %v3316 = vsub.s32 1, %v3315
  %v3317 = vrot.slane %v3308, %v3316
  %v3318 = vlaneseq
  %v3319 = vshrl.u32 %v3318, 7
  %v3320 = vsub.s32 2, %v3319
  %v3321 = vrot.slane %v3308, %v3320
  %v3322 = vlaneseq
  %v3323 = vshrl.u32 %v3322, 7
  %v3324 = vsub.s32 3, %v3323
  %v3325 = vrot.slane %v3308, %v3324
  %v3326 = vlaneseq
  %v3327 = vshrl.u32 %v3326, 7
  %v3328 = vsub.s32 4, %v3327
  %v3329 = vrot.slane %v3308, %v3328
  %v3330 = vlaneseq
  %v3331 = vshrl.u32 %v3330, 7
  %v3332 = vsub.s32 5, %v3331
  %v3333 = vrot.slane %v3308, %v3332
  %v3340 = vmul.f32 %v3300, %v3313
  %v3341 = vmul.f32 %v3301, %v3317
  %v3342 = vmul.f32 %v3302, %v3321
  %v3343 = vmul.f32 %v3303, %v3325
  %v3344 = vmul.f32 %v3304, %v3329
  %v3345 = vmul.f32 %v3305, %v3333
  %v3346 = vadd.f32 %v3294, %v3340
  %v3347 = vadd.f32 %v3295, %v3341
  %v3348 = vadd.f32 %v3296, %v3342
  %v3349 = vadd.f32 %v3297, %v3343
  %v3350 = vadd.f32 %v3298, %v3344
  %v3351 = vadd.f32 %v3299, %v3345
  %v3352 = vld [vmem:[%s810 + $0x90] sm:$0x3f]
  %v3353 = vld [vmem:[%s810 + $0x98] sm:$0x3f]
  %v3354 = vld [vmem:[%s810 + $0xa0] sm:$0x3f]
  %v3355 = vld [vmem:[%s810 + $0xa8] sm:$0x3f]
  %v3356 = vld [vmem:[%s810 + $0xb0] sm:$0x3f]
  %v3357 = vld [vmem:[%s810 + $0xb8] sm:$0x3f]
  %v3358 = vld [vmem:[%s817] ss:$8 sm:$0xf]
  %v3359 = vld [vmem:[%s817] ss:$8 sm:$0x30]
  %v3360 = vor.u32 %v3358, %v3359
  %v3362 = vlaneseq
  %v3363 = vshrl.u32 %v3362, 7
  %v3364 = vsub.s32 0, %v3363
  %v3365 = vrot.slane %v3360, %v3364
  %v3366 = vlaneseq
  %v3367 = vshrl.u32 %v3366, 7
  %v3368 = vsub.s32 1, %v3367
  %v3369 = vrot.slane %v3360, %v3368
  %v3370 = vlaneseq
  %v3371 = vshrl.u32 %v3370, 7
  %v3372 = vsub.s32 2, %v3371
  %v3373 = vrot.slane %v3360, %v3372
  %v3374 = vlaneseq
  %v3375 = vshrl.u32 %v3374, 7
  %v3376 = vsub.s32 3, %v3375
  %v3377 = vrot.slane %v3360, %v3376
  %v3378 = vlaneseq
  %v3379 = vshrl.u32 %v3378, 7
  %v3380 = vsub.s32 4, %v3379
  %v3381 = vrot.slane %v3360, %v3380
  %v3382 = vlaneseq
  %v3383 = vshrl.u32 %v3382, 7
  %v3384 = vsub.s32 5, %v3383
  %v3385 = vrot.slane %v3360, %v3384
  %v3392 = vmul.f32 %v3352, %v3365
  %v3393 = vmul.f32 %v3353, %v3369
  %v3394 = vmul.f32 %v3354, %v3373
  %v3395 = vmul.f32 %v3355, %v3377
  %v3396 = vmul.f32 %v3356, %v3381
  %v3397 = vmul.f32 %v3357, %v3385
  %v3398 = vadd.f32 %v3346, %v3392
  %v3399 = vadd.f32 %v3347, %v3393
  %v3400 = vadd.f32 %v3348, %v3394
  %v3401 = vadd.f32 %v3349, %v3395
  %v3402 = vadd.f32 %v3350, %v3396
  %v3403 = vadd.f32 %v3351, %v3397
  %v3404 = vld [vmem:[%s864 + $0x90] sm:$0x3f]
  %v3405 = vld [vmem:[%s864 + $0x98] sm:$0x3f]
  %v3406 = vld [vmem:[%s864 + $0xa0] sm:$0x3f]
  %v3407 = vld [vmem:[%s864 + $0xa8] sm:$0x3f]
  %v3408 = vld [vmem:[%s864 + $0xb0] sm:$0x3f]
  %v3409 = vld [vmem:[%s864 + $0xb8] sm:$0x3f]
  %v3410 = vld [vmem:[%s871] ss:$8 sm:$0xf]
  %v3411 = vld [vmem:[%s871] ss:$8 sm:$0x30]
  %v3412 = vor.u32 %v3410, %v3411
  %v3414 = vlaneseq
  %v3415 = vshrl.u32 %v3414, 7
  %v3416 = vsub.s32 0, %v3415
  %v3417 = vrot.slane %v3412, %v3416
  %v3418 = vlaneseq
  %v3419 = vshrl.u32 %v3418, 7
  %v3420 = vsub.s32 1, %v3419
  %v3421 = vrot.slane %v3412, %v3420
  %v3422 = vlaneseq
  %v3423 = vshrl.u32 %v3422, 7
  %v3424 = vsub.s32 2, %v3423
  %v3425 = vrot.slane %v3412, %v3424
  %v3426 = vlaneseq
  %v3427 = vshrl.u32 %v3426, 7
  %v3428 = vsub.s32 3, %v3427
  %v3429 = vrot.slane %v3412, %v3428
  %v3430 = vlaneseq
  %v3431 = vshrl.u32 %v3430, 7
  %v3432 = vsub.s32 4, %v3431
  %v3433 = vrot.slane %v3412, %v3432
  %v3434 = vlaneseq
  %v3435 = vshrl.u32 %v3434, 7
  %v3436 = vsub.s32 5, %v3435
  %v3437 = vrot.slane %v3412, %v3436
  %v3444 = vmul.f32 %v3404, %v3417
  %v3445 = vmul.f32 %v3405, %v3421
  %v3446 = vmul.f32 %v3406, %v3425
  %v3447 = vmul.f32 %v3407, %v3429
  %v3448 = vmul.f32 %v3408, %v3433
  %v3449 = vmul.f32 %v3409, %v3437
  %v3450 = vadd.f32 %v3398, %v3444
  %v3451 = vadd.f32 %v3399, %v3445
  %v3452 = vadd.f32 %v3400, %v3446
  %v3453 = vadd.f32 %v3401, %v3447
  %v3454 = vadd.f32 %v3402, %v3448
  %v3455 = vadd.f32 %v3403, %v3449
  %v3456 = vld [vmem:[%s918 + $0x90] sm:$0x3f]
  %v3457 = vld [vmem:[%s918 + $0x98] sm:$0x3f]
  %v3458 = vld [vmem:[%s918 + $0xa0] sm:$0x3f]
  %v3459 = vld [vmem:[%s918 + $0xa8] sm:$0x3f]
  %v3460 = vld [vmem:[%s918 + $0xb0] sm:$0x3f]
  %v3461 = vld [vmem:[%s918 + $0xb8] sm:$0x3f]
  %v3462 = vld [vmem:[%s925] ss:$8 sm:$0xf]
  %v3463 = vld [vmem:[%s925] ss:$8 sm:$0x30]
  %v3464 = vor.u32 %v3462, %v3463
  %v3466 = vlaneseq
  %v3467 = vshrl.u32 %v3466, 7
  %v3468 = vsub.s32 0, %v3467
  %v3469 = vrot.slane %v3464, %v3468
  %v3470 = vlaneseq
  %v3471 = vshrl.u32 %v3470, 7
  %v3472 = vsub.s32 1, %v3471
  %v3473 = vrot.slane %v3464, %v3472
  %v3474 = vlaneseq
  %v3475 = vshrl.u32 %v3474, 7
  %v3476 = vsub.s32 2, %v3475
  %v3477 = vrot.slane %v3464, %v3476
  %v3478 = vlaneseq
  %v3479 = vshrl.u32 %v3478, 7
  %v3480 = vsub.s32 3, %v3479
  %v3481 = vrot.slane %v3464, %v3480
  %v3482 = vlaneseq
  %v3483 = vshrl.u32 %v3482, 7
  %v3484 = vsub.s32 4, %v3483
  %v3485 = vrot.slane %v3464, %v3484
  %v3486 = vlaneseq
  %v3487 = vshrl.u32 %v3486, 7
  %v3488 = vsub.s32 5, %v3487
  %v3489 = vrot.slane %v3464, %v3488
  %v3496 = vmul.f32 %v3456, %v3469
  %v3497 = vmul.f32 %v3457, %v3473
  %v3498 = vmul.f32 %v3458, %v3477
  %v3499 = vmul.f32 %v3459, %v3481
  %v3500 = vmul.f32 %v3460, %v3485
  %v3501 = vmul.f32 %v3461, %v3489
  %v3502 = vadd.f32 %v3450, %v3496
  %v3503 = vadd.f32 %v3451, %v3497
  %v3504 = vadd.f32 %v3452, %v3498
  %v3505 = vadd.f32 %v3453, %v3499
  %v3506 = vadd.f32 %v3454, %v3500
  %v3507 = vadd.f32 %v3455, %v3501
  %v3508 = vld [vmem:[%s972 + $0x90] sm:$0x3f]
  %v3509 = vld [vmem:[%s972 + $0x98] sm:$0x3f]
  %v3510 = vld [vmem:[%s972 + $0xa0] sm:$0x3f]
  %v3511 = vld [vmem:[%s972 + $0xa8] sm:$0x3f]
  %v3512 = vld [vmem:[%s972 + $0xb0] sm:$0x3f]
  %v3513 = vld [vmem:[%s972 + $0xb8] sm:$0x3f]
  %v3514 = vld [vmem:[%s979] ss:$8 sm:$0xf]
  %v3515 = vld [vmem:[%s979] ss:$8 sm:$0x30]
  %v3516 = vor.u32 %v3514, %v3515
  %v3518 = vlaneseq
  %v3519 = vshrl.u32 %v3518, 7
  %v3520 = vsub.s32 0, %v3519
  %v3521 = vrot.slane %v3516, %v3520
  %v3522 = vlaneseq
  %v3523 = vshrl.u32 %v3522, 7
  %v3524 = vsub.s32 1, %v3523
  %v3525 = vrot.slane %v3516, %v3524
  %v3526 = vlaneseq
  %v3527 = vshrl.u32 %v3526, 7
  %v3528 = vsub.s32 2, %v3527
  %v3529 = vrot.slane %v3516, %v3528
  %v3530 = vlaneseq
  %v3531 = vshrl.u32 %v3530, 7
  %v3532 = vsub.s32 3, %v3531
  %v3533 = vrot.slane %v3516, %v3532
  %v3534 = vlaneseq
  %v3535 = vshrl.u32 %v3534, 7
  %v3536 = vsub.s32 4, %v3535
  %v3537 = vrot.slane %v3516, %v3536
  %v3538 = vlaneseq
  %v3539 = vshrl.u32 %v3538, 7
  %v3540 = vsub.s32 5, %v3539
  %v3541 = vrot.slane %v3516, %v3540
  %v3548 = vmul.f32 %v3508, %v3521
  %v3549 = vmul.f32 %v3509, %v3525
  %v3550 = vmul.f32 %v3510, %v3529
  %v3551 = vmul.f32 %v3511, %v3533
  %v3552 = vmul.f32 %v3512, %v3537
  %v3553 = vmul.f32 %v3513, %v3541
  %v3554 = vadd.f32 %v3502, %v3548
  %v3555 = vadd.f32 %v3503, %v3549
  %v3556 = vadd.f32 %v3504, %v3550
  %v3557 = vadd.f32 %v3505, %v3551
  %v3558 = vadd.f32 %v3506, %v3552
  %v3559 = vadd.f32 %v3507, %v3553
  %v3560 = vld [vmem:[%s1026 + $0x90] sm:$0x3f]
  %v3561 = vld [vmem:[%s1026 + $0x98] sm:$0x3f]
  %v3562 = vld [vmem:[%s1026 + $0xa0] sm:$0x3f]
  %v3563 = vld [vmem:[%s1026 + $0xa8] sm:$0x3f]
  %v3564 = vld [vmem:[%s1026 + $0xb0] sm:$0x3f]
  %v3565 = vld [vmem:[%s1026 + $0xb8] sm:$0x3f]
  %v3566 = vld [vmem:[%s1033] ss:$8 sm:$0xf]
  %v3567 = vld [vmem:[%s1033] ss:$8 sm:$0x30]
  %v3568 = vor.u32 %v3566, %v3567
  %v3570 = vlaneseq
  %v3571 = vshrl.u32 %v3570, 7
  %v3572 = vsub.s32 0, %v3571
  %v3573 = vrot.slane %v3568, %v3572
  %v3574 = vlaneseq
  %v3575 = vshrl.u32 %v3574, 7
  %v3576 = vsub.s32 1, %v3575
  %v3577 = vrot.slane %v3568, %v3576
  %v3578 = vlaneseq
  %v3579 = vshrl.u32 %v3578, 7
  %v3580 = vsub.s32 2, %v3579
  %v3581 = vrot.slane %v3568, %v3580
  %v3582 = vlaneseq
  %v3583 = vshrl.u32 %v3582, 7
  %v3584 = vsub.s32 3, %v3583
  %v3585 = vrot.slane %v3568, %v3584
  %v3586 = vlaneseq
  %v3587 = vshrl.u32 %v3586, 7
  %v3588 = vsub.s32 4, %v3587
  %v3589 = vrot.slane %v3568, %v3588
  %v3590 = vlaneseq
  %v3591 = vshrl.u32 %v3590, 7
  %v3592 = vsub.s32 5, %v3591
  %v3593 = vrot.slane %v3568, %v3592
  %v3600 = vmul.f32 %v3560, %v3573
  %v3601 = vmul.f32 %v3561, %v3577
  %v3602 = vmul.f32 %v3562, %v3581
  %v3603 = vmul.f32 %v3563, %v3585
  %v3604 = vmul.f32 %v3564, %v3589
  %v3605 = vmul.f32 %v3565, %v3593
  %v3606 = vadd.f32 %v3554, %v3600
  %v3607 = vadd.f32 %v3555, %v3601
  %v3608 = vadd.f32 %v3556, %v3602
  %v3609 = vadd.f32 %v3557, %v3603
  %v3610 = vadd.f32 %v3558, %v3604
  %v3611 = vadd.f32 %v3559, %v3605
  %v3612 = vld [vmem:[%s1080 + $0x90] sm:$0x3f]
  %v3613 = vld [vmem:[%s1080 + $0x98] sm:$0x3f]
  %v3614 = vld [vmem:[%s1080 + $0xa0] sm:$0x3f]
  %v3615 = vld [vmem:[%s1080 + $0xa8] sm:$0x3f]
  %v3616 = vld [vmem:[%s1080 + $0xb0] sm:$0x3f]
  %v3617 = vld [vmem:[%s1080 + $0xb8] sm:$0x3f]
  %v3618 = vld [vmem:[%s1087] ss:$8 sm:$0xf]
  %v3619 = vld [vmem:[%s1087] ss:$8 sm:$0x30]
  %v3620 = vor.u32 %v3618, %v3619
  %v3622 = vlaneseq
  %v3623 = vshrl.u32 %v3622, 7
  %v3624 = vsub.s32 0, %v3623
  %v3625 = vrot.slane %v3620, %v3624
  %v3626 = vlaneseq
  %v3627 = vshrl.u32 %v3626, 7
  %v3628 = vsub.s32 1, %v3627
  %v3629 = vrot.slane %v3620, %v3628
  %v3630 = vlaneseq
  %v3631 = vshrl.u32 %v3630, 7
  %v3632 = vsub.s32 2, %v3631
  %v3633 = vrot.slane %v3620, %v3632
  %v3634 = vlaneseq
  %v3635 = vshrl.u32 %v3634, 7
  %v3636 = vsub.s32 3, %v3635
  %v3637 = vrot.slane %v3620, %v3636
  %v3638 = vlaneseq
  %v3639 = vshrl.u32 %v3638, 7
  %v3640 = vsub.s32 4, %v3639
  %v3641 = vrot.slane %v3620, %v3640
  %v3642 = vlaneseq
  %v3643 = vshrl.u32 %v3642, 7
  %v3644 = vsub.s32 5, %v3643
  %v3645 = vrot.slane %v3620, %v3644
  %v3652 = vmul.f32 %v3612, %v3625
  %v3653 = vmul.f32 %v3613, %v3629
  %v3654 = vmul.f32 %v3614, %v3633
  %v3655 = vmul.f32 %v3615, %v3637
  %v3656 = vmul.f32 %v3616, %v3641
  %v3657 = vmul.f32 %v3617, %v3645
  %v3658 = vadd.f32 %v3606, %v3652
  %v3659 = vadd.f32 %v3607, %v3653
  %v3660 = vadd.f32 %v3608, %v3654
  %v3661 = vadd.f32 %v3609, %v3655
  %v3662 = vadd.f32 %v3610, %v3656
  %v3663 = vadd.f32 %v3611, %v3657
  %v3664 = vld [vmem:[%s1134 + $0x90] sm:$0x3f]
  %v3665 = vld [vmem:[%s1134 + $0x98] sm:$0x3f]
  %v3666 = vld [vmem:[%s1134 + $0xa0] sm:$0x3f]
  %v3667 = vld [vmem:[%s1134 + $0xa8] sm:$0x3f]
  %v3668 = vld [vmem:[%s1134 + $0xb0] sm:$0x3f]
  %v3669 = vld [vmem:[%s1134 + $0xb8] sm:$0x3f]
  %v3670 = vld [vmem:[%s1141] ss:$8 sm:$0xf]
  %v3671 = vld [vmem:[%s1141] ss:$8 sm:$0x30]
  %v3672 = vor.u32 %v3670, %v3671
  %v3674 = vlaneseq
  %v3675 = vshrl.u32 %v3674, 7
  %v3676 = vsub.s32 0, %v3675
  %v3677 = vrot.slane %v3672, %v3676
  %v3678 = vlaneseq
  %v3679 = vshrl.u32 %v3678, 7
  %v3680 = vsub.s32 1, %v3679
  %v3681 = vrot.slane %v3672, %v3680
  %v3682 = vlaneseq
  %v3683 = vshrl.u32 %v3682, 7
  %v3684 = vsub.s32 2, %v3683
  %v3685 = vrot.slane %v3672, %v3684
  %v3686 = vlaneseq
  %v3687 = vshrl.u32 %v3686, 7
  %v3688 = vsub.s32 3, %v3687
  %v3689 = vrot.slane %v3672, %v3688
  %v3690 = vlaneseq
  %v3691 = vshrl.u32 %v3690, 7
  %v3692 = vsub.s32 4, %v3691
  %v3693 = vrot.slane %v3672, %v3692
  %v3694 = vlaneseq
  %v3695 = vshrl.u32 %v3694, 7
  %v3696 = vsub.s32 5, %v3695
  %v3697 = vrot.slane %v3672, %v3696
  %v3704 = vmul.f32 %v3664, %v3677
  %v3705 = vmul.f32 %v3665, %v3681
  %v3706 = vmul.f32 %v3666, %v3685
  %v3707 = vmul.f32 %v3667, %v3689
  %v3708 = vmul.f32 %v3668, %v3693
  %v3709 = vmul.f32 %v3669, %v3697
  %v3710 = vadd.f32 %v3658, %v3704
  %v3711 = vadd.f32 %v3659, %v3705
  %v3712 = vadd.f32 %v3660, %v3706
  %v3713 = vadd.f32 %v3661, %v3707
  %v3714 = vadd.f32 %v3662, %v3708
  %v3715 = vadd.f32 %v3663, %v3709
  %v3716 = vld [vmem:[%s1188 + $0x90] sm:$0x3f]
  %v3717 = vld [vmem:[%s1188 + $0x98] sm:$0x3f]
  %v3718 = vld [vmem:[%s1188 + $0xa0] sm:$0x3f]
  %v3719 = vld [vmem:[%s1188 + $0xa8] sm:$0x3f]
  %v3720 = vld [vmem:[%s1188 + $0xb0] sm:$0x3f]
  %v3721 = vld [vmem:[%s1188 + $0xb8] sm:$0x3f]
  %v3722 = vld [vmem:[%s1195] ss:$8 sm:$0xf]
  %v3723 = vld [vmem:[%s1195] ss:$8 sm:$0x30]
  %v3724 = vor.u32 %v3722, %v3723
  %v3726 = vlaneseq
  %v3727 = vshrl.u32 %v3726, 7
  %v3728 = vsub.s32 0, %v3727
  %v3729 = vrot.slane %v3724, %v3728
  %v3730 = vlaneseq
  %v3731 = vshrl.u32 %v3730, 7
  %v3732 = vsub.s32 1, %v3731
  %v3733 = vrot.slane %v3724, %v3732
  %v3734 = vlaneseq
  %v3735 = vshrl.u32 %v3734, 7
  %v3736 = vsub.s32 2, %v3735
  %v3737 = vrot.slane %v3724, %v3736
  %v3738 = vlaneseq
  %v3739 = vshrl.u32 %v3738, 7
  %v3740 = vsub.s32 3, %v3739
  %v3741 = vrot.slane %v3724, %v3740
  %v3742 = vlaneseq
  %v3743 = vshrl.u32 %v3742, 7
  %v3744 = vsub.s32 4, %v3743
  %v3745 = vrot.slane %v3724, %v3744
  %v3746 = vlaneseq
  %v3747 = vshrl.u32 %v3746, 7
  %v3748 = vsub.s32 5, %v3747
  %v3749 = vrot.slane %v3724, %v3748
  %v3756 = vmul.f32 %v3716, %v3729
  %v3757 = vmul.f32 %v3717, %v3733
  %v3758 = vmul.f32 %v3718, %v3737
  %v3759 = vmul.f32 %v3719, %v3741
  %v3760 = vmul.f32 %v3720, %v3745
  %v3761 = vmul.f32 %v3721, %v3749
  %v3762 = vadd.f32 %v3710, %v3756
  %v3763 = vadd.f32 %v3711, %v3757
  %v3764 = vadd.f32 %v3712, %v3758
  %v3765 = vadd.f32 %v3713, %v3759
  %v3766 = vadd.f32 %v3714, %v3760
  %v3767 = vadd.f32 %v3715, %v3761
  %v3768 = vld [vmem:[%s1242 + $0x90] sm:$0x3f]
  %v3769 = vld [vmem:[%s1242 + $0x98] sm:$0x3f]
  %v3770 = vld [vmem:[%s1242 + $0xa0] sm:$0x3f]
  %v3771 = vld [vmem:[%s1242 + $0xa8] sm:$0x3f]
  %v3772 = vld [vmem:[%s1242 + $0xb0] sm:$0x3f]
  %v3773 = vld [vmem:[%s1242 + $0xb8] sm:$0x3f]
  %v3774 = vld [vmem:[%s1249] ss:$8 sm:$0xf]
  %v3775 = vld [vmem:[%s1249] ss:$8 sm:$0x30]
  %v3776 = vor.u32 %v3774, %v3775
  %v3778 = vlaneseq
  %v3779 = vshrl.u32 %v3778, 7
  %v3780 = vsub.s32 0, %v3779
  %v3781 = vrot.slane %v3776, %v3780
  %v3782 = vlaneseq
  %v3783 = vshrl.u32 %v3782, 7
  %v3784 = vsub.s32 1, %v3783
  %v3785 = vrot.slane %v3776, %v3784
  %v3786 = vlaneseq
  %v3787 = vshrl.u32 %v3786, 7
  %v3788 = vsub.s32 2, %v3787
  %v3789 = vrot.slane %v3776, %v3788
  %v3790 = vlaneseq
  %v3791 = vshrl.u32 %v3790, 7
  %v3792 = vsub.s32 3, %v3791
  %v3793 = vrot.slane %v3776, %v3792
  %v3794 = vlaneseq
  %v3795 = vshrl.u32 %v3794, 7
  %v3796 = vsub.s32 4, %v3795
  %v3797 = vrot.slane %v3776, %v3796
  %v3798 = vlaneseq
  %v3799 = vshrl.u32 %v3798, 7
  %v3800 = vsub.s32 5, %v3799
  %v3801 = vrot.slane %v3776, %v3800
  %v3808 = vmul.f32 %v3768, %v3781
  %v3809 = vmul.f32 %v3769, %v3785
  %v3810 = vmul.f32 %v3770, %v3789
  %v3811 = vmul.f32 %v3771, %v3793
  %v3812 = vmul.f32 %v3772, %v3797
  %v3813 = vmul.f32 %v3773, %v3801
  %v3814 = vadd.f32 %v3762, %v3808
  %v3815 = vadd.f32 %v3763, %v3809
  %v3816 = vadd.f32 %v3764, %v3810
  %v3817 = vadd.f32 %v3765, %v3811
  %v3818 = vadd.f32 %v3766, %v3812
  %v3819 = vadd.f32 %v3767, %v3813
  %v3820 = vld [vmem:[%s1296 + $0x90] sm:$0x3f]
  %v3821 = vld [vmem:[%s1296 + $0x98] sm:$0x3f]
  %v3822 = vld [vmem:[%s1296 + $0xa0] sm:$0x3f]
  %v3823 = vld [vmem:[%s1296 + $0xa8] sm:$0x3f]
  %v3824 = vld [vmem:[%s1296 + $0xb0] sm:$0x3f]
  %v3825 = vld [vmem:[%s1296 + $0xb8] sm:$0x3f]
  %v3826 = vld [vmem:[%s1303] ss:$8 sm:$0xf]
  %v3827 = vld [vmem:[%s1303] ss:$8 sm:$0x30]
  %v3828 = vor.u32 %v3826, %v3827
  %v3830 = vlaneseq
  %v3831 = vshrl.u32 %v3830, 7
  %v3832 = vsub.s32 0, %v3831
  %v3833 = vrot.slane %v3828, %v3832
  %v3834 = vlaneseq
  %v3835 = vshrl.u32 %v3834, 7
  %v3836 = vsub.s32 1, %v3835
  %v3837 = vrot.slane %v3828, %v3836
  %v3838 = vlaneseq
  %v3839 = vshrl.u32 %v3838, 7
  %v3840 = vsub.s32 2, %v3839
  %v3841 = vrot.slane %v3828, %v3840
  %v3842 = vlaneseq
  %v3843 = vshrl.u32 %v3842, 7
  %v3844 = vsub.s32 3, %v3843
  %v3845 = vrot.slane %v3828, %v3844
  %v3846 = vlaneseq
  %v3847 = vshrl.u32 %v3846, 7
  %v3848 = vsub.s32 4, %v3847
  %v3849 = vrot.slane %v3828, %v3848
  %v3850 = vlaneseq
  %v3851 = vshrl.u32 %v3850, 7
  %v3852 = vsub.s32 5, %v3851
  %v3853 = vrot.slane %v3828, %v3852
  %v3860 = vmul.f32 %v3820, %v3833
  %v3861 = vmul.f32 %v3821, %v3837
  %v3862 = vmul.f32 %v3822, %v3841
  %v3863 = vmul.f32 %v3823, %v3845
  %v3864 = vmul.f32 %v3824, %v3849
  %v3865 = vmul.f32 %v3825, %v3853
  %v3866 = vadd.f32 %v3814, %v3860
  %v3867 = vadd.f32 %v3815, %v3861
  %v3868 = vadd.f32 %v3816, %v3862
  %v3869 = vadd.f32 %v3817, %v3863
  %v3870 = vadd.f32 %v3818, %v3864
  %v3871 = vadd.f32 %v3819, %v3865
  %v3872 = vld [vmem:[%s1350 + $0x90] sm:$0x3f]
  %v3873 = vld [vmem:[%s1350 + $0x98] sm:$0x3f]
  %v3874 = vld [vmem:[%s1350 + $0xa0] sm:$0x3f]
  %v3875 = vld [vmem:[%s1350 + $0xa8] sm:$0x3f]
  %v3876 = vld [vmem:[%s1350 + $0xb0] sm:$0x3f]
  %v3877 = vld [vmem:[%s1350 + $0xb8] sm:$0x3f]
  %v3878 = vld [vmem:[%s1357] ss:$8 sm:$0xf]
  %v3879 = vld [vmem:[%s1357] ss:$8 sm:$0x30]
  %v3880 = vor.u32 %v3878, %v3879
  %v3882 = vlaneseq
  %v3883 = vshrl.u32 %v3882, 7
  %v3884 = vsub.s32 0, %v3883
  %v3885 = vrot.slane %v3880, %v3884
  %v3886 = vlaneseq
  %v3887 = vshrl.u32 %v3886, 7
  %v3888 = vsub.s32 1, %v3887
  %v3889 = vrot.slane %v3880, %v3888
  %v3890 = vlaneseq
  %v3891 = vshrl.u32 %v3890, 7
  %v3892 = vsub.s32 2, %v3891
  %v3893 = vrot.slane %v3880, %v3892
  %v3894 = vlaneseq
  %v3895 = vshrl.u32 %v3894, 7
  %v3896 = vsub.s32 3, %v3895
  %v3897 = vrot.slane %v3880, %v3896
  %v3898 = vlaneseq
  %v3899 = vshrl.u32 %v3898, 7
  %v3900 = vsub.s32 4, %v3899
  %v3901 = vrot.slane %v3880, %v3900
  %v3902 = vlaneseq
  %v3903 = vshrl.u32 %v3902, 7
  %v3904 = vsub.s32 5, %v3903
  %v3905 = vrot.slane %v3880, %v3904
  %v3912 = vmul.f32 %v3872, %v3885
  %v3913 = vmul.f32 %v3873, %v3889
  %v3914 = vmul.f32 %v3874, %v3893
  %v3915 = vmul.f32 %v3875, %v3897
  %v3916 = vmul.f32 %v3876, %v3901
  %v3917 = vmul.f32 %v3877, %v3905
  %v3918 = vadd.f32 %v3866, %v3912
  %v3919 = vadd.f32 %v3867, %v3913
  %v3920 = vadd.f32 %v3868, %v3914
  %v3921 = vadd.f32 %v3869, %v3915
  %v3922 = vadd.f32 %v3870, %v3916
  %v3923 = vadd.f32 %v3871, %v3917
  %v3924 = vld [vmem:[%s1404 + $0x90] sm:$0x3f]
  %v3925 = vld [vmem:[%s1404 + $0x98] sm:$0x3f]
  %v3926 = vld [vmem:[%s1404 + $0xa0] sm:$0x3f]
  %v3927 = vld [vmem:[%s1404 + $0xa8] sm:$0x3f]
  %v3928 = vld [vmem:[%s1404 + $0xb0] sm:$0x3f]
  %v3929 = vld [vmem:[%s1404 + $0xb8] sm:$0x3f]
  %v3930 = vld [vmem:[%s1411] ss:$8 sm:$0xf]
  %v3931 = vld [vmem:[%s1411] ss:$8 sm:$0x30]
  %v3932 = vor.u32 %v3930, %v3931
  %v3934 = vlaneseq
  %v3935 = vshrl.u32 %v3934, 7
  %v3936 = vsub.s32 0, %v3935
  %v3937 = vrot.slane %v3932, %v3936
  %v3938 = vlaneseq
  %v3939 = vshrl.u32 %v3938, 7
  %v3940 = vsub.s32 1, %v3939
  %v3941 = vrot.slane %v3932, %v3940
  %v3942 = vlaneseq
  %v3943 = vshrl.u32 %v3942, 7
  %v3944 = vsub.s32 2, %v3943
  %v3945 = vrot.slane %v3932, %v3944
  %v3946 = vlaneseq
  %v3947 = vshrl.u32 %v3946, 7
  %v3948 = vsub.s32 3, %v3947
  %v3949 = vrot.slane %v3932, %v3948
  %v3950 = vlaneseq
  %v3951 = vshrl.u32 %v3950, 7
  %v3952 = vsub.s32 4, %v3951
  %v3953 = vrot.slane %v3932, %v3952
  %v3954 = vlaneseq
  %v3955 = vshrl.u32 %v3954, 7
  %v3956 = vsub.s32 5, %v3955
  %v3957 = vrot.slane %v3932, %v3956
  %v3964 = vmul.f32 %v3924, %v3937
  %v3965 = vmul.f32 %v3925, %v3941
  %v3966 = vmul.f32 %v3926, %v3945
  %v3967 = vmul.f32 %v3927, %v3949
  %v3968 = vmul.f32 %v3928, %v3953
  %v3969 = vmul.f32 %v3929, %v3957
  %v3970 = vadd.f32 %v3918, %v3964
  %v3971 = vadd.f32 %v3919, %v3965
  %v3972 = vadd.f32 %v3920, %v3966
  %v3973 = vadd.f32 %v3921, %v3967
  %v3974 = vadd.f32 %v3922, %v3968
  %v3975 = vadd.f32 %v3923, %v3969
  %v3976 = vld [vmem:[%s1458 + $0x90] sm:$0x3f]
  %v3977 = vld [vmem:[%s1458 + $0x98] sm:$0x3f]
  %v3978 = vld [vmem:[%s1458 + $0xa0] sm:$0x3f]
  %v3979 = vld [vmem:[%s1458 + $0xa8] sm:$0x3f]
  %v3980 = vld [vmem:[%s1458 + $0xb0] sm:$0x3f]
  %v3981 = vld [vmem:[%s1458 + $0xb8] sm:$0x3f]
  %v3982 = vld [vmem:[%s1465] ss:$8 sm:$0xf]
  %v3983 = vld [vmem:[%s1465] ss:$8 sm:$0x30]
  %v3984 = vor.u32 %v3982, %v3983
  %v3986 = vlaneseq
  %v3987 = vshrl.u32 %v3986, 7
  %v3988 = vsub.s32 0, %v3987
  %v3989 = vrot.slane %v3984, %v3988
  %v3990 = vlaneseq
  %v3991 = vshrl.u32 %v3990, 7
  %v3992 = vsub.s32 1, %v3991
  %v3993 = vrot.slane %v3984, %v3992
  %v3994 = vlaneseq
  %v3995 = vshrl.u32 %v3994, 7
  %v3996 = vsub.s32 2, %v3995
  %v3997 = vrot.slane %v3984, %v3996
  %v3998 = vlaneseq
  %v3999 = vshrl.u32 %v3998, 7
  %v4000 = vsub.s32 3, %v3999
  %v4001 = vrot.slane %v3984, %v4000
  %v4002 = vlaneseq
  %v4003 = vshrl.u32 %v4002, 7
  %v4004 = vsub.s32 4, %v4003
  %v4005 = vrot.slane %v3984, %v4004
  %v4006 = vlaneseq
  %v4007 = vshrl.u32 %v4006, 7
  %v4008 = vsub.s32 5, %v4007
  %v4009 = vrot.slane %v3984, %v4008
  %v4016 = vmul.f32 %v3976, %v3989
  %v4017 = vmul.f32 %v3977, %v3993
  %v4018 = vmul.f32 %v3978, %v3997
  %v4019 = vmul.f32 %v3979, %v4001
  %v4020 = vmul.f32 %v3980, %v4005
  %v4021 = vmul.f32 %v3981, %v4009
  %v4022 = vadd.f32 %v3970, %v4016
  %v4023 = vadd.f32 %v3971, %v4017
  %v4024 = vadd.f32 %v3972, %v4018
  %v4025 = vadd.f32 %v3973, %v4019
  %v4026 = vadd.f32 %v3974, %v4020
  %v4027 = vadd.f32 %v3975, %v4021
  %v4028 = vld [vmem:[%s1512 + $0x90] sm:$0x3f]
  %v4029 = vld [vmem:[%s1512 + $0x98] sm:$0x3f]
  %v4030 = vld [vmem:[%s1512 + $0xa0] sm:$0x3f]
  %v4031 = vld [vmem:[%s1512 + $0xa8] sm:$0x3f]
  %v4032 = vld [vmem:[%s1512 + $0xb0] sm:$0x3f]
  %v4033 = vld [vmem:[%s1512 + $0xb8] sm:$0x3f]
  %v4034 = vld [vmem:[%s1519] ss:$8 sm:$0xf]
  %v4035 = vld [vmem:[%s1519] ss:$8 sm:$0x30]
  %v4036 = vor.u32 %v4034, %v4035
  %v4038 = vlaneseq
  %v4039 = vshrl.u32 %v4038, 7
  %v4040 = vsub.s32 0, %v4039
  %v4041 = vrot.slane %v4036, %v4040
  %v4042 = vlaneseq
  %v4043 = vshrl.u32 %v4042, 7
  %v4044 = vsub.s32 1, %v4043
  %v4045 = vrot.slane %v4036, %v4044
  %v4046 = vlaneseq
  %v4047 = vshrl.u32 %v4046, 7
  %v4048 = vsub.s32 2, %v4047
  %v4049 = vrot.slane %v4036, %v4048
  %v4050 = vlaneseq
  %v4051 = vshrl.u32 %v4050, 7
  %v4052 = vsub.s32 3, %v4051
  %v4053 = vrot.slane %v4036, %v4052
  %v4054 = vlaneseq
  %v4055 = vshrl.u32 %v4054, 7
  %v4056 = vsub.s32 4, %v4055
  %v4057 = vrot.slane %v4036, %v4056
  %v4058 = vlaneseq
  %v4059 = vshrl.u32 %v4058, 7
  %v4060 = vsub.s32 5, %v4059
  %v4061 = vrot.slane %v4036, %v4060
  %v4068 = vmul.f32 %v4028, %v4041
  %v4069 = vmul.f32 %v4029, %v4045
  %v4070 = vmul.f32 %v4030, %v4049
  %v4071 = vmul.f32 %v4031, %v4053
  %v4072 = vmul.f32 %v4032, %v4057
  %v4073 = vmul.f32 %v4033, %v4061
  %v4074 = vadd.f32 %v4022, %v4068
  %v4075 = vadd.f32 %v4023, %v4069
  %v4076 = vadd.f32 %v4024, %v4070
  %v4077 = vadd.f32 %v4025, %v4071
  %v4078 = vadd.f32 %v4026, %v4072
  %v4079 = vadd.f32 %v4027, %v4073
  %4080 = vst [vmem:[%s4 + $0x90] sm:$0x3f] %v4074
  %4081 = vst [vmem:[%s4 + $0x98] sm:$0x3f] %v4075
  %4082 = vst [vmem:[%s4 + $0xa0] sm:$0x3f] %v4076
  %4083 = vst [vmem:[%s4 + $0xa8] sm:$0x3f] %v4077
  %4084 = vst [vmem:[%s4 + $0xb0] sm:$0x3f] %v4078
  %4085 = vst [vmem:[%s4 + $0xb8] sm:$0x3f] %v4079
  // Predicated region
  $region18: #{textspace_forward_batched.1} parent=0 // pred_check
    _
  $region19: #{textspace_forward_batched.1} parent=0 // pred_check_branch
    %4087 = sbr.rel (0) target = $region21
  $region20: #{textspace_forward_batched.1} parent=0 // pred_region
    _
  $region21: #{textspace_forward_batched.1} parent=0 // pred_fallthru
    _
  // Predicated region
  $region22: #{textspace_forward_batched.1} parent=0 // pred_check
    _
  $region23: #{textspace_forward_batched.1} parent=0 // pred_check_branch
    %4089 = sbr.rel (0) target = $region25
  $region24: #{textspace_forward_batched.1} parent=0 // pred_region
    _
  $region25: #{textspace_forward_batched.1} parent=0 // pred_fallthru
    _

</llo_original>
